<compile_context>
chip_gen: v6e
topology: v6e:2x2x1
jax: 0.10.0
libtpu: 0.0.40
codegen_flags: <defaults>
</compile_context>

<pallas_src>
import functools
import math

import jax
import jax.numpy as jnp
from jax import lax
from jax.experimental import pallas as pl
from jax.experimental.pallas import tpu as pltpu


# --------------------------------------------------------------------------- #
# Kernel: fused Conv2d -> InstanceNorm2d(affine) -> LeakyReLU, whole stack,
# one batch sample per grid step.
# --------------------------------------------------------------------------- #
def _stacked_conv_kernel(*refs, cfgs, eps, neg_slope):
    """Positional refs:
      x_ref                          (1, H0, W0, C0)     input sample (NHWC)
      [w_ref, g_ref, b_ref] * nb     (K_i, Cout_i), (1, Cout_i), (1, Cout_i)
      o_ref                          (1, Ho*Wo, Cout)    final activation
      [pad_ref, col_ref] * nb        VMEM scratch (padded activation, im2col buffer)
    """
    nb = len(cfgs)
    x_ref = refs[0]
    w_refs = [refs[1 + 3 * i] for i in range(nb)]
    g_refs = [refs[2 + 3 * i] for i in range(nb)]
    b_refs = [refs[3 + 3 * i] for i in range(nb)]
    o_ref = refs[1 + 3 * nb]
    pad_refs = [refs[2 + 3 * nb + 2 * i] for i in range(nb)]
    col_refs = [refs[3 + 3 * nb + 2 * i] for i in range(nb)]

    # Stage the zero-padded input of conv block 0 into VMEM scratch (no HBM pad pass).
    c0 = cfgs[0]
    pad_refs[0][...] = jnp.zeros(pad_refs[0].shape, pad_refs[0].dtype)
    pad_refs[0][c0["ph"]:c0["ph"] + c0["H"],
                c0["pw"]:c0["pw"] + c0["W"], :] = x_ref[0].astype(jnp.float32)

    for i, c in enumerate(cfgs):
        KH, KW, sh, sw = c["KH"], c["KW"], c["sh"], c["sw"]
        Cin, Cout = c["Cin"], c["Cout"]
        Ho, Wo, TH = c["Ho"], c["Wo"], c["TH"]
        last = i == nb - 1
        pad, col = pad_refs[i], col_refs[i]

        if not last:
            cn = cfgs[i + 1]
            nxt = pad_refs[i + 1]
            nxt[...] = jnp.zeros(nxt.shape, nxt.dtype)      # zero halo for next conv

        w2d = w_refs[i][...].astype(jnp.float32)            # (KH*KW*Cin, Cout)

        chunks = [(h0, min(TH, Ho - h0)) for h0 in range(0, Ho, TH)]

        # ---- pass 1: conv (one K = KH*KW*Cin matmul per chunk) + IN stats ------- #
        ssum = jnp.zeros((1, Cout), jnp.float32)
        ssq = jnp.zeros((1, Cout), jnp.float32)
        for h0, ch in chunks:
            M = ch * Wo
            for kh in range(KH):
                for kw in range(KW):
                    if sh == 1 and sw == 1:
                        patch = pad[h0 + kh:h0 + kh + ch, kw:kw + Wo, :]
                    else:
                        patch = pad[pl.ds(sh * h0 + kh, ch, sh),
                                    pl.ds(kw, Wo, sw), :]
                    t = kh * KW + kw
                    col[0:M, t * Cin:(t + 1) * Cin] = patch.reshape(M, Cin)
            acc = jnp.dot(col[0:M, :], w2d,
                          preferred_element_type=jnp.float32)           # (M, Cout)
            ssum = ssum + jnp.sum(acc, axis=0, keepdims=True)
            ssq = ssq + jnp.sum(acc * acc, axis=0, keepdims=True)
            if last:
                o_ref[0, h0 * Wo:(h0 + ch) * Wo, :] = acc.astype(o_ref.dtype)
            else:
                nxt[cn["ph"] + h0:cn["ph"] + h0 + ch,
                    cn["pw"]:cn["pw"] + Wo, :] = acc.reshape(ch, Wo, Cout)

        # ---- InstanceNorm2d (affine), single-pass stats: var = E[x^2] - mean^2 -- #
        inv_hw = 1.0 / float(Ho * Wo)
        mean = ssum * inv_hw
        var = jnp.maximum(ssq * inv_hw - mean * mean, 0.0)
        scale = g_refs[i][...].astype(jnp.float32) * lax.rsqrt(var + eps)
        shift = b_refs[i][...].astype(jnp.float32) - mean * scale        # (1, Cout)

        # ---- pass 2: normalize + LeakyReLU in place (VMEM only) ----------------- #
        for h0, ch in chunks:
            if last:
                y = o_ref[0, h0 * Wo:(h0 + ch) * Wo, :].astype(jnp.float32)
                y = y * scale + shift
                y = jnp.where(y >= 0, y, neg_slope * y)
                o_ref[0, h0 * Wo:(h0 + ch) * Wo, :] = y.astype(o_ref.dtype)
            else:
                y = nxt[cn["ph"] + h0:cn["ph"] + h0 + ch,
                        cn["pw"]:cn["pw"] + Wo, :]
                y = y * scale.reshape(1, 1, Cout) + shift.reshape(1, 1, Cout)
                y = jnp.where(y >= 0, y, neg_slope * y)
                nxt[cn["ph"] + h0:cn["ph"] + h0 + ch,
                    cn["pw"]:cn["pw"] + Wo, :] = y


# --------------------------------------------------------------------------- #
# Wrapper
# --------------------------------------------------------------------------- #
def _block_configs(x_shape, params, initial_stride, row_chunk_target=512):
    N, C0, H, W = x_shape
    if isinstance(initial_stride, int):
        initial_stride = (initial_stride, initial_stride)
    cfgs = []
    h, w, cin = H, W, C0
    for i, p in enumerate(params):
        KH, KW, cin_w, cout = p["w"].shape
        assert cin_w == cin, "channel mismatch in stacked conv parameters"
        sh, sw = (tuple(initial_stride) if i == 0 else (1, 1))
        ph, pw = (KH - 1) // 2, (KW - 1) // 2
        ho = (h + 2 * ph - KH) // sh + 1
        wo = (w + 2 * pw - KW) // sw + 1
        th = max(1, min(ho, max(1, row_chunk_target // max(1, wo))))
        cfgs.append(dict(H=h, W=w, Cin=cin, Cout=cout, KH=KH, KW=KW, sh=sh, sw=sw,
                         ph=ph, pw=pw, Ho=ho, Wo=wo, TH=th,
                         Hp=h + 2 * ph, Wp=w + 2 * pw))
        h, w, cin = ho, wo, cout
    return cfgs


def stacked_conv_blocks_pallas(x_nchw, params, initial_stride, *,
                               eps=1e-5, neg_slope=0.01):
    """Forward pass of StackedConvBlocks (input / output in NCHW, like torch)."""
    N, C0, H, W = x_nchw.shape
    cfgs = _block_configs(x_nchw.shape, params, initial_stride)
    cl = cfgs[-1]
    Ho_l, Wo_l, Cout_l = cl["Ho"], cl["Wo"], cl["Cout"]

    # NCHW -> NHWC once at the boundary (kernel computes channel-minor).
    x_nhwc = jnp.transpose(x_nchw, (0, 2, 3, 1))

    inputs = [x_nhwc]
    in_specs = [pl.BlockSpec((1, H, W, C0), lambda n: (n, 0, 0, 0))]
    for p, c in zip(params, cfgs):
        K = c["KH"] * c["KW"] * c["Cin"]
        inputs.append(p["w"].reshape(K, c["Cout"]).astype(jnp.float32))
        inputs.append(p["gamma"].reshape(1, c["Cout"]).astype(jnp.float32))
        inputs.append(p["beta"].reshape(1, c["Cout"]).astype(jnp.float32))
        in_specs.append(pl.BlockSpec((K, c["Cout"]), lambda n: (0, 0)))
        in_specs.append(pl.BlockSpec((1, c["Cout"]), lambda n: (0, 0)))
        in_specs.append(pl.BlockSpec((1, c["Cout"]), lambda n: (0, 0)))

    out_shape = jax.ShapeDtypeStruct((N, Ho_l * Wo_l, Cout_l), x_nchw.dtype)
    out_spec = pl.BlockSpec((1, Ho_l * Wo_l, Cout_l), lambda n: (n, 0, 0))

    scratch = []
    for c in cfgs:
        scratch.append(pltpu.VMEM((c["Hp"], c["Wp"], c["Cin"]), jnp.float32))
        scratch.append(pltpu.VMEM((c["TH"] * c["Wo"],
                                   c["KH"] * c["KW"] * c["Cin"]), jnp.float32))

    # Scoped-VMEM budget: double-buffered I/O blocks + params + scratch (+ headroom),
    # capped at 64 MiB so the same value is valid on v7x (64 MiB/TC) and v5e/v6e.
    f32 = 4
    est = 2 * H * W * C0 * f32 + 2 * Ho_l * Wo_l * Cout_l * f32
    for p, c in zip(params, cfgs):
        est += 2 * (math.prod(p["w"].shape) + 2 * c["Cout"]) * f32
        est += (c["Hp"] * c["Wp"] * c["Cin"]
                + c["TH"] * c["Wo"] * c["KH"] * c["KW"] * c["Cin"]) * f32
    vmem_limit = int(max(32 * 1024 * 1024, min(2 * est + (4 << 20), 64 * 1024 * 1024)))

    kernel = functools.partial(_stacked_conv_kernel, cfgs=cfgs, eps=eps,
                               neg_slope=neg_slope)

    out_flat = pl.pallas_call(
        kernel,
        out_shape=out_shape,
        grid_spec=pltpu.PrefetchScalarGridSpec(
            num_scalar_prefetch=0,
            grid=(N,),
            in_specs=in_specs,
            out_specs=out_spec,
            scratch_shapes=scratch),
        compiler_params=pltpu.CompilerParams(
            dimension_semantics=("parallel",),
            vmem_limit_bytes=vmem_limit),
    )(*inputs)

    # (N, Ho*Wo, Cout) has the same HBM layout as NHWC -> free reshape, then back to
    # torch's NCHW convention.
    # TODO(synk): presenting the output block lane-dense as (1, Ho, Wo*Cout) would cut
    #             masked-store / DMA overhead further but needs a minor-dim relayout.
    out_nhwc = out_flat.reshape(N, Ho_l, Wo_l, Cout_l)
    return jnp.transpose(out_nhwc, (0, 3, 1, 2))


# --------------------------------------------------------------------------- #
# Deterministic parameter init (mirrors the torch module's parameter shapes)
# --------------------------------------------------------------------------- #
def make_stacked_conv_blocks_params(key, num_convs, input_channels,
                                    output_channels, kernel_size):
    if not isinstance(output_channels, (tuple, list)):
        output_channels = [output_channels] * num_convs
    if isinstance(kernel_size, int):
        kernel_size = [kernel_size] * 2
    KH, KW = kernel_size
    params = []
    cin = input_channels
    for i in range(num_convs):
        cout = output_channels[i]
        key, kw_, kg_, kb_ = jax.random.split(key, 4)
        # torch Conv2d weight is (Cout, Cin, KH, KW); stored here as (KH, KW, Cin, Cout)
        w = 0.1 * jax.random.normal(kw_, (KH, KW, cin, cout), jnp.float32)
        gamma = 1.0 + 0.1 * jax.random.normal(kg_, (cout,), jnp.float32)
        beta = 0.1 * jax.random.normal(kb_, (cout,), jnp.float32)
        params.append(dict(w=w, gamma=gamma, beta=beta))
        cin = cout
    return params


# --------------------------------------------------------------------------- #
# Pure-JAX reference (sanity check)
# --------------------------------------------------------------------------- #
def _reference_forward(x_nchw, params, initial_stride, eps=1e-5, neg_slope=0.01):
    if isinstance(initial_stride, int):
        initial_stride = (initial_stride, initial_stride)
    x = x_nchw
    for i, p in enumerate(params):
        stride = tuple(initial_stride) if i == 0 else (1, 1)
        w_oihw = jnp.transpose(p["w"], (3, 2, 0, 1))          # -> (Cout, Cin, KH, KW)
        KH, KW = w_oihw.shape[2], w_oihw.shape[3]
        y = lax.conv_general_dilated(
            x, w_oihw, window_strides=stride,
            padding=[((KH - 1) // 2,) * 2, ((KW - 1) // 2,) * 2],
            dimension_numbers=("NCHW", "OIHW", "NCHW"))
        mean = jnp.mean(y, axis=(2, 3), keepdims=True)
        var = jnp.mean((y - mean) ** 2, axis=(2, 3), keepdims=True)
        yn = (y - mean) * lax.rsqrt(var + eps)
        yn = yn * p["gamma"].reshape(1, -1, 1, 1) + p["beta"].reshape(1, -1, 1, 1)
        x = jnp.where(yn >= 0, yn, neg_slope * yn)
    return x


if __name__ == "__main__":
    key = jax.random.PRNGKey(0)

    # ---- test 1: StackedConvBlocks(2, Conv2d, 4, 8, 3, initial_stride=1) -------- #
    k1, k2, key = jax.random.split(key, 3)
    N, C_IN, H, W = 2, 4, 16, 16
    x = jax.random.normal(k1, (N, C_IN, H, W), jnp.float32)          # NCHW like torch
    params = make_stacked_conv_blocks_params(k2, num_convs=2, input_channels=C_IN,
                                             output_channels=8, kernel_size=3)
    out = jax.block_until_ready(stacked_conv_blocks_pallas(x, params, 1))
    ref = _reference_forward(x, params, 1)
    assert out.shape == (N, 8, H, W), out.shape
    assert jnp.allclose(out, ref, atol=3e-4, rtol=3e-4), "stride-1 mismatch vs reference"

    # ---- test 2: downsampling block (initial_stride=2) + per-conv channel list -- #
    k3, k4, key = jax.random.split(key, 3)
    x2 = jax.random.normal(k3, (N, C_IN, H, W), jnp.float32)
    params2 = make_stacked_conv_blocks_params(k4, num_convs=2, input_channels=C_IN,
                                              output_channels=[8, 16], kernel_size=3)
    out2 = jax.block_until_ready(stacked_conv_blocks_pallas(x2, params2, 2))
    ref2 = _reference_forward(x2, params2, 2)
    assert out2.shape == (N, 16, H // 2, W // 2), out2.shape
    assert jnp.allclose(out2, ref2, atol=3e-4, rtol=3e-4), "stride-2 mismatch vs reference"

    print("KERNEL_OK")
</pallas_src>

<mosaic_0001>
module attributes {stable_mosaic.version = 11 : i64} {
  func.func @_stacked_conv_kernel(%arg0: i32, %arg1: memref<1x16x16x4xf32, #tpu.memory_space<vmem>>, %arg2: memref<36x8xf32, #tpu.memory_space<vmem>>, %arg3: memref<1x8xf32, #tpu.memory_space<vmem>>, %arg4: memref<1x8xf32, #tpu.memory_space<vmem>>, %arg5: memref<72x8xf32, #tpu.memory_space<vmem>>, %arg6: memref<1x8xf32, #tpu.memory_space<vmem>>, %arg7: memref<1x8xf32, #tpu.memory_space<vmem>>, %arg8: memref<1x256x8xf32, #tpu.memory_space<vmem>>, %arg9: memref<18x18x4xf32, #tpu.memory_space<vmem>>, %arg10: memref<256x36xf32, #tpu.memory_space<vmem>>, %arg11: memref<18x18x8xf32, #tpu.memory_space<vmem>>, %arg12: memref<256x72xf32, #tpu.memory_space<vmem>>) attributes {dimension_semantics = [#tpu.dimension_semantics<parallel>], iteration_bounds = array<i64: 2>, scalar_prefetch = 0 : i64, scratch_operands = 4 : i64, tpu.core_type = #tpu.core_type<tc>, window_params = [{transform_indices = @transform_0, window_bounds = array<i64: 1, 16, 16, 4>}, {pipeline_mode = #tpu.pipeline_mode<synchronous>, transform_indices = @transform_1, window_bounds = array<i64: 36, 8>}, {pipeline_mode = #tpu.pipeline_mode<synchronous>, transform_indices = @transform_2, window_bounds = array<i64: 1, 8>}, {pipeline_mode = #tpu.pipeline_mode<synchronous>, transform_indices = @transform_3, window_bounds = array<i64: 1, 8>}, {pipeline_mode = #tpu.pipeline_mode<synchronous>, transform_indices = @transform_4, window_bounds = array<i64: 72, 8>}, {pipeline_mode = #tpu.pipeline_mode<synchronous>, transform_indices = @transform_5, window_bounds = array<i64: 1, 8>}, {pipeline_mode = #tpu.pipeline_mode<synchronous>, transform_indices = @transform_6, window_bounds = array<i64: 1, 8>}, {transform_indices = @transform_7, window_bounds = array<i64: 1, 256, 8>}]} {
    %cst = arith.constant 0.000000e+00 : f32
    %0 = vector.broadcast %cst : f32 to vector<18x18x4xf32>
    %c0 = arith.constant 0 : index
    %c0_0 = arith.constant 0 : index
    %c0_1 = arith.constant 0 : index
    %1 = vector.load %arg9[%c0, %c0_0, %c0_1] : memref<18x18x4xf32, #tpu.memory_space<vmem>>, vector<18x18x4xf32>
    tpu.vector_store %arg9[%c0, %c0_0, %c0_1], %0 {strides = array<i32>} : memref<18x18x4xf32, #tpu.memory_space<vmem>>, vector<18x18x4xf32>,
    %c0_2 = arith.constant 0 : index
    %c0_3 = arith.constant 0 : index
    %c0_4 = arith.constant 0 : index
    %c0_5 = arith.constant 0 : index
    %2 = vector.load %arg1[%c0_2, %c0_3, %c0_4, %c0_5] : memref<1x16x16x4xf32, #tpu.memory_space<vmem>>, vector<1x16x16x4xf32>
    %3 = vector.shape_cast %2 : vector<1x16x16x4xf32> to vector<16x16x4xf32>
    %c1 = arith.constant 1 : index
    %c1_6 = arith.constant 1 : index
    %c0_7 = arith.constant 0 : index
    %4 = vector.load %arg9[%c1, %c1_6, %c0_7] : memref<18x18x4xf32, #tpu.memory_space<vmem>>, vector<16x16x4xf32>
    tpu.vector_store %arg9[%c1, %c1_6, %c0_7], %3 {strides = array<i32>} : memref<18x18x4xf32, #tpu.memory_space<vmem>>, vector<16x16x4xf32>,
    %cst_8 = arith.constant 0.000000e+00 : f32
    %5 = vector.broadcast %cst_8 : f32 to vector<18x18x8xf32>
    %c0_9 = arith.constant 0 : index
    %c0_10 = arith.constant 0 : index
    %c0_11 = arith.constant 0 : index
    %6 = vector.load %arg11[%c0_9, %c0_10, %c0_11] : memref<18x18x8xf32, #tpu.memory_space<vmem>>, vector<18x18x8xf32>
    tpu.vector_store %arg11[%c0_9, %c0_10, %c0_11], %5 {strides = array<i32>} : memref<18x18x8xf32, #tpu.memory_space<vmem>>, vector<18x18x8xf32>,
    %c0_12 = arith.constant 0 : index
    %c0_13 = arith.constant 0 : index
    %7 = vector.load %arg2[%c0_12, %c0_13] : memref<36x8xf32, #tpu.memory_space<vmem>>, vector<36x8xf32>
    %cst_14 = arith.constant 0.000000e+00 : f32
    %8 = vector.broadcast %cst_14 : f32 to vector<1x8xf32>
    %cst_15 = arith.constant 0.000000e+00 : f32
    %9 = vector.broadcast %cst_15 : f32 to vector<1x8xf32>
    %c0_16 = arith.constant 0 : index
    %c0_17 = arith.constant 0 : index
    %c0_18 = arith.constant 0 : index
    %10 = vector.load %arg9[%c0_16, %c0_17, %c0_18] : memref<18x18x4xf32, #tpu.memory_space<vmem>>, vector<16x16x4xf32>
    %11 = vector.shape_cast %10 : vector<16x16x4xf32> to vector<256x4xf32>
    %c0_19 = arith.constant 0 : index
    %c0_20 = arith.constant 0 : index
    %12 = vector.load %arg10[%c0_19, %c0_20] : memref<256x36xf32, #tpu.memory_space<vmem>>, vector<256x4xf32>
    tpu.vector_store %arg10[%c0_19, %c0_20], %11 {strides = array<i32>} : memref<256x36xf32, #tpu.memory_space<vmem>>, vector<256x4xf32>,
    %c0_21 = arith.constant 0 : index
    %c1_22 = arith.constant 1 : index
    %c0_23 = arith.constant 0 : index
    %13 = vector.load %arg9[%c0_21, %c1_22, %c0_23] : memref<18x18x4xf32, #tpu.memory_space<vmem>>, vector<16x16x4xf32>
    %14 = vector.shape_cast %13 : vector<16x16x4xf32> to vector<256x4xf32>
    %c0_24 = arith.constant 0 : index
    %c4 = arith.constant 4 : index
    %15 = vector.load %arg10[%c0_24, %c4] : memref<256x36xf32, #tpu.memory_space<vmem>>, vector<256x4xf32>
    tpu.vector_store %arg10[%c0_24, %c4], %14 {strides = array<i32>} : memref<256x36xf32, #tpu.memory_space<vmem>>, vector<256x4xf32>,
    %c0_25 = arith.constant 0 : index
    %c2 = arith.constant 2 : index
    %c0_26 = arith.constant 0 : index
    %16 = vector.load %arg9[%c0_25, %c2, %c0_26] : memref<18x18x4xf32, #tpu.memory_space<vmem>>, vector<16x16x4xf32>
    %17 = vector.shape_cast %16 : vector<16x16x4xf32> to vector<256x4xf32>
    %c0_27 = arith.constant 0 : index
    %c8 = arith.constant 8 : index
    %18 = vector.load %arg10[%c0_27, %c8] : memref<256x36xf32, #tpu.memory_space<vmem>>, vector<256x4xf32>
    tpu.vector_store %arg10[%c0_27, %c8], %17 {strides = array<i32>} : memref<256x36xf32, #tpu.memory_space<vmem>>, vector<256x4xf32>,
    %c1_28 = arith.constant 1 : index
    %c0_29 = arith.constant 0 : index
    %c0_30 = arith.constant 0 : index
    %19 = vector.load %arg9[%c1_28, %c0_29, %c0_30] : memref<18x18x4xf32, #tpu.memory_space<vmem>>, vector<16x16x4xf32>
    %20 = vector.shape_cast %19 : vector<16x16x4xf32> to vector<256x4xf32>
    %c0_31 = arith.constant 0 : index
    %c12 = arith.constant 12 : index
    %21 = vector.load %arg10[%c0_31, %c12] : memref<256x36xf32, #tpu.memory_space<vmem>>, vector<256x4xf32>
    tpu.vector_store %arg10[%c0_31, %c12], %20 {strides = array<i32>} : memref<256x36xf32, #tpu.memory_space<vmem>>, vector<256x4xf32>,
    %c1_32 = arith.constant 1 : index
    %c1_33 = arith.constant 1 : index
    %c0_34 = arith.constant 0 : index
    %22 = vector.load %arg9[%c1_32, %c1_33, %c0_34] : memref<18x18x4xf32, #tpu.memory_space<vmem>>, vector<16x16x4xf32>
    %23 = vector.shape_cast %22 : vector<16x16x4xf32> to vector<256x4xf32>
    %c0_35 = arith.constant 0 : index
    %c16 = arith.constant 16 : index
    %24 = vector.load %arg10[%c0_35, %c16] : memref<256x36xf32, #tpu.memory_space<vmem>>, vector<256x4xf32>
    tpu.vector_store %arg10[%c0_35, %c16], %23 {strides = array<i32>} : memref<256x36xf32, #tpu.memory_space<vmem>>, vector<256x4xf32>,
    %c1_36 = arith.constant 1 : index
    %c2_37 = arith.constant 2 : index
    %c0_38 = arith.constant 0 : index
    %25 = vector.load %arg9[%c1_36, %c2_37, %c0_38] : memref<18x18x4xf32, #tpu.memory_space<vmem>>, vector<16x16x4xf32>
    %26 = vector.shape_cast %25 : vector<16x16x4xf32> to vector<256x4xf32>
    %c0_39 = arith.constant 0 : index
    %c20 = arith.constant 20 : index
    %27 = vector.load %arg10[%c0_39, %c20] : memref<256x36xf32, #tpu.memory_space<vmem>>, vector<256x4xf32>
    tpu.vector_store %arg10[%c0_39, %c20], %26 {strides = array<i32>} : memref<256x36xf32, #tpu.memory_space<vmem>>, vector<256x4xf32>,
    %c2_40 = arith.constant 2 : index
    %c0_41 = arith.constant 0 : index
    %c0_42 = arith.constant 0 : index
    %28 = vector.load %arg9[%c2_40, %c0_41, %c0_42] : memref<18x18x4xf32, #tpu.memory_space<vmem>>, vector<16x16x4xf32>
    %29 = vector.shape_cast %28 : vector<16x16x4xf32> to vector<256x4xf32>
    %c0_43 = arith.constant 0 : index
    %c24 = arith.constant 24 : index
    %30 = vector.load %arg10[%c0_43, %c24] : memref<256x36xf32, #tpu.memory_space<vmem>>, vector<256x4xf32>
    tpu.vector_store %arg10[%c0_43, %c24], %29 {strides = array<i32>} : memref<256x36xf32, #tpu.memory_space<vmem>>, vector<256x4xf32>,
    %c2_44 = arith.constant 2 : index
    %c1_45 = arith.constant 1 : index
    %c0_46 = arith.constant 0 : index
    %31 = vector.load %arg9[%c2_44, %c1_45, %c0_46] : memref<18x18x4xf32, #tpu.memory_space<vmem>>, vector<16x16x4xf32>
    %32 = vector.shape_cast %31 : vector<16x16x4xf32> to vector<256x4xf32>
    %c0_47 = arith.constant 0 : index
    %c28 = arith.constant 28 : index
    %33 = vector.load %arg10[%c0_47, %c28] : memref<256x36xf32, #tpu.memory_space<vmem>>, vector<256x4xf32>
    tpu.vector_store %arg10[%c0_47, %c28], %32 {strides = array<i32>} : memref<256x36xf32, #tpu.memory_space<vmem>>, vector<256x4xf32>,
    %c2_48 = arith.constant 2 : index
    %c2_49 = arith.constant 2 : index
    %c0_50 = arith.constant 0 : index
    %34 = vector.load %arg9[%c2_48, %c2_49, %c0_50] : memref<18x18x4xf32, #tpu.memory_space<vmem>>, vector<16x16x4xf32>
    %35 = vector.shape_cast %34 : vector<16x16x4xf32> to vector<256x4xf32>
    %c0_51 = arith.constant 0 : index
    %c32 = arith.constant 32 : index
    %36 = vector.load %arg10[%c0_51, %c32] : memref<256x36xf32, #tpu.memory_space<vmem>>, vector<256x4xf32>
    tpu.vector_store %arg10[%c0_51, %c32], %35 {strides = array<i32>} : memref<256x36xf32, #tpu.memory_space<vmem>>, vector<256x4xf32>,
    %c0_52 = arith.constant 0 : index
    %c0_53 = arith.constant 0 : index
    %37 = vector.load %arg10[%c0_52, %c0_53] : memref<256x36xf32, #tpu.memory_space<vmem>>, vector<256x36xf32>
    %cst_54 = arith.constant dense<0.000000e+00> : vector<256x8xf32>
    %38 = tpu.matmul %37, %7, %cst_54 {dimension_numbers = #tpu.dot_dimension_numbers<[1], [0], [0], [1], [0, 0, 1, 1], [], []>} : vector<256x36xf32>, vector<36x8xf32>, vector<256x8xf32> -> vector<256x8xf32>
    %cst_55 = arith.constant dense<0.000000e+00> : vector<8xf32>
    %39 = vector.multi_reduction <add>, %38, %cst_55 [0] : vector<256x8xf32> to vector<8xf32>
    %40 = vector.shape_cast %39 : vector<8xf32> to vector<1x8xf32>
    %41 = arith.addf %8, %40 : vector<1x8xf32>
    %42 = arith.mulf %38, %38 : vector<256x8xf32>
    %cst_56 = arith.constant dense<0.000000e+00> : vector<8xf32>
    %43 = vector.multi_reduction <add>, %42, %cst_56 [0] : vector<256x8xf32> to vector<8xf32>
    %44 = vector.shape_cast %43 : vector<8xf32> to vector<1x8xf32>
    %45 = arith.addf %9, %44 : vector<1x8xf32>
    %46 = vector.shape_cast %38 : vector<256x8xf32> to vector<16x16x8xf32>
    %c1_57 = arith.constant 1 : index
    %c1_58 = arith.constant 1 : index
    %c0_59 = arith.constant 0 : index
    %47 = vector.load %arg11[%c1_57, %c1_58, %c0_59] : memref<18x18x8xf32, #tpu.memory_space<vmem>>, vector<16x16x8xf32>
    tpu.vector_store %arg11[%c1_57, %c1_58, %c0_59], %46 {strides = array<i32>} : memref<18x18x8xf32, #tpu.memory_space<vmem>>, vector<16x16x8xf32>,
    %cst_60 = arith.constant 3.906250e-03 : f32
    %48 = vector.broadcast %cst_60 : f32 to vector<1x8xf32>
    %49 = arith.mulf %41, %48 : vector<1x8xf32>
    %cst_61 = arith.constant 3.906250e-03 : f32
    %50 = vector.broadcast %cst_61 : f32 to vector<1x8xf32>
    %51 = arith.mulf %45, %50 : vector<1x8xf32>
    %52 = arith.mulf %49, %49 : vector<1x8xf32>
    %53 = arith.subf %51, %52 : vector<1x8xf32>
    %cst_62 = arith.constant 0.000000e+00 : f32
    %54 = vector.broadcast %cst_62 : f32 to vector<1x8xf32>
    %55 = arith.maximumf %53, %54 : vector<1x8xf32>
    %c0_63 = arith.constant 0 : index
    %c0_64 = arith.constant 0 : index
    %56 = vector.load %arg3[%c0_63, %c0_64] : memref<1x8xf32, #tpu.memory_space<vmem>>, vector<1x8xf32>
    %cst_65 = arith.constant 9.99999974E-6 : f32
    %57 = vector.broadcast %cst_65 : f32 to vector<1x8xf32>
    %58 = arith.addf %55, %57 : vector<1x8xf32>
    %59 = math.rsqrt %58 : vector<1x8xf32>
    %60 = arith.mulf %56, %59 : vector<1x8xf32>
    %c0_66 = arith.constant 0 : index
    %c0_67 = arith.constant 0 : index
    %61 = vector.load %arg4[%c0_66, %c0_67] : memref<1x8xf32, #tpu.memory_space<vmem>>, vector<1x8xf32>
    %62 = arith.mulf %49, %60 : vector<1x8xf32>
    %63 = arith.subf %61, %62 : vector<1x8xf32>
    %c1_68 = arith.constant 1 : index
    %c1_69 = arith.constant 1 : index
    %c0_70 = arith.constant 0 : index
    %64 = vector.load %arg11[%c1_68, %c1_69, %c0_70] : memref<18x18x8xf32, #tpu.memory_space<vmem>>, vector<16x16x8xf32>
    %65 = vector.shape_cast %60 : vector<1x8xf32> to vector<1x1x8xf32>
    %66 = vector.broadcast %65 : vector<1x1x8xf32> to vector<16x16x8xf32>
    %67 = arith.mulf %64, %66 : vector<16x16x8xf32>
    %68 = vector.shape_cast %63 : vector<1x8xf32> to vector<1x1x8xf32>
    %69 = vector.broadcast %68 : vector<1x1x8xf32> to vector<16x16x8xf32>
    %70 = arith.addf %67, %69 : vector<16x16x8xf32>
    %cst_71 = arith.constant 0.000000e+00 : f32
    %71 = vector.broadcast %cst_71 : f32 to vector<16x16x8xf32>
    %72 = arith.cmpf oge, %70, %71 : vector<16x16x8xf32>
    %cst_72 = arith.constant 0.00999999977 : f32
    %73 = vector.broadcast %cst_72 : f32 to vector<16x16x8xf32>
    %74 = arith.mulf %73, %70 : vector<16x16x8xf32>
    %75 = arith.select %72, %70, %74 : vector<16x16x8xi1>, vector<16x16x8xf32>
    %c1_73 = arith.constant 1 : index
    %c1_74 = arith.constant 1 : index
    %c0_75 = arith.constant 0 : index
    %76 = vector.load %arg11[%c1_73, %c1_74, %c0_75] : memref<18x18x8xf32, #tpu.memory_space<vmem>>, vector<16x16x8xf32>
    tpu.vector_store %arg11[%c1_73, %c1_74, %c0_75], %75 {strides = array<i32>} : memref<18x18x8xf32, #tpu.memory_space<vmem>>, vector<16x16x8xf32>,
    %c0_76 = arith.constant 0 : index
    %c0_77 = arith.constant 0 : index
    %77 = vector.load %arg5[%c0_76, %c0_77] : memref<72x8xf32, #tpu.memory_space<vmem>>, vector<72x8xf32>
    %cst_78 = arith.constant 0.000000e+00 : f32
    %78 = vector.broadcast %cst_78 : f32 to vector<1x8xf32>
    %cst_79 = arith.constant 0.000000e+00 : f32
    %79 = vector.broadcast %cst_79 : f32 to vector<1x8xf32>
    %c0_80 = arith.constant 0 : index
    %c0_81 = arith.constant 0 : index
    %c0_82 = arith.constant 0 : index
    %80 = vector.load %arg11[%c0_80, %c0_81, %c0_82] : memref<18x18x8xf32, #tpu.memory_space<vmem>>, vector<16x16x8xf32>
    %81 = vector.shape_cast %80 : vector<16x16x8xf32> to vector<256x8xf32>
    %c0_83 = arith.constant 0 : index
    %c0_84 = arith.constant 0 : index
    %82 = vector.load %arg12[%c0_83, %c0_84] : memref<256x72xf32, #tpu.memory_space<vmem>>, vector<256x8xf32>
    tpu.vector_store %arg12[%c0_83, %c0_84], %81 {strides = array<i32>} : memref<256x72xf32, #tpu.memory_space<vmem>>, vector<256x8xf32>,
    %c0_85 = arith.constant 0 : index
    %c1_86 = arith.constant 1 : index
    %c0_87 = arith.constant 0 : index
    %83 = vector.load %arg11[%c0_85, %c1_86, %c0_87] : memref<18x18x8xf32, #tpu.memory_space<vmem>>, vector<16x16x8xf32>
    %84 = vector.shape_cast %83 : vector<16x16x8xf32> to vector<256x8xf32>
    %c0_88 = arith.constant 0 : index
    %c8_89 = arith.constant 8 : index
    %85 = vector.load %arg12[%c0_88, %c8_89] : memref<256x72xf32, #tpu.memory_space<vmem>>, vector<256x8xf32>
    tpu.vector_store %arg12[%c0_88, %c8_89], %84 {strides = array<i32>} : memref<256x72xf32, #tpu.memory_space<vmem>>, vector<256x8xf32>,
    %c0_90 = arith.constant 0 : index
    %c2_91 = arith.constant 2 : index
    %c0_92 = arith.constant 0 : index
    %86 = vector.load %arg11[%c0_90, %c2_91, %c0_92] : memref<18x18x8xf32, #tpu.memory_space<vmem>>, vector<16x16x8xf32>
    %87 = vector.shape_cast %86 : vector<16x16x8xf32> to vector<256x8xf32>
    %c0_93 = arith.constant 0 : index
    %c16_94 = arith.constant 16 : index
    %88 = vector.load %arg12[%c0_93, %c16_94] : memref<256x72xf32, #tpu.memory_space<vmem>>, vector<256x8xf32>
    tpu.vector_store %arg12[%c0_93, %c16_94], %87 {strides = array<i32>} : memref<256x72xf32, #tpu.memory_space<vmem>>, vector<256x8xf32>,
    %c1_95 = arith.constant 1 : index
    %c0_96 = arith.constant 0 : index
    %c0_97 = arith.constant 0 : index
    %89 = vector.load %arg11[%c1_95, %c0_96, %c0_97] : memref<18x18x8xf32, #tpu.memory_space<vmem>>, vector<16x16x8xf32>
    %90 = vector.shape_cast %89 : vector<16x16x8xf32> to vector<256x8xf32>
    %c0_98 = arith.constant 0 : index
    %c24_99 = arith.constant 24 : index
    %91 = vector.load %arg12[%c0_98, %c24_99] : memref<256x72xf32, #tpu.memory_space<vmem>>, vector<256x8xf32>
    tpu.vector_store %arg12[%c0_98, %c24_99], %90 {strides = array<i32>} : memref<256x72xf32, #tpu.memory_space<vmem>>, vector<256x8xf32>,
    %c1_100 = arith.constant 1 : index
    %c1_101 = arith.constant 1 : index
    %c0_102 = arith.constant 0 : index
    %92 = vector.load %arg11[%c1_100, %c1_101, %c0_102] : memref<18x18x8xf32, #tpu.memory_space<vmem>>, vector<16x16x8xf32>
    %93 = vector.shape_cast %92 : vector<16x16x8xf32> to vector<256x8xf32>
    %c0_103 = arith.constant 0 : index
    %c32_104 = arith.constant 32 : index
    %94 = vector.load %arg12[%c0_103, %c32_104] : memref<256x72xf32, #tpu.memory_space<vmem>>, vector<256x8xf32>
    tpu.vector_store %arg12[%c0_103, %c32_104], %93 {strides = array<i32>} : memref<256x72xf32, #tpu.memory_space<vmem>>, vector<256x8xf32>,
    %c1_105 = arith.constant 1 : index
    %c2_106 = arith.constant 2 : index
    %c0_107 = arith.constant 0 : index
    %95 = vector.load %arg11[%c1_105, %c2_106, %c0_107] : memref<18x18x8xf32, #tpu.memory_space<vmem>>, vector<16x16x8xf32>
    %96 = vector.shape_cast %95 : vector<16x16x8xf32> to vector<256x8xf32>
    %c0_108 = arith.constant 0 : index
    %c40 = arith.constant 40 : index
    %97 = vector.load %arg12[%c0_108, %c40] : memref<256x72xf32, #tpu.memory_space<vmem>>, vector<256x8xf32>
    tpu.vector_store %arg12[%c0_108, %c40], %96 {strides = array<i32>} : memref<256x72xf32, #tpu.memory_space<vmem>>, vector<256x8xf32>,
    %c2_109 = arith.constant 2 : index
    %c0_110 = arith.constant 0 : index
    %c0_111 = arith.constant 0 : index
    %98 = vector.load %arg11[%c2_109, %c0_110, %c0_111] : memref<18x18x8xf32, #tpu.memory_space<vmem>>, vector<16x16x8xf32>
    %99 = vector.shape_cast %98 : vector<16x16x8xf32> to vector<256x8xf32>
    %c0_112 = arith.constant 0 : index
    %c48 = arith.constant 48 : index
    %100 = vector.load %arg12[%c0_112, %c48] : memref<256x72xf32, #tpu.memory_space<vmem>>, vector<256x8xf32>
    tpu.vector_store %arg12[%c0_112, %c48], %99 {strides = array<i32>} : memref<256x72xf32, #tpu.memory_space<vmem>>, vector<256x8xf32>,
    %c2_113 = arith.constant 2 : index
    %c1_114 = arith.constant 1 : index
    %c0_115 = arith.constant 0 : index
    %101 = vector.load %arg11[%c2_113, %c1_114, %c0_115] : memref<18x18x8xf32, #tpu.memory_space<vmem>>, vector<16x16x8xf32>
    %102 = vector.shape_cast %101 : vector<16x16x8xf32> to vector<256x8xf32>
    %c0_116 = arith.constant 0 : index
    %c56 = arith.constant 56 : index
    %103 = vector.load %arg12[%c0_116, %c56] : memref<256x72xf32, #tpu.memory_space<vmem>>, vector<256x8xf32>
    tpu.vector_store %arg12[%c0_116, %c56], %102 {strides = array<i32>} : memref<256x72xf32, #tpu.memory_space<vmem>>, vector<256x8xf32>,
    %c2_117 = arith.constant 2 : index
    %c2_118 = arith.constant 2 : index
    %c0_119 = arith.constant 0 : index
    %104 = vector.load %arg11[%c2_117, %c2_118, %c0_119] : memref<18x18x8xf32, #tpu.memory_space<vmem>>, vector<16x16x8xf32>
    %105 = vector.shape_cast %104 : vector<16x16x8xf32> to vector<256x8xf32>
    %c0_120 = arith.constant 0 : index
    %c64 = arith.constant 64 : index
    %106 = vector.load %arg12[%c0_120, %c64] : memref<256x72xf32, #tpu.memory_space<vmem>>, vector<256x8xf32>
    tpu.vector_store %arg12[%c0_120, %c64], %105 {strides = array<i32>} : memref<256x72xf32, #tpu.memory_space<vmem>>, vector<256x8xf32>,
    %c0_121 = arith.constant 0 : index
    %c0_122 = arith.constant 0 : index
    %107 = vector.load %arg12[%c0_121, %c0_122] : memref<256x72xf32, #tpu.memory_space<vmem>>, vector<256x72xf32>
    %cst_123 = arith.constant dense<0.000000e+00> : vector<256x8xf32>
    %108 = tpu.matmul %107, %77, %cst_123 {dimension_numbers = #tpu.dot_dimension_numbers<[1], [0], [0], [1], [0, 0, 1, 1], [], []>} : vector<256x72xf32>, vector<72x8xf32>, vector<256x8xf32> -> vector<256x8xf32>
    %cst_124 = arith.constant dense<0.000000e+00> : vector<8xf32>
    %109 = vector.multi_reduction <add>, %108, %cst_124 [0] : vector<256x8xf32> to vector<8xf32>
    %110 = vector.shape_cast %109 : vector<8xf32> to vector<1x8xf32>
    %111 = arith.addf %78, %110 : vector<1x8xf32>
    %112 = arith.mulf %108, %108 : vector<256x8xf32>
    %cst_125 = arith.constant dense<0.000000e+00> : vector<8xf32>
    %113 = vector.multi_reduction <add>, %112, %cst_125 [0] : vector<256x8xf32> to vector<8xf32>
    %114 = vector.shape_cast %113 : vector<8xf32> to vector<1x8xf32>
    %115 = arith.addf %79, %114 : vector<1x8xf32>
    %c0_126 = arith.constant 0 : index
    %c0_127 = arith.constant 0 : index
    %c0_128 = arith.constant 0 : index
    %116 = vector.load %arg8[%c0_126, %c0_127, %c0_128] : memref<1x256x8xf32, #tpu.memory_space<vmem>>, vector<1x256x8xf32>
    %117 = vector.shape_cast %116 : vector<1x256x8xf32> to vector<256x8xf32>
    %118 = vector.shape_cast %108 : vector<256x8xf32> to vector<1x256x8xf32>
    tpu.vector_store %arg8[%c0_126, %c0_127, %c0_128], %118 {strides = array<i32>} : memref<1x256x8xf32, #tpu.memory_space<vmem>>, vector<1x256x8xf32>,
    %cst_129 = arith.constant 3.906250e-03 : f32
    %119 = vector.broadcast %cst_129 : f32 to vector<1x8xf32>
    %120 = arith.mulf %111, %119 : vector<1x8xf32>
    %cst_130 = arith.constant 3.906250e-03 : f32
    %121 = vector.broadcast %cst_130 : f32 to vector<1x8xf32>
    %122 = arith.mulf %115, %121 : vector<1x8xf32>
    %123 = arith.mulf %120, %120 : vector<1x8xf32>
    %124 = arith.subf %122, %123 : vector<1x8xf32>
    %cst_131 = arith.constant 0.000000e+00 : f32
    %125 = vector.broadcast %cst_131 : f32 to vector<1x8xf32>
    %126 = arith.maximumf %124, %125 : vector<1x8xf32>
    %c0_132 = arith.constant 0 : index
    %c0_133 = arith.constant 0 : index
    %127 = vector.load %arg6[%c0_132, %c0_133] : memref<1x8xf32, #tpu.memory_space<vmem>>, vector<1x8xf32>
    %cst_134 = arith.constant 9.99999974E-6 : f32
    %128 = vector.broadcast %cst_134 : f32 to vector<1x8xf32>
    %129 = arith.addf %126, %128 : vector<1x8xf32>
    %130 = math.rsqrt %129 : vector<1x8xf32>
    %131 = arith.mulf %127, %130 : vector<1x8xf32>
    %c0_135 = arith.constant 0 : index
    %c0_136 = arith.constant 0 : index
    %132 = vector.load %arg7[%c0_135, %c0_136] : memref<1x8xf32, #tpu.memory_space<vmem>>, vector<1x8xf32>
    %133 = arith.mulf %120, %131 : vector<1x8xf32>
    %134 = arith.subf %132, %133 : vector<1x8xf32>
    %c0_137 = arith.constant 0 : index
    %c0_138 = arith.constant 0 : index
    %c0_139 = arith.constant 0 : index
    %135 = vector.load %arg8[%c0_137, %c0_138, %c0_139] : memref<1x256x8xf32, #tpu.memory_space<vmem>>, vector<1x256x8xf32>
    %136 = vector.shape_cast %135 : vector<1x256x8xf32> to vector<256x8xf32>
    %137 = vector.broadcast %131 : vector<1x8xf32> to vector<256x8xf32>
    %138 = arith.mulf %136, %137 : vector<256x8xf32>
    %139 = vector.broadcast %134 : vector<1x8xf32> to vector<256x8xf32>
    %140 = arith.addf %138, %139 : vector<256x8xf32>
    %cst_140 = arith.constant 0.000000e+00 : f32
    %141 = vector.broadcast %cst_140 : f32 to vector<256x8xf32>
    %142 = arith.cmpf oge, %140, %141 : vector<256x8xf32>
    %cst_141 = arith.constant 0.00999999977 : f32
    %143 = vector.broadcast %cst_141 : f32 to vector<256x8xf32>
    %144 = arith.mulf %143, %140 : vector<256x8xf32>
    %145 = arith.select %142, %140, %144 : vector<256x8xi1>, vector<256x8xf32>
    %c0_142 = arith.constant 0 : index
    %c0_143 = arith.constant 0 : index
    %c0_144 = arith.constant 0 : index
    %146 = vector.load %arg8[%c0_142, %c0_143, %c0_144] : memref<1x256x8xf32, #tpu.memory_space<vmem>>, vector<1x256x8xf32>
    %147 = vector.shape_cast %146 : vector<1x256x8xf32> to vector<256x8xf32>
    %148 = vector.shape_cast %145 : vector<256x8xf32> to vector<1x256x8xf32>
    tpu.vector_store %arg8[%c0_142, %c0_143, %c0_144], %148 {strides = array<i32>} : memref<1x256x8xf32, #tpu.memory_space<vmem>>, vector<1x256x8xf32>,
    return
  }
  func.func @transform_0(%arg0: i32) -> (i32, i32, i32, i32) {
    %c0_i32 = arith.constant 0 : i32
    %c0_i32_0 = arith.constant 0 : i32
    %c0_i32_1 = arith.constant 0 : i32
    %c0_i32_2 = arith.constant 0 : i32
    return %arg0, %c0_i32, %c0_i32_0, %c0_i32_1 : i32, i32, i32, i32
  }
  func.func @transform_1(%arg0: i32) -> (i32, i32) {
    %c0_i32 = arith.constant 0 : i32
    %c0_i32_0 = arith.constant 0 : i32
    %c0_i32_1 = arith.constant 0 : i32
    return %c0_i32, %c0_i32_0 : i32, i32
  }
  func.func @transform_2(%arg0: i32) -> (i32, i32) {
    %c0_i32 = arith.constant 0 : i32
    %c0_i32_0 = arith.constant 0 : i32
    %c0_i32_1 = arith.constant 0 : i32
    return %c0_i32, %c0_i32_0 : i32, i32
  }
  func.func @transform_3(%arg0: i32) -> (i32, i32) {
    %c0_i32 = arith.constant 0 : i32
    %c0_i32_0 = arith.constant 0 : i32
    %c0_i32_1 = arith.constant 0 : i32
    return %c0_i32, %c0_i32_0 : i32, i32
  }
  func.func @transform_4(%arg0: i32) -> (i32, i32) {
    %c0_i32 = arith.constant 0 : i32
    %c0_i32_0 = arith.constant 0 : i32
    %c0_i32_1 = arith.constant 0 : i32
    return %c0_i32, %c0_i32_0 : i32, i32
  }
  func.func @transform_5(%arg0: i32) -> (i32, i32) {
    %c0_i32 = arith.constant 0 : i32
    %c0_i32_0 = arith.constant 0 : i32
    %c0_i32_1 = arith.constant 0 : i32
    return %c0_i32, %c0_i32_0 : i32, i32
  }
  func.func @transform_6(%arg0: i32) -> (i32, i32) {
    %c0_i32 = arith.constant 0 : i32
    %c0_i32_0 = arith.constant 0 : i32
    %c0_i32_1 = arith.constant 0 : i32
    return %c0_i32, %c0_i32_0 : i32, i32
  }
  func.func @transform_7(%arg0: i32) -> (i32, i32, i32) {
    %c0_i32 = arith.constant 0 : i32
    %c0_i32_0 = arith.constant 0 : i32
    %c0_i32_1 = arith.constant 0 : i32
    return %arg0, %c0_i32, %c0_i32_0 : i32, i32, i32
  }
}

</mosaic_0001>

<llo_original>
// kernel: tpu_custom_call.1
$region0: #{tpu_custom_call.1}
  #allocation0 [shape = 'u32[]', space=smem, size = 0x4, offset = 0x4, fixed_abs, tag = 'smem constant byte address 0x4 - core index']
  #allocation1 [shape = 'u32[144,128]{1,0:T(1,128)}', space=vmem, size = 0x12000, scoped, tag = 'internal scratch']
  #allocation2 [shape = 'f32[18,18,4]{2,1,0:T(8,128)}', space=vmem, size = 0x36000, scoped, tag = 'scratch operand']
  #allocation3 [shape = 'f32[256,36]{1,0:T(8,128)}', space=vmem, size = 0x20000, scoped, tag = 'scratch operand']
  #allocation4 [shape = 'f32[18,18,8]{2,1,0:T(8,128)}', space=vmem, size = 0x36000, scoped, tag = 'scratch operand']
  #allocation5 [shape = 'f32[256,72]{1,0:T(8,128)}', space=vmem, size = 0x20000, scoped, tag = 'scratch operand']
  %s0 = inlined_call_operand.vmem [shape: f32[2,16,16,4], index: 0, kind: input, shape index: {}]
  %s1 = inlined_call_operand.vmem [shape: f32[36,8], index: 1, kind: input, shape index: {}]
  %s2 = inlined_call_operand.vmem [shape: f32[1,8], index: 2, kind: input, shape index: {}]
  %s3 = inlined_call_operand.vmem [shape: f32[1,8], index: 3, kind: input, shape index: {}]
  %s4 = inlined_call_operand.vmem [shape: f32[72,8], index: 4, kind: input, shape index: {}]
  %s5 = inlined_call_operand.vmem [shape: f32[1,8], index: 5, kind: input, shape index: {}]
  %s6 = inlined_call_operand.vmem [shape: f32[1,8], index: 6, kind: input, shape index: {}]
  %s7 = inlined_call_operand.vmem [shape: f32[2,256,8], index: 7, kind: output, shape index: {}]
  %s8 = sld [smem:[#allocation0]]
  $region61: #{tpu_custom_call.1} parent=0
    _
  %s10 = ssub.s32 1, %s8
  %s11 = scalar_select 0, %s10, %s8
  loop: start=0, step=1, limit=4
  $region2: #{tpu_custom_call.1} parent=0 // loop_pre_header
    _
  $region3: #{tpu_custom_call.1} parent=0 // loop_header
    %s13 = sphi 0, %s17
    %p14 = scmp.ge.s32.totalorder %s13, 4
    %s23 = sphi 0, %s25
    %s26 = sphi 0, %s23
    %s27 = sphi 0, %s26
    %s43 = sphi 0, %s27
    %s47 = sphi 0, %s47
    %s49 = sphi 0, %s47
    %s50 = sphi 0, %s49
    %s64 = sphi 0, %s50
    %s68 = sphi 0, %s68
    %s70 = sphi 0, %s68
    %s71 = sphi 0, %s70
    %s85 = sphi 0, %s71
    %s89 = sphi 0, %s89
    %s91 = sphi 0, %s89
    %s92 = sphi 0, %s91
    %s106 = sphi 0, %s92
    %s110 = sphi 0, %s110
    %s112 = sphi 0, %s110
    %s113 = sphi 0, %s112
    %s127 = sphi 0, %s113
    %s131 = sphi 0, %s131
    %s133 = sphi 0, %s131
    %s134 = sphi 0, %s133
    %s148 = sphi 0, %s134
    %s152 = sphi 0, %s152
    %s154 = sphi 0, %s152
    %s155 = sphi 0, %s154
    %s169 = sphi 0, %s155
    %s175 = sphi 0, %s177
    %s178 = sphi 0, %s175
    %s179 = sphi 0, %s178
    %s195 = sphi 0, %s179
  $region4: #{tpu_custom_call.1} parent=0 // loop_header_branch
    %16 = sbr.rel (%p14) target = $region8
  $region5: #{tpu_custom_call.1} parent=0 // loop_body
    %s18 = ssub.s32 %s13, 1
    %s19 = ssub.s32 %s13, 2
    %s20 = sadd.s32 %s13, 1
    %s21 = ssub.s32 %s13, %s20
    %p22 = scmp.eq.s32.totalorder %s21, 0
    %s24 = sadd.s32 %s23, 1
    %s25 = scalar_select %p22, %s23, %s24
    %p28 = pneg %p22
    %p29 = scmp.eq.s32.totalorder %s13, 1
    %p30 = por %p28, %p29
    %p31 = scmp.ne.s32.totalorder %s23, %s26
    %p32 = scmp.eq.s32.totalorder %s13, 0
    %p33 = por %p31, %p32
    %p34 = scmp.ne.s32.totalorder %s23, %s26
    %p35 = scmp.eq.s32.totalorder %s18, 1
    %p36 = por %p34, %p35
    %p37 = scmp.ne.s32.totalorder %s26, %s27
    %p38 = scmp.eq.s32.totalorder %s18, 0
    %p39 = por %p37, %p38
    %p40 = scmp.ne.s32.totalorder %s26, %s27
    %p41 = scmp.eq.s32.totalorder %s19, 1
    %p42 = por %p40, %p41
    %p44 = scmp.ne.s32.totalorder %s27, %s43
    %p45 = scmp.eq.s32.totalorder %s19, 0
    %p46 = por %p44, %p45
    %s48 = sadd.s32 %s47, 1
    %p51 = scmp.eq.s32.totalorder %s13, 1
    %p52 = scmp.ne.s32.totalorder %s47, %s49
    %p53 = scmp.eq.s32.totalorder %s13, 0
    %p54 = por %p52, %p53
    %p55 = scmp.ne.s32.totalorder %s47, %s49
    %p56 = scmp.eq.s32.totalorder %s18, 1
    %p57 = por %p55, %p56
    %p58 = scmp.ne.s32.totalorder %s49, %s50
    %p59 = scmp.eq.s32.totalorder %s18, 0
    %p60 = por %p58, %p59
    %p61 = scmp.ne.s32.totalorder %s49, %s50
    %p62 = scmp.eq.s32.totalorder %s19, 1
    %p63 = por %p61, %p62
    %p65 = scmp.ne.s32.totalorder %s50, %s64
    %p66 = scmp.eq.s32.totalorder %s19, 0
    %p67 = por %p65, %p66
    %s69 = sadd.s32 %s68, 1
    %p72 = scmp.eq.s32.totalorder %s13, 1
    %p73 = scmp.ne.s32.totalorder %s68, %s70
    %p74 = scmp.eq.s32.totalorder %s13, 0
    %p75 = por %p73, %p74
    %p76 = scmp.ne.s32.totalorder %s68, %s70
    %p77 = scmp.eq.s32.totalorder %s18, 1
    %p78 = por %p76, %p77
    %p79 = scmp.ne.s32.totalorder %s70, %s71
    %p80 = scmp.eq.s32.totalorder %s18, 0
    %p81 = por %p79, %p80
    %p82 = scmp.ne.s32.totalorder %s70, %s71
    %p83 = scmp.eq.s32.totalorder %s19, 1
    %p84 = por %p82, %p83
    %p86 = scmp.ne.s32.totalorder %s71, %s85
    %p87 = scmp.eq.s32.totalorder %s19, 0
    %p88 = por %p86, %p87
    %s90 = sadd.s32 %s89, 1
    %p93 = scmp.eq.s32.totalorder %s13, 1
    %p94 = scmp.ne.s32.totalorder %s89, %s91
    %p95 = scmp.eq.s32.totalorder %s13, 0
    %p96 = por %p94, %p95
    %p97 = scmp.ne.s32.totalorder %s89, %s91
    %p98 = scmp.eq.s32.totalorder %s18, 1
    %p99 = por %p97, %p98
    %p100 = scmp.ne.s32.totalorder %s91, %s92
    %p101 = scmp.eq.s32.totalorder %s18, 0
    %p102 = por %p100, %p101
    %p103 = scmp.ne.s32.totalorder %s91, %s92
    %p104 = scmp.eq.s32.totalorder %s19, 1
    %p105 = por %p103, %p104
    %p107 = scmp.ne.s32.totalorder %s92, %s106
    %p108 = scmp.eq.s32.totalorder %s19, 0
    %p109 = por %p107, %p108
    %s111 = sadd.s32 %s110, 1
    %p114 = scmp.eq.s32.totalorder %s13, 1
    %p115 = scmp.ne.s32.totalorder %s110, %s112
    %p116 = scmp.eq.s32.totalorder %s13, 0
    %p117 = por %p115, %p116
    %p118 = scmp.ne.s32.totalorder %s110, %s112
    %p119 = scmp.eq.s32.totalorder %s18, 1
    %p120 = por %p118, %p119
    %p121 = scmp.ne.s32.totalorder %s112, %s113
    %p122 = scmp.eq.s32.totalorder %s18, 0
    %p123 = por %p121, %p122
    %p124 = scmp.ne.s32.totalorder %s112, %s113
    %p125 = scmp.eq.s32.totalorder %s19, 1
    %p126 = por %p124, %p125
    %p128 = scmp.ne.s32.totalorder %s113, %s127
    %p129 = scmp.eq.s32.totalorder %s19, 0
    %p130 = por %p128, %p129
    %s132 = sadd.s32 %s131, 1
    %p135 = scmp.eq.s32.totalorder %s13, 1
    %p136 = scmp.ne.s32.totalorder %s131, %s133
    %p137 = scmp.eq.s32.totalorder %s13, 0
    %p138 = por %p136, %p137
    %p139 = scmp.ne.s32.totalorder %s131, %s133
    %p140 = scmp.eq.s32.totalorder %s18, 1
    %p141 = por %p139, %p140
    %p142 = scmp.ne.s32.totalorder %s133, %s134
    %p143 = scmp.eq.s32.totalorder %s18, 0
    %p144 = por %p142, %p143
    %p145 = scmp.ne.s32.totalorder %s133, %s134
    %p146 = scmp.eq.s32.totalorder %s19, 1
    %p147 = por %p145, %p146
    %p149 = scmp.ne.s32.totalorder %s134, %s148
    %p150 = scmp.eq.s32.totalorder %s19, 0
    %p151 = por %p149, %p150
    %s153 = sadd.s32 %s152, 1
    %p156 = scmp.eq.s32.totalorder %s13, 1
    %p157 = scmp.ne.s32.totalorder %s152, %s154
    %p158 = scmp.eq.s32.totalorder %s13, 0
    %p159 = por %p157, %p158
    %p160 = scmp.ne.s32.totalorder %s152, %s154
    %p161 = scmp.eq.s32.totalorder %s18, 1
    %p162 = por %p160, %p161
    %p163 = scmp.ne.s32.totalorder %s154, %s155
    %p164 = scmp.eq.s32.totalorder %s18, 0
    %p165 = por %p163, %p164
    %p166 = scmp.ne.s32.totalorder %s154, %s155
    %p167 = scmp.eq.s32.totalorder %s19, 1
    %p168 = por %p166, %p167
    %p170 = scmp.ne.s32.totalorder %s155, %s169
    %p171 = scmp.eq.s32.totalorder %s19, 0
    %p172 = por %p170, %p171
    %s173 = ssub.s32 %s13, %s20
    %p174 = scmp.eq.s32.totalorder %s173, 0
    %s176 = sadd.s32 %s175, 1
    %s177 = scalar_select %p174, %s175, %s176
    %p180 = pneg %p174
    %p181 = scmp.eq.s32.totalorder %s13, 1
    %p182 = por %p180, %p181
    %p183 = scmp.ne.s32.totalorder %s175, %s178
    %p184 = scmp.eq.s32.totalorder %s13, 0
    %p185 = por %p183, %p184
    %p186 = scmp.ne.s32.totalorder %s175, %s178
    %p187 = scmp.eq.s32.totalorder %s18, 1
    %p188 = por %p186, %p187
    %p189 = scmp.ne.s32.totalorder %s178, %s179
    %p190 = scmp.eq.s32.totalorder %s18, 0
    %p191 = por %p189, %p190
    %p192 = scmp.ne.s32.totalorder %s178, %s179
    %p193 = scmp.eq.s32.totalorder %s19, 1
    %p194 = por %p192, %p193
    %p196 = scmp.ne.s32.totalorder %s179, %s195
    %p197 = scmp.eq.s32.totalorder %s19, 0
    %p198 = por %p196, %p197
    %p199 = scmp.le.s32.totalorder 1, %s13
    %p200 = scmp.lt.s32.totalorder %s13, 3
    %p201 = pnand %p199, %p200
    %p202 = pneg %p201
    // Predicated region
    $region9: #{tpu_custom_call.1} parent=5 // pred_check
      _
    $region10: #{tpu_custom_call.1} parent=5 // pred_check_branch
      %204 = sbr.rel (%p201) target = $region12
    $region11: #{tpu_custom_call.1} parent=5 // pred_region
      %s205 = ssub.s32 %s13, 1
      // Predicated region
      $region13: #{tpu_custom_call.1} parent=11 // pred_check
        %p206 = pneg %p60
      $region14: #{tpu_custom_call.1} parent=11 // pred_check_branch
        %208 = sbr.rel (%p206) target = $region16
      $region15: #{tpu_custom_call.1} parent=11 // pred_region
        _
      $region16: #{tpu_custom_call.1} parent=11 // pred_fallthru
        _
      // Predicated region
      $region17: #{tpu_custom_call.1} parent=11 // pred_check
        %p209 = pneg %p81
      $region18: #{tpu_custom_call.1} parent=11 // pred_check_branch
        %211 = sbr.rel (%p209) target = $region20
      $region19: #{tpu_custom_call.1} parent=11 // pred_region
        _
      $region20: #{tpu_custom_call.1} parent=11 // pred_fallthru
        _
      // Predicated region
      $region21: #{tpu_custom_call.1} parent=11 // pred_check
        %p212 = pneg %p102
      $region22: #{tpu_custom_call.1} parent=11 // pred_check_branch
        %214 = sbr.rel (%p212) target = $region24
      $region23: #{tpu_custom_call.1} parent=11 // pred_region
        _
      $region24: #{tpu_custom_call.1} parent=11 // pred_fallthru
        _
      // Predicated region
      $region25: #{tpu_custom_call.1} parent=11 // pred_check
        %p215 = pneg %p123
      $region26: #{tpu_custom_call.1} parent=11 // pred_check_branch
        %217 = sbr.rel (%p215) target = $region28
      $region27: #{tpu_custom_call.1} parent=11 // pred_region
        _
      $region28: #{tpu_custom_call.1} parent=11 // pred_fallthru
        _
      // Predicated region
      $region29: #{tpu_custom_call.1} parent=11 // pred_check
        %p218 = pneg %p144
      $region30: #{tpu_custom_call.1} parent=11 // pred_check_branch
        %220 = sbr.rel (%p218) target = $region32
      $region31: #{tpu_custom_call.1} parent=11 // pred_region
        _
      $region32: #{tpu_custom_call.1} parent=11 // pred_fallthru
        _
      // Predicated region
      $region33: #{tpu_custom_call.1} parent=11 // pred_check
        %p221 = pneg %p165
      $region34: #{tpu_custom_call.1} parent=11 // pred_check_branch
        %223 = sbr.rel (%p221) target = $region36
      $region35: #{tpu_custom_call.1} parent=11 // pred_region
        _
      $region36: #{tpu_custom_call.1} parent=11 // pred_fallthru
        _
    $region12: #{tpu_custom_call.1} parent=5 // pred_fallthru
      _
    %p224 = scmp.lt.s32.totalorder %s13, 2
    // Predicated region
    $region37: #{tpu_custom_call.1} parent=5 // pred_check
      %p225 = pneg %p224
    $region38: #{tpu_custom_call.1} parent=5 // pred_check_branch
      %227 = sbr.rel (%p225) target = $region40
    $region39: #{tpu_custom_call.1} parent=5 // pred_region
      // Predicated region
      $region41: #{tpu_custom_call.1} parent=39 // pred_check
        %p228 = pneg %p33
      $region42: #{tpu_custom_call.1} parent=39 // pred_check_branch
        %230 = sbr.rel (%p228) target = $region44
      $region43: #{tpu_custom_call.1} parent=39 // pred_region
        %p231 = scmp.lt.s32.totalorder %s13, 1
        %s232 = scalar_select %p231, %s13, 1
        %s233 = smul.addr %s232, 32
        %s234 = smul.addr %s233, 8
        %s235 = scalar_lea.vmem %s0, %s234
      $region44: #{tpu_custom_call.1} parent=39 // pred_fallthru
        _
    $region40: #{tpu_custom_call.1} parent=5 // pred_fallthru
      _
    %p236 = scmp.le.s32.totalorder 1, %s13
    %p237 = scmp.lt.s32.totalorder %s13, 3
    %p238 = pnand %p236, %p237
    %p239 = pneg %p238
    // Predicated region
    $region45: #{tpu_custom_call.1} parent=5 // pred_check
      _
    $region46: #{tpu_custom_call.1} parent=5 // pred_check_branch
      %241 = sbr.rel (%p238) target = $region48
    $region47: #{tpu_custom_call.1} parent=5 // pred_region
      %s242 = ssub.s32 %s13, 1
      %p243 = scmp.lt.s32.totalorder %s18, 1
      %s244 = scalar_select %p243, %s18, 1
      %s245 = smul.addr %s244, 32
      %s246 = smul.addr %s245, 8
      %s247 = scalar_lea.vmem %s0, %s246
      %p248 = pneg %p39
      %p249 = pneg %p36
      %p250 = pneg %p60
      %p251 = pneg %p57
      %p252 = pneg %p81
      %p253 = pneg %p78
      %p254 = pneg %p102
      %p255 = pneg %p99
      %p256 = pneg %p123
      %p257 = pneg %p120
      %p258 = pneg %p144
      %p259 = pneg %p141
      %p260 = pneg %p165
      %p261 = pneg %p162
      %p262 = pneg %p191
      %p263 = pneg %p188
      %p264 = scmp.lt.s32.totalorder %s18, 1
      %s265 = scalar_select %p264, %s18, 1
      %s266 = smul.addr %s265, 32
      %s267 = smul.addr %s266, 8
      %s268 = scalar_lea.vmem %s7, %s267
      %p269 = scmp.lt.s32.totalorder %s18, 1
      %s270 = scalar_select %p269, %s18, 1
      %s271 = smul.addr %s270, 32
      %s272 = smul.addr %s271, 8
      %s273 = scalar_lea.vmem %s0, %s272
      %p274 = scmp.lt.s32.totalorder %s18, 1
      %s275 = scalar_select %p274, %s18, 1
      %s276 = smul.addr %s275, 32
      %s277 = smul.addr %s276, 8
      %s278 = scalar_lea.vmem %s7, %s277
      %vm279 = vcmask 31744
      %280 = vst.msk [vmem:[#allocation2] sm:$0xff] %vm279, 0.0
      %281 = vst.msk [vmem:[#allocation2 + $0x8] sm:$0xff] %vm279, 0.0
      %vm282 = vcmask 25600
      %283 = vst.msk [vmem:[#allocation2 + $0x10] sm:$0x3] %vm282, 0.0
      %284 = vst.msk [vmem:[#allocation2 + $0x18] sm:$0xff] %vm279, 0.0
      %285 = vst.msk [vmem:[#allocation2 + $0x20] sm:$0xff] %vm279, 0.0
      %286 = vst.msk [vmem:[#allocation2 + $0x28] sm:$0x3] %vm282, 0.0
      %287 = vst.msk [vmem:[#allocation2 + $0x30] sm:$0xff] %vm279, 0.0
      %288 = vst.msk [vmem:[#allocation2 + $0x38] sm:$0xff] %vm279, 0.0
      %289 = vst.msk [vmem:[#allocation2 + $0x40] sm:$0x3] %vm282, 0.0
      %290 = vst.msk [vmem:[#allocation2 + $0x48] sm:$0xff] %vm279, 0.0
      %291 = vst.msk [vmem:[#allocation2 + $0x50] sm:$0xff] %vm279, 0.0
      %292 = vst.msk [vmem:[#allocation2 + $0x58] sm:$0x3] %vm282, 0.0
      %293 = vst.msk [vmem:[#allocation2 + $0x60] sm:$0xff] %vm279, 0.0
      %294 = vst.msk [vmem:[#allocation2 + $0x68] sm:$0xff] %vm279, 0.0
      %295 = vst.msk [vmem:[#allocation2 + $0x70] sm:$0x3] %vm282, 0.0
      %296 = vst.msk [vmem:[#allocation2 + $0x78] sm:$0xff] %vm279, 0.0
      %297 = vst.msk [vmem:[#allocation2 + $0x80] sm:$0xff] %vm279, 0.0
      %298 = vst.msk [vmem:[#allocation2 + $0x88] sm:$0x3] %vm282, 0.0
      %299 = vst.msk [vmem:[#allocation2 + $0x90] sm:$0xff] %vm279, 0.0
      %300 = vst.msk [vmem:[#allocation2 + $0x98] sm:$0xff] %vm279, 0.0
      %301 = vst.msk [vmem:[#allocation2 + $0xa0] sm:$0x3] %vm282, 0.0
      %302 = vst.msk [vmem:[#allocation2 + $0xa8] sm:$0xff] %vm279, 0.0
      %303 = vst.msk [vmem:[#allocation2 + $0xb0] sm:$0xff] %vm279, 0.0
      %304 = vst.msk [vmem:[#allocation2 + $0xb8] sm:$0x3] %vm282, 0.0
      %305 = vst.msk [vmem:[#allocation2 + $0xc0] sm:$0xff] %vm279, 0.0
      %306 = vst.msk [vmem:[#allocation2 + $0xc8] sm:$0xff] %vm279, 0.0
      %307 = vst.msk [vmem:[#allocation2 + $0xd0] sm:$0x3] %vm282, 0.0
      %308 = vst.msk [vmem:[#allocation2 + $0xd8] sm:$0xff] %vm279, 0.0
      %309 = vst.msk [vmem:[#allocation2 + $0xe0] sm:$0xff] %vm279, 0.0
      %310 = vst.msk [vmem:[#allocation2 + $0xe8] sm:$0x3] %vm282, 0.0
      %311 = vst.msk [vmem:[#allocation2 + $0xf0] sm:$0xff] %vm279, 0.0
      %312 = vst.msk [vmem:[#allocation2 + $0xf8] sm:$0xff] %vm279, 0.0
      %313 = vst.msk [vmem:[#allocation2 + $0x100] sm:$0x3] %vm282, 0.0
      %314 = vst.msk [vmem:[#allocation2 + $0x108] sm:$0xff] %vm279, 0.0
      %315 = vst.msk [vmem:[#allocation2 + $0x110] sm:$0xff] %vm279, 0.0
      %316 = vst.msk [vmem:[#allocation2 + $0x118] sm:$0x3] %vm282, 0.0
      %317 = vst.msk [vmem:[#allocation2 + $0x120] sm:$0xff] %vm279, 0.0
      %318 = vst.msk [vmem:[#allocation2 + $0x128] sm:$0xff] %vm279, 0.0
      %319 = vst.msk [vmem:[#allocation2 + $0x130] sm:$0x3] %vm282, 0.0
      %320 = vst.msk [vmem:[#allocation2 + $0x138] sm:$0xff] %vm279, 0.0
      %321 = vst.msk [vmem:[#allocation2 + $0x140] sm:$0xff] %vm279, 0.0
      %322 = vst.msk [vmem:[#allocation2 + $0x148] sm:$0x3] %vm282, 0.0
      %323 = vst.msk [vmem:[#allocation2 + $0x150] sm:$0xff] %vm279, 0.0
      %324 = vst.msk [vmem:[#allocation2 + $0x158] sm:$0xff] %vm279, 0.0
      %325 = vst.msk [vmem:[#allocation2 + $0x160] sm:$0x3] %vm282, 0.0
      %326 = vst.msk [vmem:[#allocation2 + $0x168] sm:$0xff] %vm279, 0.0
      %327 = vst.msk [vmem:[#allocation2 + $0x170] sm:$0xff] %vm279, 0.0
      %328 = vst.msk [vmem:[#allocation2 + $0x178] sm:$0x3] %vm282, 0.0
      %329 = vst.msk [vmem:[#allocation2 + $0x180] sm:$0xff] %vm279, 0.0
      %330 = vst.msk [vmem:[#allocation2 + $0x188] sm:$0xff] %vm279, 0.0
      %331 = vst.msk [vmem:[#allocation2 + $0x190] sm:$0x3] %vm282, 0.0
      %332 = vst.msk [vmem:[#allocation2 + $0x198] sm:$0xff] %vm279, 0.0
      %333 = vst.msk [vmem:[#allocation2 + $0x1a0] sm:$0xff] %vm279, 0.0
      %334 = vst.msk [vmem:[#allocation2 + $0x1a8] sm:$0x3] %vm282, 0.0
      %v335 = vld [vmem:[%s273] sm:$0xff]
      %v336 = vld [vmem:[%s273 + $0x8] sm:$0xff]
      %v337 = vld [vmem:[%s273 + $0x10] sm:$0xff]
      %v338 = vld [vmem:[%s273 + $0x18] sm:$0xff]
      %v339 = vld [vmem:[%s273 + $0x20] sm:$0xff]
      %v340 = vld [vmem:[%s273 + $0x28] sm:$0xff]
      %v341 = vld [vmem:[%s273 + $0x30] sm:$0xff]
      %v342 = vld [vmem:[%s273 + $0x38] sm:$0xff]
      %v343 = vld [vmem:[%s273 + $0x40] sm:$0xff]
      %v344 = vld [vmem:[%s273 + $0x48] sm:$0xff]
      %v345 = vld [vmem:[%s273 + $0x50] sm:$0xff]
      %v346 = vld [vmem:[%s273 + $0x58] sm:$0xff]
      %v347 = vld [vmem:[%s273 + $0x60] sm:$0xff]
      %v348 = vld [vmem:[%s273 + $0x68] sm:$0xff]
      %v349 = vld [vmem:[%s273 + $0x70] sm:$0xff]
      %v350 = vld [vmem:[%s273 + $0x78] sm:$0xff]
      %v351 = vld [vmem:[%s273 + $0x80] sm:$0xff]
      %v352 = vld [vmem:[%s273 + $0x88] sm:$0xff]
      %v353 = vld [vmem:[%s273 + $0x90] sm:$0xff]
      %v354 = vld [vmem:[%s273 + $0x98] sm:$0xff]
      %v355 = vld [vmem:[%s273 + $0xa0] sm:$0xff]
      %v356 = vld [vmem:[%s273 + $0xa8] sm:$0xff]
      %v357 = vld [vmem:[%s273 + $0xb0] sm:$0xff]
      %v358 = vld [vmem:[%s273 + $0xb8] sm:$0xff]
      %v359 = vld [vmem:[%s273 + $0xc0] sm:$0xff]
      %v360 = vld [vmem:[%s273 + $0xc8] sm:$0xff]
      %v361 = vld [vmem:[%s273 + $0xd0] sm:$0xff]
      %v362 = vld [vmem:[%s273 + $0xd8] sm:$0xff]
      %v363 = vld [vmem:[%s273 + $0xe0] sm:$0xff]
      %v364 = vld [vmem:[%s273 + $0xe8] sm:$0xff]
      %v365 = vld [vmem:[%s273 + $0xf0] sm:$0xff]
      %v366 = vld [vmem:[%s273 + $0xf8] sm:$0xff]
      %s367 = scalar_lea.vmem [#allocation2], 24
      %368 = vst.msk [vmem:[%s367 + $0x1] sm:$0xff] %vm279, %v335
      %369 = vst.msk [vmem:[%s367 + $0x9] sm:$0xff] %vm279, %v336
      %370 = vst.msk [vmem:[%s367 + $0x19] sm:$0xff] %vm279, %v337
      %371 = vst.msk [vmem:[%s367 + $0x21] sm:$0xff] %vm279, %v338
      %372 = vst.msk [vmem:[%s367 + $0x31] sm:$0xff] %vm279, %v339
      %373 = vst.msk [vmem:[%s367 + $0x39] sm:$0xff] %vm279, %v340
      %374 = vst.msk [vmem:[%s367 + $0x49] sm:$0xff] %vm279, %v341
      %375 = vst.msk [vmem:[%s367 + $0x51] sm:$0xff] %vm279, %v342
      %376 = vst.msk [vmem:[%s367 + $0x61] sm:$0xff] %vm279, %v343
      %377 = vst.msk [vmem:[%s367 + $0x69] sm:$0xff] %vm279, %v344
      %378 = vst.msk [vmem:[%s367 + $0x79] sm:$0xff] %vm279, %v345
      %379 = vst.msk [vmem:[%s367 + $0x81] sm:$0xff] %vm279, %v346
      %380 = vst.msk [vmem:[%s367 + $0x91] sm:$0xff] %vm279, %v347
      %381 = vst.msk [vmem:[%s367 + $0x99] sm:$0xff] %vm279, %v348
      %382 = vst.msk [vmem:[%s367 + $0xa9] sm:$0xff] %vm279, %v349
      %383 = vst.msk [vmem:[%s367 + $0xb1] sm:$0xff] %vm279, %v350
      %384 = vst.msk [vmem:[%s367 + $0xc1] sm:$0xff] %vm279, %v351
      %385 = vst.msk [vmem:[%s367 + $0xc9] sm:$0xff] %vm279, %v352
      %386 = vst.msk [vmem:[%s367 + $0xd9] sm:$0xff] %vm279, %v353
      %387 = vst.msk [vmem:[%s367 + $0xe1] sm:$0xff] %vm279, %v354
      %388 = vst.msk [vmem:[%s367 + $0xf1] sm:$0xff] %vm279, %v355
      %389 = vst.msk [vmem:[%s367 + $0xf9] sm:$0xff] %vm279, %v356
      %390 = vst.msk [vmem:[%s367 + $0x109] sm:$0xff] %vm279, %v357
      %391 = vst.msk [vmem:[%s367 + $0x111] sm:$0xff] %vm279, %v358
      %392 = vst.msk [vmem:[%s367 + $0x121] sm:$0xff] %vm279, %v359
      %393 = vst.msk [vmem:[%s367 + $0x129] sm:$0xff] %vm279, %v360
      %394 = vst.msk [vmem:[%s367 + $0x139] sm:$0xff] %vm279, %v361
      %395 = vst.msk [vmem:[%s367 + $0x141] sm:$0xff] %vm279, %v362
      %396 = vst.msk [vmem:[%s367 + $0x151] sm:$0xff] %vm279, %v363
      %397 = vst.msk [vmem:[%s367 + $0x159] sm:$0xff] %vm279, %v364
      %398 = vst.msk [vmem:[%s367 + $0x169] sm:$0xff] %vm279, %v365
      %399 = vst.msk [vmem:[%s367 + $0x171] sm:$0xff] %vm279, %v366
      %vm400 = vcmask 64512
      %401 = vst.msk [vmem:[#allocation4] sm:$0xff] %vm400, 0.0
      %402 = vst.msk [vmem:[#allocation4 + $0x8] sm:$0xff] %vm400, 0.0
      %vm403 = vcmask 58368
      %404 = vst.msk [vmem:[#allocation4 + $0x10] sm:$0x3] %vm403, 0.0
      %405 = vst.msk [vmem:[#allocation4 + $0x18] sm:$0xff] %vm400, 0.0
      %406 = vst.msk [vmem:[#allocation4 + $0x20] sm:$0xff] %vm400, 0.0
      %407 = vst.msk [vmem:[#allocation4 + $0x28] sm:$0x3] %vm403, 0.0
      %408 = vst.msk [vmem:[#allocation4 + $0x30] sm:$0xff] %vm400, 0.0
      %409 = vst.msk [vmem:[#allocation4 + $0x38] sm:$0xff] %vm400, 0.0
      %410 = vst.msk [vmem:[#allocation4 + $0x40] sm:$0x3] %vm403, 0.0
      %411 = vst.msk [vmem:[#allocation4 + $0x48] sm:$0xff] %vm400, 0.0
      %412 = vst.msk [vmem:[#allocation4 + $0x50] sm:$0xff] %vm400, 0.0
      %413 = vst.msk [vmem:[#allocation4 + $0x58] sm:$0x3] %vm403, 0.0
      %414 = vst.msk [vmem:[#allocation4 + $0x60] sm:$0xff] %vm400, 0.0
      %415 = vst.msk [vmem:[#allocation4 + $0x68] sm:$0xff] %vm400, 0.0
      %416 = vst.msk [vmem:[#allocation4 + $0x70] sm:$0x3] %vm403, 0.0
      %417 = vst.msk [vmem:[#allocation4 + $0x78] sm:$0xff] %vm400, 0.0
      %418 = vst.msk [vmem:[#allocation4 + $0x80] sm:$0xff] %vm400, 0.0
      %419 = vst.msk [vmem:[#allocation4 + $0x88] sm:$0x3] %vm403, 0.0
      %420 = vst.msk [vmem:[#allocation4 + $0x90] sm:$0xff] %vm400, 0.0
      %421 = vst.msk [vmem:[#allocation4 + $0x98] sm:$0xff] %vm400, 0.0
      %422 = vst.msk [vmem:[#allocation4 + $0xa0] sm:$0x3] %vm403, 0.0
      %423 = vst.msk [vmem:[#allocation4 + $0xa8] sm:$0xff] %vm400, 0.0
      %424 = vst.msk [vmem:[#allocation4 + $0xb0] sm:$0xff] %vm400, 0.0
      %425 = vst.msk [vmem:[#allocation4 + $0xb8] sm:$0x3] %vm403, 0.0
      %426 = vst.msk [vmem:[#allocation4 + $0xc0] sm:$0xff] %vm400, 0.0
      %427 = vst.msk [vmem:[#allocation4 + $0xc8] sm:$0xff] %vm400, 0.0
      %428 = vst.msk [vmem:[#allocation4 + $0xd0] sm:$0x3] %vm403, 0.0
      %429 = vst.msk [vmem:[#allocation4 + $0xd8] sm:$0xff] %vm400, 0.0
      %430 = vst.msk [vmem:[#allocation4 + $0xe0] sm:$0xff] %vm400, 0.0
      %431 = vst.msk [vmem:[#allocation4 + $0xe8] sm:$0x3] %vm403, 0.0
      %432 = vst.msk [vmem:[#allocation4 + $0xf0] sm:$0xff] %vm400, 0.0
      %433 = vst.msk [vmem:[#allocation4 + $0xf8] sm:$0xff] %vm400, 0.0
      %434 = vst.msk [vmem:[#allocation4 + $0x100] sm:$0x3] %vm403, 0.0
      %435 = vst.msk [vmem:[#allocation4 + $0x108] sm:$0xff] %vm400, 0.0
      %436 = vst.msk [vmem:[#allocation4 + $0x110] sm:$0xff] %vm400, 0.0
      %437 = vst.msk [vmem:[#allocation4 + $0x118] sm:$0x3] %vm403, 0.0
      %438 = vst.msk [vmem:[#allocation4 + $0x120] sm:$0xff] %vm400, 0.0
      %439 = vst.msk [vmem:[#allocation4 + $0x128] sm:$0xff] %vm400, 0.0
      %440 = vst.msk [vmem:[#allocation4 + $0x130] sm:$0x3] %vm403, 0.0
      %441 = vst.msk [vmem:[#allocation4 + $0x138] sm:$0xff] %vm400, 0.0
      %442 = vst.msk [vmem:[#allocation4 + $0x140] sm:$0xff] %vm400, 0.0
      %443 = vst.msk [vmem:[#allocation4 + $0x148] sm:$0x3] %vm403, 0.0
      %444 = vst.msk [vmem:[#allocation4 + $0x150] sm:$0xff] %vm400, 0.0
      %445 = vst.msk [vmem:[#allocation4 + $0x158] sm:$0xff] %vm400, 0.0
      %446 = vst.msk [vmem:[#allocation4 + $0x160] sm:$0x3] %vm403, 0.0
      %447 = vst.msk [vmem:[#allocation4 + $0x168] sm:$0xff] %vm400, 0.0
      %448 = vst.msk [vmem:[#allocation4 + $0x170] sm:$0xff] %vm400, 0.0
      %449 = vst.msk [vmem:[#allocation4 + $0x178] sm:$0x3] %vm403, 0.0
      %450 = vst.msk [vmem:[#allocation4 + $0x180] sm:$0xff] %vm400, 0.0
      %451 = vst.msk [vmem:[#allocation4 + $0x188] sm:$0xff] %vm400, 0.0
      %452 = vst.msk [vmem:[#allocation4 + $0x190] sm:$0x3] %vm403, 0.0
      %453 = vst.msk [vmem:[#allocation4 + $0x198] sm:$0xff] %vm400, 0.0
      %454 = vst.msk [vmem:[#allocation4 + $0x1a0] sm:$0xff] %vm400, 0.0
      %455 = vst.msk [vmem:[#allocation4 + $0x1a8] sm:$0x3] %vm403, 0.0
      %v456 = vld [vmem:[%s1] sm:$0xff]
      %v457 = vld [vmem:[%s1 + $0x8] sm:$0xff]
      %v458 = vld [vmem:[%s1 + $0x10] sm:$0xff]
      %v459 = vld [vmem:[%s1 + $0x18] sm:$0xff]
      %v460 = vld [vmem:[%s1 + $0x20] sm:$0xf]
      %v461 = vld [vmem:[#allocation2] sm:$0xff]
      %v462 = vld [vmem:[#allocation2 + $0x8] sm:$0xff]
      %v463 = vld [vmem:[#allocation2 + $0x18] sm:$0xff]
      %v464 = vld [vmem:[#allocation2 + $0x20] sm:$0xff]
      %v465 = vld [vmem:[#allocation2 + $0x30] sm:$0xff]
      %v466 = vld [vmem:[#allocation2 + $0x38] sm:$0xff]
      %v467 = vld [vmem:[#allocation2 + $0x48] sm:$0xff]
      %v468 = vld [vmem:[#allocation2 + $0x50] sm:$0xff]
      %v469 = vld [vmem:[#allocation2 + $0x60] sm:$0xff]
      %v470 = vld [vmem:[#allocation2 + $0x68] sm:$0xff]
      %v471 = vld [vmem:[#allocation2 + $0x78] sm:$0xff]
      %v472 = vld [vmem:[#allocation2 + $0x80] sm:$0xff]
      %v473 = vld [vmem:[#allocation2 + $0x90] sm:$0xff]
      %v474 = vld [vmem:[#allocation2 + $0x98] sm:$0xff]
      %v475 = vld [vmem:[#allocation2 + $0xa8] sm:$0xff]
      %v476 = vld [vmem:[#allocation2 + $0xb0] sm:$0xff]
      %v477 = vld [vmem:[#allocation2 + $0xc0] sm:$0xff]
      %v478 = vld [vmem:[#allocation2 + $0xc8] sm:$0xff]
      %v479 = vld [vmem:[#allocation2 + $0xd8] sm:$0xff]
      %v480 = vld [vmem:[#allocation2 + $0xe0] sm:$0xff]
      %v481 = vld [vmem:[#allocation2 + $0xf0] sm:$0xff]
      %v482 = vld [vmem:[#allocation2 + $0xf8] sm:$0xff]
      %v483 = vld [vmem:[#allocation2 + $0x108] sm:$0xff]
      %v484 = vld [vmem:[#allocation2 + $0x110] sm:$0xff]
      %v485 = vld [vmem:[#allocation2 + $0x120] sm:$0xff]
      %v486 = vld [vmem:[#allocation2 + $0x128] sm:$0xff]
      %v487 = vld [vmem:[#allocation2 + $0x138] sm:$0xff]
      %v488 = vld [vmem:[#allocation2 + $0x140] sm:$0xff]
      %v489 = vld [vmem:[#allocation2 + $0x150] sm:$0xff]
      %v490 = vld [vmem:[#allocation2 + $0x158] sm:$0xff]
      %v491 = vld [vmem:[#allocation2 + $0x168] sm:$0xff]
      %v492 = vld [vmem:[#allocation2 + $0x170] sm:$0xff]
      %493 = vst.msk [vmem:[#allocation3] sm:$0xff] %vm279, %v461
      %494 = vst.msk [vmem:[#allocation3 + $0x8] sm:$0xff] %vm279, %v462
      %495 = vst.msk [vmem:[#allocation3 + $0x10] sm:$0xff] %vm279, %v463
      %496 = vst.msk [vmem:[#allocation3 + $0x18] sm:$0xff] %vm279, %v464
      %497 = vst.msk [vmem:[#allocation3 + $0x20] sm:$0xff] %vm279, %v465
      %498 = vst.msk [vmem:[#allocation3 + $0x28] sm:$0xff] %vm279, %v466
      %499 = vst.msk [vmem:[#allocation3 + $0x30] sm:$0xff] %vm279, %v467
      %500 = vst.msk [vmem:[#allocation3 + $0x38] sm:$0xff] %vm279, %v468
      %501 = vst.msk [vmem:[#allocation3 + $0x40] sm:$0xff] %vm279, %v469
      %502 = vst.msk [vmem:[#allocation3 + $0x48] sm:$0xff] %vm279, %v470
      %503 = vst.msk [vmem:[#allocation3 + $0x50] sm:$0xff] %vm279, %v471
      %504 = vst.msk [vmem:[#allocation3 + $0x58] sm:$0xff] %vm279, %v472
      %505 = vst.msk [vmem:[#allocation3 + $0x60] sm:$0xff] %vm279, %v473
      %506 = vst.msk [vmem:[#allocation3 + $0x68] sm:$0xff] %vm279, %v474
      %507 = vst.msk [vmem:[#allocation3 + $0x70] sm:$0xff] %vm279, %v475
      %508 = vst.msk [vmem:[#allocation3 + $0x78] sm:$0xff] %vm279, %v476
      %509 = vst.msk [vmem:[#allocation3 + $0x80] sm:$0xff] %vm279, %v477
      %510 = vst.msk [vmem:[#allocation3 + $0x88] sm:$0xff] %vm279, %v478
      %511 = vst.msk [vmem:[#allocation3 + $0x90] sm:$0xff] %vm279, %v479
      %512 = vst.msk [vmem:[#allocation3 + $0x98] sm:$0xff] %vm279, %v480
      %513 = vst.msk [vmem:[#allocation3 + $0xa0] sm:$0xff] %vm279, %v481
      %514 = vst.msk [vmem:[#allocation3 + $0xa8] sm:$0xff] %vm279, %v482
      %515 = vst.msk [vmem:[#allocation3 + $0xb0] sm:$0xff] %vm279, %v483
      %516 = vst.msk [vmem:[#allocation3 + $0xb8] sm:$0xff] %vm279, %v484
      %517 = vst.msk [vmem:[#allocation3 + $0xc0] sm:$0xff] %vm279, %v485
      %518 = vst.msk [vmem:[#allocation3 + $0xc8] sm:$0xff] %vm279, %v486
      %519 = vst.msk [vmem:[#allocation3 + $0xd0] sm:$0xff] %vm279, %v487
      %520 = vst.msk [vmem:[#allocation3 + $0xd8] sm:$0xff] %vm279, %v488
      %521 = vst.msk [vmem:[#allocation3 + $0xe0] sm:$0xff] %vm279, %v489
      %522 = vst.msk [vmem:[#allocation3 + $0xe8] sm:$0xff] %vm279, %v490
      %523 = vst.msk [vmem:[#allocation3 + $0xf0] sm:$0xff] %vm279, %v491
      %524 = vst.msk [vmem:[#allocation3 + $0xf8] sm:$0xff] %vm279, %v492
      %v525 = vld [vmem:[#allocation2 + $0x1] sm:$0xff]
      %v526 = vld [vmem:[#allocation2 + $0x9] sm:$0xff]
      %v527 = vld [vmem:[#allocation2 + $0x19] sm:$0xff]
      %v528 = vld [vmem:[#allocation2 + $0x21] sm:$0xff]
      %v529 = vld [vmem:[#allocation2 + $0x31] sm:$0xff]
      %v530 = vld [vmem:[#allocation2 + $0x39] sm:$0xff]
      %v531 = vld [vmem:[#allocation2 + $0x49] sm:$0xff]
      %v532 = vld [vmem:[#allocation2 + $0x51] sm:$0xff]
      %v533 = vld [vmem:[#allocation2 + $0x61] sm:$0xff]
      %v534 = vld [vmem:[#allocation2 + $0x69] sm:$0xff]
      %v535 = vld [vmem:[#allocation2 + $0x79] sm:$0xff]
      %v536 = vld [vmem:[#allocation2 + $0x81] sm:$0xff]
      %v537 = vld [vmem:[#allocation2 + $0x91] sm:$0xff]
      %v538 = vld [vmem:[#allocation2 + $0x99] sm:$0xff]
      %v539 = vld [vmem:[#allocation2 + $0xa9] sm:$0xff]
      %v540 = vld [vmem:[#allocation2 + $0xb1] sm:$0xff]
      %v541 = vld [vmem:[#allocation2 + $0xc1] sm:$0xff]
      %v542 = vld [vmem:[#allocation2 + $0xc9] sm:$0xff]
      %v543 = vld [vmem:[#allocation2 + $0xd9] sm:$0xff]
      %v544 = vld [vmem:[#allocation2 + $0xe1] sm:$0xff]
      %v545 = vld [vmem:[#allocation2 + $0xf1] sm:$0xff]
      %v546 = vld [vmem:[#allocation2 + $0xf9] sm:$0xff]
      %v547 = vld [vmem:[#allocation2 + $0x109] sm:$0xff]
      %v548 = vld [vmem:[#allocation2 + $0x111] sm:$0xff]
      %v549 = vld [vmem:[#allocation2 + $0x121] sm:$0xff]
      %v550 = vld [vmem:[#allocation2 + $0x129] sm:$0xff]
      %v551 = vld [vmem:[#allocation2 + $0x139] sm:$0xff]
      %v552 = vld [vmem:[#allocation2 + $0x141] sm:$0xff]
      %v553 = vld [vmem:[#allocation2 + $0x151] sm:$0xff]
      %v554 = vld [vmem:[#allocation2 + $0x159] sm:$0xff]
      %v555 = vld [vmem:[#allocation2 + $0x169] sm:$0xff]
      %v556 = vld [vmem:[#allocation2 + $0x171] sm:$0xff]
      %589 = vrot.lane.b32.xlu0 %v525, 4
      %v590 = vpop.permute.xlu0 %589
      %591 = vrot.lane.b32.xlu0 %v526, 4
      %v592 = vpop.permute.xlu0 %591
      %593 = vrot.lane.b32.xlu0 %v527, 4
      %v594 = vpop.permute.xlu0 %593
      %595 = vrot.lane.b32.xlu0 %v528, 4
      %v596 = vpop.permute.xlu0 %595
      %597 = vrot.lane.b32.xlu0 %v529, 4
      %v598 = vpop.permute.xlu0 %597
      %599 = vrot.lane.b32.xlu0 %v530, 4
      %v600 = vpop.permute.xlu0 %599
      %601 = vrot.lane.b32.xlu0 %v531, 4
      %v602 = vpop.permute.xlu0 %601
      %603 = vrot.lane.b32.xlu0 %v532, 4
      %v604 = vpop.permute.xlu0 %603
      %605 = vrot.lane.b32.xlu0 %v533, 4
      %v606 = vpop.permute.xlu0 %605
      %607 = vrot.lane.b32.xlu0 %v534, 4
      %v608 = vpop.permute.xlu0 %607
      %609 = vrot.lane.b32.xlu0 %v535, 4
      %v610 = vpop.permute.xlu0 %609
      %611 = vrot.lane.b32.xlu0 %v536, 4
      %v612 = vpop.permute.xlu0 %611
      %613 = vrot.lane.b32.xlu0 %v537, 4
      %v614 = vpop.permute.xlu0 %613
      %615 = vrot.lane.b32.xlu0 %v538, 4
      %v616 = vpop.permute.xlu0 %615
      %617 = vrot.lane.b32.xlu0 %v539, 4
      %v618 = vpop.permute.xlu0 %617
      %619 = vrot.lane.b32.xlu0 %v540, 4
      %v620 = vpop.permute.xlu0 %619
      %621 = vrot.lane.b32.xlu0 %v541, 4
      %v622 = vpop.permute.xlu0 %621
      %623 = vrot.lane.b32.xlu0 %v542, 4
      %v624 = vpop.permute.xlu0 %623
      %625 = vrot.lane.b32.xlu0 %v543, 4
      %v626 = vpop.permute.xlu0 %625
      %627 = vrot.lane.b32.xlu0 %v544, 4
      %v628 = vpop.permute.xlu0 %627
      %629 = vrot.lane.b32.xlu0 %v545, 4
      %v630 = vpop.permute.xlu0 %629
      %631 = vrot.lane.b32.xlu0 %v546, 4
      %v632 = vpop.permute.xlu0 %631
      %633 = vrot.lane.b32.xlu0 %v547, 4
      %v634 = vpop.permute.xlu0 %633
      %635 = vrot.lane.b32.xlu0 %v548, 4
      %v636 = vpop.permute.xlu0 %635
      %637 = vrot.lane.b32.xlu0 %v549, 4
      %v638 = vpop.permute.xlu0 %637
      %639 = vrot.lane.b32.xlu0 %v550, 4
      %v640 = vpop.permute.xlu0 %639
      %641 = vrot.lane.b32.xlu0 %v551, 4
      %v642 = vpop.permute.xlu0 %641
      %643 = vrot.lane.b32.xlu0 %v552, 4
      %v644 = vpop.permute.xlu0 %643
      %645 = vrot.lane.b32.xlu0 %v553, 4
      %v646 = vpop.permute.xlu0 %645
      %647 = vrot.lane.b32.xlu0 %v554, 4
      %v648 = vpop.permute.xlu0 %647
      %649 = vrot.lane.b32.xlu0 %v555, 4
      %v650 = vpop.permute.xlu0 %649
      %651 = vrot.lane.b32.xlu0 %v556, 4
      %v652 = vpop.permute.xlu0 %651
      %vm685 = vcmask 64544
      %686 = vst.msk [vmem:[#allocation3] sm:$0xff] %vm685, %v590
      %687 = vst.msk [vmem:[#allocation3 + $0x8] sm:$0xff] %vm685, %v592
      %688 = vst.msk [vmem:[#allocation3 + $0x10] sm:$0xff] %vm685, %v594
      %689 = vst.msk [vmem:[#allocation3 + $0x18] sm:$0xff] %vm685, %v596
      %690 = vst.msk [vmem:[#allocation3 + $0x20] sm:$0xff] %vm685, %v598
      %691 = vst.msk [vmem:[#allocation3 + $0x28] sm:$0xff] %vm685, %v600
      %692 = vst.msk [vmem:[#allocation3 + $0x30] sm:$0xff] %vm685, %v602
      %693 = vst.msk [vmem:[#allocation3 + $0x38] sm:$0xff] %vm685, %v604
      %694 = vst.msk [vmem:[#allocation3 + $0x40] sm:$0xff] %vm685, %v606
      %695 = vst.msk [vmem:[#allocation3 + $0x48] sm:$0xff] %vm685, %v608
      %696 = vst.msk [vmem:[#allocation3 + $0x50] sm:$0xff] %vm685, %v610
      %697 = vst.msk [vmem:[#allocation3 + $0x58] sm:$0xff] %vm685, %v612
      %698 = vst.msk [vmem:[#allocation3 + $0x60] sm:$0xff] %vm685, %v614
      %699 = vst.msk [vmem:[#allocation3 + $0x68] sm:$0xff] %vm685, %v616
      %700 = vst.msk [vmem:[#allocation3 + $0x70] sm:$0xff] %vm685, %v618
      %701 = vst.msk [vmem:[#allocation3 + $0x78] sm:$0xff] %vm685, %v620
      %702 = vst.msk [vmem:[#allocation3 + $0x80] sm:$0xff] %vm685, %v622
      %703 = vst.msk [vmem:[#allocation3 + $0x88] sm:$0xff] %vm685, %v624
      %704 = vst.msk [vmem:[#allocation3 + $0x90] sm:$0xff] %vm685, %v626
      %705 = vst.msk [vmem:[#allocation3 + $0x98] sm:$0xff] %vm685, %v628
      %706 = vst.msk [vmem:[#allocation3 + $0xa0] sm:$0xff] %vm685, %v630
      %707 = vst.msk [vmem:[#allocation3 + $0xa8] sm:$0xff] %vm685, %v632
      %708 = vst.msk [vmem:[#allocation3 + $0xb0] sm:$0xff] %vm685, %v634
      %709 = vst.msk [vmem:[#allocation3 + $0xb8] sm:$0xff] %vm685, %v636
      %710 = vst.msk [vmem:[#allocation3 + $0xc0] sm:$0xff] %vm685, %v638
      %711 = vst.msk [vmem:[#allocation3 + $0xc8] sm:$0xff] %vm685, %v640
      %712 = vst.msk [vmem:[#allocation3 + $0xd0] sm:$0xff] %vm685, %v642
      %713 = vst.msk [vmem:[#allocation3 + $0xd8] sm:$0xff] %vm685, %v644
      %714 = vst.msk [vmem:[#allocation3 + $0xe0] sm:$0xff] %vm685, %v646
      %715 = vst.msk [vmem:[#allocation3 + $0xe8] sm:$0xff] %vm685, %v648
      %716 = vst.msk [vmem:[#allocation3 + $0xf0] sm:$0xff] %vm685, %v650
      %717 = vst.msk [vmem:[#allocation3 + $0xf8] sm:$0xff] %vm685, %v652
      %v718 = vld [vmem:[#allocation2 + $0x2] sm:$0xff]
      %v719 = vld [vmem:[#allocation2 + $0xa] sm:$0xff]
      %v720 = vld [vmem:[#allocation2 + $0x1a] sm:$0xff]
      %v721 = vld [vmem:[#allocation2 + $0x22] sm:$0xff]
      %v722 = vld [vmem:[#allocation2 + $0x32] sm:$0xff]
      %v723 = vld [vmem:[#allocation2 + $0x3a] sm:$0xff]
      %v724 = vld [vmem:[#allocation2 + $0x4a] sm:$0xff]
      %v725 = vld [vmem:[#allocation2 + $0x52] sm:$0xff]
      %v726 = vld [vmem:[#allocation2 + $0x62] sm:$0xff]
      %v727 = vld [vmem:[#allocation2 + $0x6a] sm:$0xff]
      %v728 = vld [vmem:[#allocation2 + $0x7a] sm:$0xff]
      %v729 = vld [vmem:[#allocation2 + $0x82] sm:$0xff]
      %v730 = vld [vmem:[#allocation2 + $0x92] sm:$0xff]
      %v731 = vld [vmem:[#allocation2 + $0x9a] sm:$0xff]
      %v732 = vld [vmem:[#allocation2 + $0xaa] sm:$0xff]
      %v733 = vld [vmem:[#allocation2 + $0xb2] sm:$0xff]
      %v734 = vld [vmem:[#allocation2 + $0xc2] sm:$0xff]
      %v735 = vld [vmem:[#allocation2 + $0xca] sm:$0xff]
      %v736 = vld [vmem:[#allocation2 + $0xda] sm:$0xff]
      %v737 = vld [vmem:[#allocation2 + $0xe2] sm:$0xff]
      %v738 = vld [vmem:[#allocation2 + $0xf2] sm:$0xff]
      %v739 = vld [vmem:[#allocation2 + $0xfa] sm:$0xff]
      %v740 = vld [vmem:[#allocation2 + $0x10a] sm:$0xff]
      %v741 = vld [vmem:[#allocation2 + $0x112] sm:$0xff]
      %v742 = vld [vmem:[#allocation2 + $0x122] sm:$0xff]
      %v743 = vld [vmem:[#allocation2 + $0x12a] sm:$0xff]
      %v744 = vld [vmem:[#allocation2 + $0x13a] sm:$0xff]
      %v745 = vld [vmem:[#allocation2 + $0x142] sm:$0xff]
      %v746 = vld [vmem:[#allocation2 + $0x152] sm:$0xff]
      %v747 = vld [vmem:[#allocation2 + $0x15a] sm:$0xff]
      %v748 = vld [vmem:[#allocation2 + $0x16a] sm:$0xff]
      %v749 = vld [vmem:[#allocation2 + $0x172] sm:$0xff]
      %782 = vrot.lane.b32.xlu0 %v718, 8
      %v783 = vpop.permute.xlu0 %782
      %784 = vrot.lane.b32.xlu0 %v719, 8
      %v785 = vpop.permute.xlu0 %784
      %786 = vrot.lane.b32.xlu0 %v720, 8
      %v787 = vpop.permute.xlu0 %786
      %788 = vrot.lane.b32.xlu0 %v721, 8
      %v789 = vpop.permute.xlu0 %788
      %790 = vrot.lane.b32.xlu0 %v722, 8
      %v791 = vpop.permute.xlu0 %790
      %792 = vrot.lane.b32.xlu0 %v723, 8
      %v793 = vpop.permute.xlu0 %792
      %794 = vrot.lane.b32.xlu0 %v724, 8
      %v795 = vpop.permute.xlu0 %794
      %796 = vrot.lane.b32.xlu0 %v725, 8
      %v797 = vpop.permute.xlu0 %796
      %798 = vrot.lane.b32.xlu0 %v726, 8
      %v799 = vpop.permute.xlu0 %798
      %800 = vrot.lane.b32.xlu0 %v727, 8
      %v801 = vpop.permute.xlu0 %800
      %802 = vrot.lane.b32.xlu0 %v728, 8
      %v803 = vpop.permute.xlu0 %802
      %804 = vrot.lane.b32.xlu0 %v729, 8
      %v805 = vpop.permute.xlu0 %804
      %806 = vrot.lane.b32.xlu0 %v730, 8
      %v807 = vpop.permute.xlu0 %806
      %808 = vrot.lane.b32.xlu0 %v731, 8
      %v809 = vpop.permute.xlu0 %808
      %810 = vrot.lane.b32.xlu0 %v732, 8
      %v811 = vpop.permute.xlu0 %810
      %812 = vrot.lane.b32.xlu0 %v733, 8
      %v813 = vpop.permute.xlu0 %812
      %814 = vrot.lane.b32.xlu0 %v734, 8
      %v815 = vpop.permute.xlu0 %814
      %816 = vrot.lane.b32.xlu0 %v735, 8
      %v817 = vpop.permute.xlu0 %816
      %818 = vrot.lane.b32.xlu0 %v736, 8
      %v819 = vpop.permute.xlu0 %818
      %820 = vrot.lane.b32.xlu0 %v737, 8
      %v821 = vpop.permute.xlu0 %820
      %822 = vrot.lane.b32.xlu0 %v738, 8
      %v823 = vpop.permute.xlu0 %822
      %824 = vrot.lane.b32.xlu0 %v739, 8
      %v825 = vpop.permute.xlu0 %824
      %826 = vrot.lane.b32.xlu0 %v740, 8
      %v827 = vpop.permute.xlu0 %826
      %828 = vrot.lane.b32.xlu0 %v741, 8
      %v829 = vpop.permute.xlu0 %828
      %830 = vrot.lane.b32.xlu0 %v742, 8
      %v831 = vpop.permute.xlu0 %830
      %832 = vrot.lane.b32.xlu0 %v743, 8
      %v833 = vpop.permute.xlu0 %832
      %834 = vrot.lane.b32.xlu0 %v744, 8
      %v835 = vpop.permute.xlu0 %834
      %836 = vrot.lane.b32.xlu0 %v745, 8
      %v837 = vpop.permute.xlu0 %836
      %838 = vrot.lane.b32.xlu0 %v746, 8
      %v839 = vpop.permute.xlu0 %838
      %840 = vrot.lane.b32.xlu0 %v747, 8
      %v841 = vpop.permute.xlu0 %840
      %842 = vrot.lane.b32.xlu0 %v748, 8
      %v843 = vpop.permute.xlu0 %842
      %844 = vrot.lane.b32.xlu0 %v749, 8
      %v845 = vpop.permute.xlu0 %844
      %vm878 = vcmask 97344
      %879 = vst.msk [vmem:[#allocation3] sm:$0xff] %vm878, %v783
      %880 = vst.msk [vmem:[#allocation3 + $0x8] sm:$0xff] %vm878, %v785
      %881 = vst.msk [vmem:[#allocation3 + $0x10] sm:$0xff] %vm878, %v787
      %882 = vst.msk [vmem:[#allocation3 + $0x18] sm:$0xff] %vm878, %v789
      %883 = vst.msk [vmem:[#allocation3 + $0x20] sm:$0xff] %vm878, %v791
      %884 = vst.msk [vmem:[#allocation3 + $0x28] sm:$0xff] %vm878, %v793
      %885 = vst.msk [vmem:[#allocation3 + $0x30] sm:$0xff] %vm878, %v795
      %886 = vst.msk [vmem:[#allocation3 + $0x38] sm:$0xff] %vm878, %v797
      %887 = vst.msk [vmem:[#allocation3 + $0x40] sm:$0xff] %vm878, %v799
      %888 = vst.msk [vmem:[#allocation3 + $0x48] sm:$0xff] %vm878, %v801
      %889 = vst.msk [vmem:[#allocation3 + $0x50] sm:$0xff] %vm878, %v803
      %890 = vst.msk [vmem:[#allocation3 + $0x58] sm:$0xff] %vm878, %v805
      %891 = vst.msk [vmem:[#allocation3 + $0x60] sm:$0xff] %vm878, %v807
      %892 = vst.msk [vmem:[#allocation3 + $0x68] sm:$0xff] %vm878, %v809
      %893 = vst.msk [vmem:[#allocation3 + $0x70] sm:$0xff] %vm878, %v811
      %894 = vst.msk [vmem:[#allocation3 + $0x78] sm:$0xff] %vm878, %v813
      %895 = vst.msk [vmem:[#allocation3 + $0x80] sm:$0xff] %vm878, %v815
      %896 = vst.msk [vmem:[#allocation3 + $0x88] sm:$0xff] %vm878, %v817
      %897 = vst.msk [vmem:[#allocation3 + $0x90] sm:$0xff] %vm878, %v819
      %898 = vst.msk [vmem:[#allocation3 + $0x98] sm:$0xff] %vm878, %v821
      %899 = vst.msk [vmem:[#allocation3 + $0xa0] sm:$0xff] %vm878, %v823
      %900 = vst.msk [vmem:[#allocation3 + $0xa8] sm:$0xff] %vm878, %v825
      %901 = vst.msk [vmem:[#allocation3 + $0xb0] sm:$0xff] %vm878, %v827
      %902 = vst.msk [vmem:[#allocation3 + $0xb8] sm:$0xff] %vm878, %v829
      %903 = vst.msk [vmem:[#allocation3 + $0xc0] sm:$0xff] %vm878, %v831
      %904 = vst.msk [vmem:[#allocation3 + $0xc8] sm:$0xff] %vm878, %v833
      %905 = vst.msk [vmem:[#allocation3 + $0xd0] sm:$0xff] %vm878, %v835
      %906 = vst.msk [vmem:[#allocation3 + $0xd8] sm:$0xff] %vm878, %v837
      %907 = vst.msk [vmem:[#allocation3 + $0xe0] sm:$0xff] %vm878, %v839
      %908 = vst.msk [vmem:[#allocation3 + $0xe8] sm:$0xff] %vm878, %v841
      %909 = vst.msk [vmem:[#allocation3 + $0xf0] sm:$0xff] %vm878, %v843
      %910 = vst.msk [vmem:[#allocation3 + $0xf8] sm:$0xff] %vm878, %v845
      %v911 = vld [vmem:[%s367] sm:$0xff]
      %v912 = vld [vmem:[%s367 + $0x8] sm:$0xff]
      %v913 = vld [vmem:[%s367 + $0x18] sm:$0xff]
      %v914 = vld [vmem:[%s367 + $0x20] sm:$0xff]
      %v915 = vld [vmem:[%s367 + $0x30] sm:$0xff]
      %v916 = vld [vmem:[%s367 + $0x38] sm:$0xff]
      %v917 = vld [vmem:[%s367 + $0x48] sm:$0xff]
      %v918 = vld [vmem:[%s367 + $0x50] sm:$0xff]
      %v919 = vld [vmem:[%s367 + $0x60] sm:$0xff]
      %v920 = vld [vmem:[%s367 + $0x68] sm:$0xff]
      %v921 = vld [vmem:[%s367 + $0x78] sm:$0xff]
      %v922 = vld [vmem:[%s367 + $0x80] sm:$0xff]
      %v923 = vld [vmem:[%s367 + $0x90] sm:$0xff]
      %v924 = vld [vmem:[%s367 + $0x98] sm:$0xff]
      %v925 = vld [vmem:[%s367 + $0xa8] sm:$0xff]
      %v926 = vld [vmem:[%s367 + $0xb0] sm:$0xff]
      %v927 = vld [vmem:[%s367 + $0xc0] sm:$0xff]
      %v928 = vld [vmem:[%s367 + $0xc8] sm:$0xff]
      %v929 = vld [vmem:[%s367 + $0xd8] sm:$0xff]
      %v930 = vld [vmem:[%s367 + $0xe0] sm:$0xff]
      %v931 = vld [vmem:[%s367 + $0xf0] sm:$0xff]
      %v932 = vld [vmem:[%s367 + $0xf8] sm:$0xff]
      %v933 = vld [vmem:[%s367 + $0x108] sm:$0xff]
      %v934 = vld [vmem:[%s367 + $0x110] sm:$0xff]
      %v935 = vld [vmem:[%s367 + $0x120] sm:$0xff]
      %v936 = vld [vmem:[%s367 + $0x128] sm:$0xff]
      %v937 = vld [vmem:[%s367 + $0x138] sm:$0xff]
      %v938 = vld [vmem:[%s367 + $0x140] sm:$0xff]
      %v939 = vld [vmem:[%s367 + $0x150] sm:$0xff]
      %v940 = vld [vmem:[%s367 + $0x158] sm:$0xff]
      %v941 = vld [vmem:[%s367 + $0x168] sm:$0xff]
      %v942 = vld [vmem:[%s367 + $0x170] sm:$0xff]
      %975 = vrot.lane.b32.xlu0 %v911, 12
      %v976 = vpop.permute.xlu0 %975
      %977 = vrot.lane.b32.xlu0 %v912, 12
      %v978 = vpop.permute.xlu0 %977
      %979 = vrot.lane.b32.xlu0 %v913, 12
      %v980 = vpop.permute.xlu0 %979
      %981 = vrot.lane.b32.xlu0 %v914, 12
      %v982 = vpop.permute.xlu0 %981
      %983 = vrot.lane.b32.xlu0 %v915, 12
      %v984 = vpop.permute.xlu0 %983
      %985 = vrot.lane.b32.xlu0 %v916, 12
      %v986 = vpop.permute.xlu0 %985
      %987 = vrot.lane.b32.xlu0 %v917, 12
      %v988 = vpop.permute.xlu0 %987
      %989 = vrot.lane.b32.xlu0 %v918, 12
      %v990 = vpop.permute.xlu0 %989
      %991 = vrot.lane.b32.xlu0 %v919, 12
      %v992 = vpop.permute.xlu0 %991
      %993 = vrot.lane.b32.xlu0 %v920, 12
      %v994 = vpop.permute.xlu0 %993
      %995 = vrot.lane.b32.xlu0 %v921, 12
      %v996 = vpop.permute.xlu0 %995
      %997 = vrot.lane.b32.xlu0 %v922, 12
      %v998 = vpop.permute.xlu0 %997
      %999 = vrot.lane.b32.xlu0 %v923, 12
      %v1000 = vpop.permute.xlu0 %999
      %1001 = vrot.lane.b32.xlu0 %v924, 12
      %v1002 = vpop.permute.xlu0 %1001
      %1003 = vrot.lane.b32.xlu0 %v925, 12
      %v1004 = vpop.permute.xlu0 %1003
      %1005 = vrot.lane.b32.xlu0 %v926, 12
      %v1006 = vpop.permute.xlu0 %1005
      %1007 = vrot.lane.b32.xlu0 %v927, 12
      %v1008 = vpop.permute.xlu0 %1007
      %1009 = vrot.lane.b32.xlu0 %v928, 12
      %v1010 = vpop.permute.xlu0 %1009
      %1011 = vrot.lane.b32.xlu0 %v929, 12
      %v1012 = vpop.permute.xlu0 %1011
      %1013 = vrot.lane.b32.xlu0 %v930, 12
      %v1014 = vpop.permute.xlu0 %1013
      %1015 = vrot.lane.b32.xlu0 %v931, 12
      %v1016 = vpop.permute.xlu0 %1015
      %1017 = vrot.lane.b32.xlu0 %v932, 12
      %v1018 = vpop.permute.xlu0 %1017
      %1019 = vrot.lane.b32.xlu0 %v933, 12
      %v1020 = vpop.permute.xlu0 %1019
      %1021 = vrot.lane.b32.xlu0 %v934, 12
      %v1022 = vpop.permute.xlu0 %1021
      %1023 = vrot.lane.b32.xlu0 %v935, 12
      %v1024 = vpop.permute.xlu0 %1023
      %1025 = vrot.lane.b32.xlu0 %v936, 12
      %v1026 = vpop.permute.xlu0 %1025
      %1027 = vrot.lane.b32.xlu0 %v937, 12
      %v1028 = vpop.permute.xlu0 %1027
      %1029 = vrot.lane.b32.xlu0 %v938, 12
      %v1030 = vpop.permute.xlu0 %1029
      %1031 = vrot.lane.b32.xlu0 %v939, 12
      %v1032 = vpop.permute.xlu0 %1031
      %1033 = vrot.lane.b32.xlu0 %v940, 12
      %v1034 = vpop.permute.xlu0 %1033
      %1035 = vrot.lane.b32.xlu0 %v941, 12
      %v1036 = vpop.permute.xlu0 %1035
      %1037 = vrot.lane.b32.xlu0 %v942, 12
      %v1038 = vpop.permute.xlu0 %1037
      %vm1071 = vcmask 130144
      %1072 = vst.msk [vmem:[#allocation3] sm:$0xff] %vm1071, %v976
      %1073 = vst.msk [vmem:[#allocation3 + $0x8] sm:$0xff] %vm1071, %v978
      %1074 = vst.msk [vmem:[#allocation3 + $0x10] sm:$0xff] %vm1071, %v980
      %1075 = vst.msk [vmem:[#allocation3 + $0x18] sm:$0xff] %vm1071, %v982
      %1076 = vst.msk [vmem:[#allocation3 + $0x20] sm:$0xff] %vm1071, %v984
      %1077 = vst.msk [vmem:[#allocation3 + $0x28] sm:$0xff] %vm1071, %v986
      %1078 = vst.msk [vmem:[#allocation3 + $0x30] sm:$0xff] %vm1071, %v988
      %1079 = vst.msk [vmem:[#allocation3 + $0x38] sm:$0xff] %vm1071, %v990
      %1080 = vst.msk [vmem:[#allocation3 + $0x40] sm:$0xff] %vm1071, %v992
      %1081 = vst.msk [vmem:[#allocation3 + $0x48] sm:$0xff] %vm1071, %v994
      %1082 = vst.msk [vmem:[#allocation3 + $0x50] sm:$0xff] %vm1071, %v996
      %1083 = vst.msk [vmem:[#allocation3 + $0x58] sm:$0xff] %vm1071, %v998
      %1084 = vst.msk [vmem:[#allocation3 + $0x60] sm:$0xff] %vm1071, %v1000
      %1085 = vst.msk [vmem:[#allocation3 + $0x68] sm:$0xff] %vm1071, %v1002
      %1086 = vst.msk [vmem:[#allocation3 + $0x70] sm:$0xff] %vm1071, %v1004
      %1087 = vst.msk [vmem:[#allocation3 + $0x78] sm:$0xff] %vm1071, %v1006
      %1088 = vst.msk [vmem:[#allocation3 + $0x80] sm:$0xff] %vm1071, %v1008
      %1089 = vst.msk [vmem:[#allocation3 + $0x88] sm:$0xff] %vm1071, %v1010
      %1090 = vst.msk [vmem:[#allocation3 + $0x90] sm:$0xff] %vm1071, %v1012
      %1091 = vst.msk [vmem:[#allocation3 + $0x98] sm:$0xff] %vm1071, %v1014
      %1092 = vst.msk [vmem:[#allocation3 + $0xa0] sm:$0xff] %vm1071, %v1016
      %1093 = vst.msk [vmem:[#allocation3 + $0xa8] sm:$0xff] %vm1071, %v1018
      %1094 = vst.msk [vmem:[#allocation3 + $0xb0] sm:$0xff] %vm1071, %v1020
      %1095 = vst.msk [vmem:[#allocation3 + $0xb8] sm:$0xff] %vm1071, %v1022
      %1096 = vst.msk [vmem:[#allocation3 + $0xc0] sm:$0xff] %vm1071, %v1024
      %1097 = vst.msk [vmem:[#allocation3 + $0xc8] sm:$0xff] %vm1071, %v1026
      %1098 = vst.msk [vmem:[#allocation3 + $0xd0] sm:$0xff] %vm1071, %v1028
      %1099 = vst.msk [vmem:[#allocation3 + $0xd8] sm:$0xff] %vm1071, %v1030
      %1100 = vst.msk [vmem:[#allocation3 + $0xe0] sm:$0xff] %vm1071, %v1032
      %1101 = vst.msk [vmem:[#allocation3 + $0xe8] sm:$0xff] %vm1071, %v1034
      %1102 = vst.msk [vmem:[#allocation3 + $0xf0] sm:$0xff] %vm1071, %v1036
      %1103 = vst.msk [vmem:[#allocation3 + $0xf8] sm:$0xff] %vm1071, %v1038
      %v1104 = vld [vmem:[%s367 + $0x1] sm:$0xff]
      %v1105 = vld [vmem:[%s367 + $0x9] sm:$0xff]
      %v1106 = vld [vmem:[%s367 + $0x19] sm:$0xff]
      %v1107 = vld [vmem:[%s367 + $0x21] sm:$0xff]
      %v1108 = vld [vmem:[%s367 + $0x31] sm:$0xff]
      %v1109 = vld [vmem:[%s367 + $0x39] sm:$0xff]
      %v1110 = vld [vmem:[%s367 + $0x49] sm:$0xff]
      %v1111 = vld [vmem:[%s367 + $0x51] sm:$0xff]
      %v1112 = vld [vmem:[%s367 + $0x61] sm:$0xff]
      %v1113 = vld [vmem:[%s367 + $0x69] sm:$0xff]
      %v1114 = vld [vmem:[%s367 + $0x79] sm:$0xff]
      %v1115 = vld [vmem:[%s367 + $0x81] sm:$0xff]
      %v1116 = vld [vmem:[%s367 + $0x91] sm:$0xff]
      %v1117 = vld [vmem:[%s367 + $0x99] sm:$0xff]
      %v1118 = vld [vmem:[%s367 + $0xa9] sm:$0xff]
      %v1119 = vld [vmem:[%s367 + $0xb1] sm:$0xff]
      %v1120 = vld [vmem:[%s367 + $0xc1] sm:$0xff]
      %v1121 = vld [vmem:[%s367 + $0xc9] sm:$0xff]
      %v1122 = vld [vmem:[%s367 + $0xd9] sm:$0xff]
      %v1123 = vld [vmem:[%s367 + $0xe1] sm:$0xff]
      %v1124 = vld [vmem:[%s367 + $0xf1] sm:$0xff]
      %v1125 = vld [vmem:[%s367 + $0xf9] sm:$0xff]
      %v1126 = vld [vmem:[%s367 + $0x109] sm:$0xff]
      %v1127 = vld [vmem:[%s367 + $0x111] sm:$0xff]
      %v1128 = vld [vmem:[%s367 + $0x121] sm:$0xff]
      %v1129 = vld [vmem:[%s367 + $0x129] sm:$0xff]
      %v1130 = vld [vmem:[%s367 + $0x139] sm:$0xff]
      %v1131 = vld [vmem:[%s367 + $0x141] sm:$0xff]
      %v1132 = vld [vmem:[%s367 + $0x151] sm:$0xff]
      %v1133 = vld [vmem:[%s367 + $0x159] sm:$0xff]
      %v1134 = vld [vmem:[%s367 + $0x169] sm:$0xff]
      %v1135 = vld [vmem:[%s367 + $0x171] sm:$0xff]
      %1168 = vrot.lane.b32.xlu0 %v1104, 16
      %v1169 = vpop.permute.xlu0 %1168
      %1170 = vrot.lane.b32.xlu0 %v1105, 16
      %v1171 = vpop.permute.xlu0 %1170
      %1172 = vrot.lane.b32.xlu0 %v1106, 16
      %v1173 = vpop.permute.xlu0 %1172
      %1174 = vrot.lane.b32.xlu0 %v1107, 16
      %v1175 = vpop.permute.xlu0 %1174
      %1176 = vrot.lane.b32.xlu0 %v1108, 16
      %v1177 = vpop.permute.xlu0 %1176
      %1178 = vrot.lane.b32.xlu0 %v1109, 16
      %v1179 = vpop.permute.xlu0 %1178
      %1180 = vrot.lane.b32.xlu0 %v1110, 16
      %v1181 = vpop.permute.xlu0 %1180
      %1182 = vrot.lane.b32.xlu0 %v1111, 16
      %v1183 = vpop.permute.xlu0 %1182
      %1184 = vrot.lane.b32.xlu0 %v1112, 16
      %v1185 = vpop.permute.xlu0 %1184
      %1186 = vrot.lane.b32.xlu0 %v1113, 16
      %v1187 = vpop.permute.xlu0 %1186
      %1188 = vrot.lane.b32.xlu0 %v1114, 16
      %v1189 = vpop.permute.xlu0 %1188
      %1190 = vrot.lane.b32.xlu0 %v1115, 16
      %v1191 = vpop.permute.xlu0 %1190
      %1192 = vrot.lane.b32.xlu0 %v1116, 16
      %v1193 = vpop.permute.xlu0 %1192
      %1194 = vrot.lane.b32.xlu0 %v1117, 16
      %v1195 = vpop.permute.xlu0 %1194
      %1196 = vrot.lane.b32.xlu0 %v1118, 16
      %v1197 = vpop.permute.xlu0 %1196
      %1198 = vrot.lane.b32.xlu0 %v1119, 16
      %v1199 = vpop.permute.xlu0 %1198
      %1200 = vrot.lane.b32.xlu0 %v1120, 16
      %v1201 = vpop.permute.xlu0 %1200
      %1202 = vrot.lane.b32.xlu0 %v1121, 16
      %v1203 = vpop.permute.xlu0 %1202
      %1204 = vrot.lane.b32.xlu0 %v1122, 16
      %v1205 = vpop.permute.xlu0 %1204
      %1206 = vrot.lane.b32.xlu0 %v1123, 16
      %v1207 = vpop.permute.xlu0 %1206
      %1208 = vrot.lane.b32.xlu0 %v1124, 16
      %v1209 = vpop.permute.xlu0 %1208
      %1210 = vrot.lane.b32.xlu0 %v1125, 16
      %v1211 = vpop.permute.xlu0 %1210
      %1212 = vrot.lane.b32.xlu0 %v1126, 16
      %v1213 = vpop.permute.xlu0 %1212
      %1214 = vrot.lane.b32.xlu0 %v1127, 16
      %v1215 = vpop.permute.xlu0 %1214
      %1216 = vrot.lane.b32.xlu0 %v1128, 16
      %v1217 = vpop.permute.xlu0 %1216
      %1218 = vrot.lane.b32.xlu0 %v1129, 16
      %v1219 = vpop.permute.xlu0 %1218
      %1220 = vrot.lane.b32.xlu0 %v1130, 16
      %v1221 = vpop.permute.xlu0 %1220
      %1222 = vrot.lane.b32.xlu0 %v1131, 16
      %v1223 = vpop.permute.xlu0 %1222
      %1224 = vrot.lane.b32.xlu0 %v1132, 16
      %v1225 = vpop.permute.xlu0 %1224
      %1226 = vrot.lane.b32.xlu0 %v1133, 16
      %v1227 = vpop.permute.xlu0 %1226
      %1228 = vrot.lane.b32.xlu0 %v1134, 16
      %v1229 = vpop.permute.xlu0 %1228
      %1230 = vrot.lane.b32.xlu0 %v1135, 16
      %v1231 = vpop.permute.xlu0 %1230
      %vm1264 = vcmask 162944
      %1265 = vst.msk [vmem:[#allocation3] sm:$0xff] %vm1264, %v1169
      %1266 = vst.msk [vmem:[#allocation3 + $0x8] sm:$0xff] %vm1264, %v1171
      %1267 = vst.msk [vmem:[#allocation3 + $0x10] sm:$0xff] %vm1264, %v1173
      %1268 = vst.msk [vmem:[#allocation3 + $0x18] sm:$0xff] %vm1264, %v1175
      %1269 = vst.msk [vmem:[#allocation3 + $0x20] sm:$0xff] %vm1264, %v1177
      %1270 = vst.msk [vmem:[#allocation3 + $0x28] sm:$0xff] %vm1264, %v1179
      %1271 = vst.msk [vmem:[#allocation3 + $0x30] sm:$0xff] %vm1264, %v1181
      %1272 = vst.msk [vmem:[#allocation3 + $0x38] sm:$0xff] %vm1264, %v1183
      %1273 = vst.msk [vmem:[#allocation3 + $0x40] sm:$0xff] %vm1264, %v1185
      %1274 = vst.msk [vmem:[#allocation3 + $0x48] sm:$0xff] %vm1264, %v1187
      %1275 = vst.msk [vmem:[#allocation3 + $0x50] sm:$0xff] %vm1264, %v1189
      %1276 = vst.msk [vmem:[#allocation3 + $0x58] sm:$0xff] %vm1264, %v1191
      %1277 = vst.msk [vmem:[#allocation3 + $0x60] sm:$0xff] %vm1264, %v1193
      %1278 = vst.msk [vmem:[#allocation3 + $0x68] sm:$0xff] %vm1264, %v1195
      %1279 = vst.msk [vmem:[#allocation3 + $0x70] sm:$0xff] %vm1264, %v1197
      %1280 = vst.msk [vmem:[#allocation3 + $0x78] sm:$0xff] %vm1264, %v1199
      %1281 = vst.msk [vmem:[#allocation3 + $0x80] sm:$0xff] %vm1264, %v1201
      %1282 = vst.msk [vmem:[#allocation3 + $0x88] sm:$0xff] %vm1264, %v1203
      %1283 = vst.msk [vmem:[#allocation3 + $0x90] sm:$0xff] %vm1264, %v1205
      %1284 = vst.msk [vmem:[#allocation3 + $0x98] sm:$0xff] %vm1264, %v1207
      %1285 = vst.msk [vmem:[#allocation3 + $0xa0] sm:$0xff] %vm1264, %v1209
      %1286 = vst.msk [vmem:[#allocation3 + $0xa8] sm:$0xff] %vm1264, %v1211
      %1287 = vst.msk [vmem:[#allocation3 + $0xb0] sm:$0xff] %vm1264, %v1213
      %1288 = vst.msk [vmem:[#allocation3 + $0xb8] sm:$0xff] %vm1264, %v1215
      %1289 = vst.msk [vmem:[#allocation3 + $0xc0] sm:$0xff] %vm1264, %v1217
      %1290 = vst.msk [vmem:[#allocation3 + $0xc8] sm:$0xff] %vm1264, %v1219
      %1291 = vst.msk [vmem:[#allocation3 + $0xd0] sm:$0xff] %vm1264, %v1221
      %1292 = vst.msk [vmem:[#allocation3 + $0xd8] sm:$0xff] %vm1264, %v1223
      %1293 = vst.msk [vmem:[#allocation3 + $0xe0] sm:$0xff] %vm1264, %v1225
      %1294 = vst.msk [vmem:[#allocation3 + $0xe8] sm:$0xff] %vm1264, %v1227
      %1295 = vst.msk [vmem:[#allocation3 + $0xf0] sm:$0xff] %vm1264, %v1229
      %1296 = vst.msk [vmem:[#allocation3 + $0xf8] sm:$0xff] %vm1264, %v1231
      %v1297 = vld [vmem:[%s367 + $0x2] sm:$0xff]
      %v1298 = vld [vmem:[%s367 + $0xa] sm:$0xff]
      %v1299 = vld [vmem:[%s367 + $0x1a] sm:$0xff]
      %v1300 = vld [vmem:[%s367 + $0x22] sm:$0xff]
      %v1301 = vld [vmem:[%s367 + $0x32] sm:$0xff]
      %v1302 = vld [vmem:[%s367 + $0x3a] sm:$0xff]
      %v1303 = vld [vmem:[%s367 + $0x4a] sm:$0xff]
      %v1304 = vld [vmem:[%s367 + $0x52] sm:$0xff]
      %v1305 = vld [vmem:[%s367 + $0x62] sm:$0xff]
      %v1306 = vld [vmem:[%s367 + $0x6a] sm:$0xff]
      %v1307 = vld [vmem:[%s367 + $0x7a] sm:$0xff]
      %v1308 = vld [vmem:[%s367 + $0x82] sm:$0xff]
      %v1309 = vld [vmem:[%s367 + $0x92] sm:$0xff]
      %v1310 = vld [vmem:[%s367 + $0x9a] sm:$0xff]
      %v1311 = vld [vmem:[%s367 + $0xaa] sm:$0xff]
      %v1312 = vld [vmem:[%s367 + $0xb2] sm:$0xff]
      %v1313 = vld [vmem:[%s367 + $0xc2] sm:$0xff]
      %v1314 = vld [vmem:[%s367 + $0xca] sm:$0xff]
      %v1315 = vld [vmem:[%s367 + $0xda] sm:$0xff]
      %v1316 = vld [vmem:[%s367 + $0xe2] sm:$0xff]
      %v1317 = vld [vmem:[%s367 + $0xf2] sm:$0xff]
      %v1318 = vld [vmem:[%s367 + $0xfa] sm:$0xff]
      %v1319 = vld [vmem:[%s367 + $0x10a] sm:$0xff]
      %v1320 = vld [vmem:[%s367 + $0x112] sm:$0xff]
      %v1321 = vld [vmem:[%s367 + $0x122] sm:$0xff]
      %v1322 = vld [vmem:[%s367 + $0x12a] sm:$0xff]
      %v1323 = vld [vmem:[%s367 + $0x13a] sm:$0xff]
      %v1324 = vld [vmem:[%s367 + $0x142] sm:$0xff]
      %v1325 = vld [vmem:[%s367 + $0x152] sm:$0xff]
      %v1326 = vld [vmem:[%s367 + $0x15a] sm:$0xff]
      %v1327 = vld [vmem:[%s367 + $0x16a] sm:$0xff]
      %v1328 = vld [vmem:[%s367 + $0x172] sm:$0xff]
      %1361 = vrot.lane.b32.xlu0 %v1297, 20
      %v1362 = vpop.permute.xlu0 %1361
      %1363 = vrot.lane.b32.xlu0 %v1298, 20
      %v1364 = vpop.permute.xlu0 %1363
      %1365 = vrot.lane.b32.xlu0 %v1299, 20
      %v1366 = vpop.permute.xlu0 %1365
      %1367 = vrot.lane.b32.xlu0 %v1300, 20
      %v1368 = vpop.permute.xlu0 %1367
      %1369 = vrot.lane.b32.xlu0 %v1301, 20
      %v1370 = vpop.permute.xlu0 %1369
      %1371 = vrot.lane.b32.xlu0 %v1302, 20
      %v1372 = vpop.permute.xlu0 %1371
      %1373 = vrot.lane.b32.xlu0 %v1303, 20
      %v1374 = vpop.permute.xlu0 %1373
      %1375 = vrot.lane.b32.xlu0 %v1304, 20
      %v1376 = vpop.permute.xlu0 %1375
      %1377 = vrot.lane.b32.xlu0 %v1305, 20
      %v1378 = vpop.permute.xlu0 %1377
      %1379 = vrot.lane.b32.xlu0 %v1306, 20
      %v1380 = vpop.permute.xlu0 %1379
      %1381 = vrot.lane.b32.xlu0 %v1307, 20
      %v1382 = vpop.permute.xlu0 %1381
      %1383 = vrot.lane.b32.xlu0 %v1308, 20
      %v1384 = vpop.permute.xlu0 %1383
      %1385 = vrot.lane.b32.xlu0 %v1309, 20
      %v1386 = vpop.permute.xlu0 %1385
      %1387 = vrot.lane.b32.xlu0 %v1310, 20
      %v1388 = vpop.permute.xlu0 %1387
      %1389 = vrot.lane.b32.xlu0 %v1311, 20
      %v1390 = vpop.permute.xlu0 %1389
      %1391 = vrot.lane.b32.xlu0 %v1312, 20
      %v1392 = vpop.permute.xlu0 %1391
      %1393 = vrot.lane.b32.xlu0 %v1313, 20
      %v1394 = vpop.permute.xlu0 %1393
      %1395 = vrot.lane.b32.xlu0 %v1314, 20
      %v1396 = vpop.permute.xlu0 %1395
      %1397 = vrot.lane.b32.xlu0 %v1315, 20
      %v1398 = vpop.permute.xlu0 %1397
      %1399 = vrot.lane.b32.xlu0 %v1316, 20
      %v1400 = vpop.permute.xlu0 %1399
      %1401 = vrot.lane.b32.xlu0 %v1317, 20
      %v1402 = vpop.permute.xlu0 %1401
      %1403 = vrot.lane.b32.xlu0 %v1318, 20
      %v1404 = vpop.permute.xlu0 %1403
      %1405 = vrot.lane.b32.xlu0 %v1319, 20
      %v1406 = vpop.permute.xlu0 %1405
      %1407 = vrot.lane.b32.xlu0 %v1320, 20
      %v1408 = vpop.permute.xlu0 %1407
      %1409 = vrot.lane.b32.xlu0 %v1321, 20
      %v1410 = vpop.permute.xlu0 %1409
      %1411 = vrot.lane.b32.xlu0 %v1322, 20
      %v1412 = vpop.permute.xlu0 %1411
      %1413 = vrot.lane.b32.xlu0 %v1323, 20
      %v1414 = vpop.permute.xlu0 %1413
      %1415 = vrot.lane.b32.xlu0 %v1324, 20
      %v1416 = vpop.permute.xlu0 %1415
      %1417 = vrot.lane.b32.xlu0 %v1325, 20
      %v1418 = vpop.permute.xlu0 %1417
      %1419 = vrot.lane.b32.xlu0 %v1326, 20
      %v1420 = vpop.permute.xlu0 %1419
      %1421 = vrot.lane.b32.xlu0 %v1327, 20
      %v1422 = vpop.permute.xlu0 %1421
      %1423 = vrot.lane.b32.xlu0 %v1328, 20
      %v1424 = vpop.permute.xlu0 %1423
      %vm1457 = vcmask 195744
      %1458 = vst.msk [vmem:[#allocation3] sm:$0xff] %vm1457, %v1362
      %1459 = vst.msk [vmem:[#allocation3 + $0x8] sm:$0xff] %vm1457, %v1364
      %1460 = vst.msk [vmem:[#allocation3 + $0x10] sm:$0xff] %vm1457, %v1366
      %1461 = vst.msk [vmem:[#allocation3 + $0x18] sm:$0xff] %vm1457, %v1368
      %1462 = vst.msk [vmem:[#allocation3 + $0x20] sm:$0xff] %vm1457, %v1370
      %1463 = vst.msk [vmem:[#allocation3 + $0x28] sm:$0xff] %vm1457, %v1372
      %1464 = vst.msk [vmem:[#allocation3 + $0x30] sm:$0xff] %vm1457, %v1374
      %1465 = vst.msk [vmem:[#allocation3 + $0x38] sm:$0xff] %vm1457, %v1376
      %1466 = vst.msk [vmem:[#allocation3 + $0x40] sm:$0xff] %vm1457, %v1378
      %1467 = vst.msk [vmem:[#allocation3 + $0x48] sm:$0xff] %vm1457, %v1380
      %1468 = vst.msk [vmem:[#allocation3 + $0x50] sm:$0xff] %vm1457, %v1382
      %1469 = vst.msk [vmem:[#allocation3 + $0x58] sm:$0xff] %vm1457, %v1384
      %1470 = vst.msk [vmem:[#allocation3 + $0x60] sm:$0xff] %vm1457, %v1386
      %1471 = vst.msk [vmem:[#allocation3 + $0x68] sm:$0xff] %vm1457, %v1388
      %1472 = vst.msk [vmem:[#allocation3 + $0x70] sm:$0xff] %vm1457, %v1390
      %1473 = vst.msk [vmem:[#allocation3 + $0x78] sm:$0xff] %vm1457, %v1392
      %1474 = vst.msk [vmem:[#allocation3 + $0x80] sm:$0xff] %vm1457, %v1394
      %1475 = vst.msk [vmem:[#allocation3 + $0x88] sm:$0xff] %vm1457, %v1396
      %1476 = vst.msk [vmem:[#allocation3 + $0x90] sm:$0xff] %vm1457, %v1398
      %1477 = vst.msk [vmem:[#allocation3 + $0x98] sm:$0xff] %vm1457, %v1400
      %1478 = vst.msk [vmem:[#allocation3 + $0xa0] sm:$0xff] %vm1457, %v1402
      %1479 = vst.msk [vmem:[#allocation3 + $0xa8] sm:$0xff] %vm1457, %v1404
      %1480 = vst.msk [vmem:[#allocation3 + $0xb0] sm:$0xff] %vm1457, %v1406
      %1481 = vst.msk [vmem:[#allocation3 + $0xb8] sm:$0xff] %vm1457, %v1408
      %1482 = vst.msk [vmem:[#allocation3 + $0xc0] sm:$0xff] %vm1457, %v1410
      %1483 = vst.msk [vmem:[#allocation3 + $0xc8] sm:$0xff] %vm1457, %v1412
      %1484 = vst.msk [vmem:[#allocation3 + $0xd0] sm:$0xff] %vm1457, %v1414
      %1485 = vst.msk [vmem:[#allocation3 + $0xd8] sm:$0xff] %vm1457, %v1416
      %1486 = vst.msk [vmem:[#allocation3 + $0xe0] sm:$0xff] %vm1457, %v1418
      %1487 = vst.msk [vmem:[#allocation3 + $0xe8] sm:$0xff] %vm1457, %v1420
      %1488 = vst.msk [vmem:[#allocation3 + $0xf0] sm:$0xff] %vm1457, %v1422
      %1489 = vst.msk [vmem:[#allocation3 + $0xf8] sm:$0xff] %vm1457, %v1424
      %s1490 = scalar_lea.vmem [#allocation2], 48
      %v1491 = vld [vmem:[%s1490] sm:$0xff]
      %v1492 = vld [vmem:[%s1490 + $0x8] sm:$0xff]
      %v1493 = vld [vmem:[%s1490 + $0x18] sm:$0xff]
      %v1494 = vld [vmem:[%s1490 + $0x20] sm:$0xff]
      %v1495 = vld [vmem:[%s1490 + $0x30] sm:$0xff]
      %v1496 = vld [vmem:[%s1490 + $0x38] sm:$0xff]
      %v1497 = vld [vmem:[%s1490 + $0x48] sm:$0xff]
      %v1498 = vld [vmem:[%s1490 + $0x50] sm:$0xff]
      %v1499 = vld [vmem:[%s1490 + $0x60] sm:$0xff]
      %v1500 = vld [vmem:[%s1490 + $0x68] sm:$0xff]
      %v1501 = vld [vmem:[%s1490 + $0x78] sm:$0xff]
      %v1502 = vld [vmem:[%s1490 + $0x80] sm:$0xff]
      %v1503 = vld [vmem:[%s1490 + $0x90] sm:$0xff]
      %v1504 = vld [vmem:[%s1490 + $0x98] sm:$0xff]
      %v1505 = vld [vmem:[%s1490 + $0xa8] sm:$0xff]
      %v1506 = vld [vmem:[%s1490 + $0xb0] sm:$0xff]
      %v1507 = vld [vmem:[%s1490 + $0xc0] sm:$0xff]
      %v1508 = vld [vmem:[%s1490 + $0xc8] sm:$0xff]
      %v1509 = vld [vmem:[%s1490 + $0xd8] sm:$0xff]
      %v1510 = vld [vmem:[%s1490 + $0xe0] sm:$0xff]
      %v1511 = vld [vmem:[%s1490 + $0xf0] sm:$0xff]
      %v1512 = vld [vmem:[%s1490 + $0xf8] sm:$0xff]
      %v1513 = vld [vmem:[%s1490 + $0x108] sm:$0xff]
      %v1514 = vld [vmem:[%s1490 + $0x110] sm:$0xff]
      %v1515 = vld [vmem:[%s1490 + $0x120] sm:$0xff]
      %v1516 = vld [vmem:[%s1490 + $0x128] sm:$0xff]
      %v1517 = vld [vmem:[%s1490 + $0x138] sm:$0xff]
      %v1518 = vld [vmem:[%s1490 + $0x140] sm:$0xff]
      %v1519 = vld [vmem:[%s1490 + $0x150] sm:$0xff]
      %v1520 = vld [vmem:[%s1490 + $0x158] sm:$0xff]
      %v1521 = vld [vmem:[%s1490 + $0x168] sm:$0xff]
      %v1522 = vld [vmem:[%s1490 + $0x170] sm:$0xff]
      %1555 = vrot.lane.b32.xlu0 %v1491, 24
      %v1556 = vpop.permute.xlu0 %1555
      %1557 = vrot.lane.b32.xlu0 %v1492, 24
      %v1558 = vpop.permute.xlu0 %1557
      %1559 = vrot.lane.b32.xlu0 %v1493, 24
      %v1560 = vpop.permute.xlu0 %1559
      %1561 = vrot.lane.b32.xlu0 %v1494, 24
      %v1562 = vpop.permute.xlu0 %1561
      %1563 = vrot.lane.b32.xlu0 %v1495, 24
      %v1564 = vpop.permute.xlu0 %1563
      %1565 = vrot.lane.b32.xlu0 %v1496, 24
      %v1566 = vpop.permute.xlu0 %1565
      %1567 = vrot.lane.b32.xlu0 %v1497, 24
      %v1568 = vpop.permute.xlu0 %1567
      %1569 = vrot.lane.b32.xlu0 %v1498, 24
      %v1570 = vpop.permute.xlu0 %1569
      %1571 = vrot.lane.b32.xlu0 %v1499, 24
      %v1572 = vpop.permute.xlu0 %1571
      %1573 = vrot.lane.b32.xlu0 %v1500, 24
      %v1574 = vpop.permute.xlu0 %1573
      %1575 = vrot.lane.b32.xlu0 %v1501, 24
      %v1576 = vpop.permute.xlu0 %1575
      %1577 = vrot.lane.b32.xlu0 %v1502, 24
      %v1578 = vpop.permute.xlu0 %1577
      %1579 = vrot.lane.b32.xlu0 %v1503, 24
      %v1580 = vpop.permute.xlu0 %1579
      %1581 = vrot.lane.b32.xlu0 %v1504, 24
      %v1582 = vpop.permute.xlu0 %1581
      %1583 = vrot.lane.b32.xlu0 %v1505, 24
      %v1584 = vpop.permute.xlu0 %1583
      %1585 = vrot.lane.b32.xlu0 %v1506, 24
      %v1586 = vpop.permute.xlu0 %1585
      %1587 = vrot.lane.b32.xlu0 %v1507, 24
      %v1588 = vpop.permute.xlu0 %1587
      %1589 = vrot.lane.b32.xlu0 %v1508, 24
      %v1590 = vpop.permute.xlu0 %1589
      %1591 = vrot.lane.b32.xlu0 %v1509, 24
      %v1592 = vpop.permute.xlu0 %1591
      %1593 = vrot.lane.b32.xlu0 %v1510, 24
      %v1594 = vpop.permute.xlu0 %1593
      %1595 = vrot.lane.b32.xlu0 %v1511, 24
      %v1596 = vpop.permute.xlu0 %1595
      %1597 = vrot.lane.b32.xlu0 %v1512, 24
      %v1598 = vpop.permute.xlu0 %1597
      %1599 = vrot.lane.b32.xlu0 %v1513, 24
      %v1600 = vpop.permute.xlu0 %1599
      %1601 = vrot.lane.b32.xlu0 %v1514, 24
      %v1602 = vpop.permute.xlu0 %1601
      %1603 = vrot.lane.b32.xlu0 %v1515, 24
      %v1604 = vpop.permute.xlu0 %1603
      %1605 = vrot.lane.b32.xlu0 %v1516, 24
      %v1606 = vpop.permute.xlu0 %1605
      %1607 = vrot.lane.b32.xlu0 %v1517, 24
      %v1608 = vpop.permute.xlu0 %1607
      %1609 = vrot.lane.b32.xlu0 %v1518, 24
      %v1610 = vpop.permute.xlu0 %1609
      %1611 = vrot.lane.b32.xlu0 %v1519, 24
      %v1612 = vpop.permute.xlu0 %1611
      %1613 = vrot.lane.b32.xlu0 %v1520, 24
      %v1614 = vpop.permute.xlu0 %1613
      %1615 = vrot.lane.b32.xlu0 %v1521, 24
      %v1616 = vpop.permute.xlu0 %1615
      %1617 = vrot.lane.b32.xlu0 %v1522, 24
      %v1618 = vpop.permute.xlu0 %1617
      %vm1651 = vcmask 228544
      %1652 = vst.msk [vmem:[#allocation3] sm:$0xff] %vm1651, %v1556
      %1653 = vst.msk [vmem:[#allocation3 + $0x8] sm:$0xff] %vm1651, %v1558
      %1654 = vst.msk [vmem:[#allocation3 + $0x10] sm:$0xff] %vm1651, %v1560
      %1655 = vst.msk [vmem:[#allocation3 + $0x18] sm:$0xff] %vm1651, %v1562
      %1656 = vst.msk [vmem:[#allocation3 + $0x20] sm:$0xff] %vm1651, %v1564
      %1657 = vst.msk [vmem:[#allocation3 + $0x28] sm:$0xff] %vm1651, %v1566
      %1658 = vst.msk [vmem:[#allocation3 + $0x30] sm:$0xff] %vm1651, %v1568
      %1659 = vst.msk [vmem:[#allocation3 + $0x38] sm:$0xff] %vm1651, %v1570
      %1660 = vst.msk [vmem:[#allocation3 + $0x40] sm:$0xff] %vm1651, %v1572
      %1661 = vst.msk [vmem:[#allocation3 + $0x48] sm:$0xff] %vm1651, %v1574
      %1662 = vst.msk [vmem:[#allocation3 + $0x50] sm:$0xff] %vm1651, %v1576
      %1663 = vst.msk [vmem:[#allocation3 + $0x58] sm:$0xff] %vm1651, %v1578
      %1664 = vst.msk [vmem:[#allocation3 + $0x60] sm:$0xff] %vm1651, %v1580
      %1665 = vst.msk [vmem:[#allocation3 + $0x68] sm:$0xff] %vm1651, %v1582
      %1666 = vst.msk [vmem:[#allocation3 + $0x70] sm:$0xff] %vm1651, %v1584
      %1667 = vst.msk [vmem:[#allocation3 + $0x78] sm:$0xff] %vm1651, %v1586
      %1668 = vst.msk [vmem:[#allocation3 + $0x80] sm:$0xff] %vm1651, %v1588
      %1669 = vst.msk [vmem:[#allocation3 + $0x88] sm:$0xff] %vm1651, %v1590
      %1670 = vst.msk [vmem:[#allocation3 + $0x90] sm:$0xff] %vm1651, %v1592
      %1671 = vst.msk [vmem:[#allocation3 + $0x98] sm:$0xff] %vm1651, %v1594
      %1672 = vst.msk [vmem:[#allocation3 + $0xa0] sm:$0xff] %vm1651, %v1596
      %1673 = vst.msk [vmem:[#allocation3 + $0xa8] sm:$0xff] %vm1651, %v1598
      %1674 = vst.msk [vmem:[#allocation3 + $0xb0] sm:$0xff] %vm1651, %v1600
      %1675 = vst.msk [vmem:[#allocation3 + $0xb8] sm:$0xff] %vm1651, %v1602
      %1676 = vst.msk [vmem:[#allocation3 + $0xc0] sm:$0xff] %vm1651, %v1604
      %1677 = vst.msk [vmem:[#allocation3 + $0xc8] sm:$0xff] %vm1651, %v1606
      %1678 = vst.msk [vmem:[#allocation3 + $0xd0] sm:$0xff] %vm1651, %v1608
      %1679 = vst.msk [vmem:[#allocation3 + $0xd8] sm:$0xff] %vm1651, %v1610
      %1680 = vst.msk [vmem:[#allocation3 + $0xe0] sm:$0xff] %vm1651, %v1612
      %1681 = vst.msk [vmem:[#allocation3 + $0xe8] sm:$0xff] %vm1651, %v1614
      %1682 = vst.msk [vmem:[#allocation3 + $0xf0] sm:$0xff] %vm1651, %v1616
      %1683 = vst.msk [vmem:[#allocation3 + $0xf8] sm:$0xff] %vm1651, %v1618
      %v1684 = vld [vmem:[%s1490 + $0x1] sm:$0xff]
      %v1685 = vld [vmem:[%s1490 + $0x9] sm:$0xff]
      %v1686 = vld [vmem:[%s1490 + $0x19] sm:$0xff]
      %v1687 = vld [vmem:[%s1490 + $0x21] sm:$0xff]
      %v1688 = vld [vmem:[%s1490 + $0x31] sm:$0xff]
      %v1689 = vld [vmem:[%s1490 + $0x39] sm:$0xff]
      %v1690 = vld [vmem:[%s1490 + $0x49] sm:$0xff]
      %v1691 = vld [vmem:[%s1490 + $0x51] sm:$0xff]
      %v1692 = vld [vmem:[%s1490 + $0x61] sm:$0xff]
      %v1693 = vld [vmem:[%s1490 + $0x69] sm:$0xff]
      %v1694 = vld [vmem:[%s1490 + $0x79] sm:$0xff]
      %v1695 = vld [vmem:[%s1490 + $0x81] sm:$0xff]
      %v1696 = vld [vmem:[%s1490 + $0x91] sm:$0xff]
      %v1697 = vld [vmem:[%s1490 + $0x99] sm:$0xff]
      %v1698 = vld [vmem:[%s1490 + $0xa9] sm:$0xff]
      %v1699 = vld [vmem:[%s1490 + $0xb1] sm:$0xff]
      %v1700 = vld [vmem:[%s1490 + $0xc1] sm:$0xff]
      %v1701 = vld [vmem:[%s1490 + $0xc9] sm:$0xff]
      %v1702 = vld [vmem:[%s1490 + $0xd9] sm:$0xff]
      %v1703 = vld [vmem:[%s1490 + $0xe1] sm:$0xff]
      %v1704 = vld [vmem:[%s1490 + $0xf1] sm:$0xff]
      %v1705 = vld [vmem:[%s1490 + $0xf9] sm:$0xff]
      %v1706 = vld [vmem:[%s1490 + $0x109] sm:$0xff]
      %v1707 = vld [vmem:[%s1490 + $0x111] sm:$0xff]
      %v1708 = vld [vmem:[%s1490 + $0x121] sm:$0xff]
      %v1709 = vld [vmem:[%s1490 + $0x129] sm:$0xff]
      %v1710 = vld [vmem:[%s1490 + $0x139] sm:$0xff]
      %v1711 = vld [vmem:[%s1490 + $0x141] sm:$0xff]
      %v1712 = vld [vmem:[%s1490 + $0x151] sm:$0xff]
      %v1713 = vld [vmem:[%s1490 + $0x159] sm:$0xff]
      %v1714 = vld [vmem:[%s1490 + $0x169] sm:$0xff]
      %v1715 = vld [vmem:[%s1490 + $0x171] sm:$0xff]
      %1748 = vrot.lane.b32.xlu0 %v1684, 28
      %v1749 = vpop.permute.xlu0 %1748
      %1750 = vrot.lane.b32.xlu0 %v1685, 28
      %v1751 = vpop.permute.xlu0 %1750
      %1752 = vrot.lane.b32.xlu0 %v1686, 28
      %v1753 = vpop.permute.xlu0 %1752
      %1754 = vrot.lane.b32.xlu0 %v1687, 28
      %v1755 = vpop.permute.xlu0 %1754
      %1756 = vrot.lane.b32.xlu0 %v1688, 28
      %v1757 = vpop.permute.xlu0 %1756
      %1758 = vrot.lane.b32.xlu0 %v1689, 28
      %v1759 = vpop.permute.xlu0 %1758
      %1760 = vrot.lane.b32.xlu0 %v1690, 28
      %v1761 = vpop.permute.xlu0 %1760
      %1762 = vrot.lane.b32.xlu0 %v1691, 28
      %v1763 = vpop.permute.xlu0 %1762
      %1764 = vrot.lane.b32.xlu0 %v1692, 28
      %v1765 = vpop.permute.xlu0 %1764
      %1766 = vrot.lane.b32.xlu0 %v1693, 28
      %v1767 = vpop.permute.xlu0 %1766
      %1768 = vrot.lane.b32.xlu0 %v1694, 28
      %v1769 = vpop.permute.xlu0 %1768
      %1770 = vrot.lane.b32.xlu0 %v1695, 28
      %v1771 = vpop.permute.xlu0 %1770
      %1772 = vrot.lane.b32.xlu0 %v1696, 28
      %v1773 = vpop.permute.xlu0 %1772
      %1774 = vrot.lane.b32.xlu0 %v1697, 28
      %v1775 = vpop.permute.xlu0 %1774
      %1776 = vrot.lane.b32.xlu0 %v1698, 28
      %v1777 = vpop.permute.xlu0 %1776
      %1778 = vrot.lane.b32.xlu0 %v1699, 28
      %v1779 = vpop.permute.xlu0 %1778
      %1780 = vrot.lane.b32.xlu0 %v1700, 28
      %v1781 = vpop.permute.xlu0 %1780
      %1782 = vrot.lane.b32.xlu0 %v1701, 28
      %v1783 = vpop.permute.xlu0 %1782
      %1784 = vrot.lane.b32.xlu0 %v1702, 28
      %v1785 = vpop.permute.xlu0 %1784
      %1786 = vrot.lane.b32.xlu0 %v1703, 28
      %v1787 = vpop.permute.xlu0 %1786
      %1788 = vrot.lane.b32.xlu0 %v1704, 28
      %v1789 = vpop.permute.xlu0 %1788
      %1790 = vrot.lane.b32.xlu0 %v1705, 28
      %v1791 = vpop.permute.xlu0 %1790
      %1792 = vrot.lane.b32.xlu0 %v1706, 28
      %v1793 = vpop.permute.xlu0 %1792
      %1794 = vrot.lane.b32.xlu0 %v1707, 28
      %v1795 = vpop.permute.xlu0 %1794
      %1796 = vrot.lane.b32.xlu0 %v1708, 28
      %v1797 = vpop.permute.xlu0 %1796
      %1798 = vrot.lane.b32.xlu0 %v1709, 28
      %v1799 = vpop.permute.xlu0 %1798
      %1800 = vrot.lane.b32.xlu0 %v1710, 28
      %v1801 = vpop.permute.xlu0 %1800
      %1802 = vrot.lane.b32.xlu0 %v1711, 28
      %v1803 = vpop.permute.xlu0 %1802
      %1804 = vrot.lane.b32.xlu0 %v1712, 28
      %v1805 = vpop.permute.xlu0 %1804
      %1806 = vrot.lane.b32.xlu0 %v1713, 28
      %v1807 = vpop.permute.xlu0 %1806
      %1808 = vrot.lane.b32.xlu0 %v1714, 28
      %v1809 = vpop.permute.xlu0 %1808
      %1810 = vrot.lane.b32.xlu0 %v1715, 28
      %v1811 = vpop.permute.xlu0 %1810
      %vm1844 = vcmask 261344
      %1845 = vst.msk [vmem:[#allocation3] sm:$0xff] %vm1844, %v1749
      %1846 = vst.msk [vmem:[#allocation3 + $0x8] sm:$0xff] %vm1844, %v1751
      %1847 = vst.msk [vmem:[#allocation3 + $0x10] sm:$0xff] %vm1844, %v1753
      %1848 = vst.msk [vmem:[#allocation3 + $0x18] sm:$0xff] %vm1844, %v1755
      %1849 = vst.msk [vmem:[#allocation3 + $0x20] sm:$0xff] %vm1844, %v1757
      %1850 = vst.msk [vmem:[#allocation3 + $0x28] sm:$0xff] %vm1844, %v1759
      %1851 = vst.msk [vmem:[#allocation3 + $0x30] sm:$0xff] %vm1844, %v1761
      %1852 = vst.msk [vmem:[#allocation3 + $0x38] sm:$0xff] %vm1844, %v1763
      %1853 = vst.msk [vmem:[#allocation3 + $0x40] sm:$0xff] %vm1844, %v1765
      %1854 = vst.msk [vmem:[#allocation3 + $0x48] sm:$0xff] %vm1844, %v1767
      %1855 = vst.msk [vmem:[#allocation3 + $0x50] sm:$0xff] %vm1844, %v1769
      %1856 = vst.msk [vmem:[#allocation3 + $0x58] sm:$0xff] %vm1844, %v1771
      %1857 = vst.msk [vmem:[#allocation3 + $0x60] sm:$0xff] %vm1844, %v1773
      %1858 = vst.msk [vmem:[#allocation3 + $0x68] sm:$0xff] %vm1844, %v1775
      %1859 = vst.msk [vmem:[#allocation3 + $0x70] sm:$0xff] %vm1844, %v1777
      %1860 = vst.msk [vmem:[#allocation3 + $0x78] sm:$0xff] %vm1844, %v1779
      %1861 = vst.msk [vmem:[#allocation3 + $0x80] sm:$0xff] %vm1844, %v1781
      %1862 = vst.msk [vmem:[#allocation3 + $0x88] sm:$0xff] %vm1844, %v1783
      %1863 = vst.msk [vmem:[#allocation3 + $0x90] sm:$0xff] %vm1844, %v1785
      %1864 = vst.msk [vmem:[#allocation3 + $0x98] sm:$0xff] %vm1844, %v1787
      %1865 = vst.msk [vmem:[#allocation3 + $0xa0] sm:$0xff] %vm1844, %v1789
      %1866 = vst.msk [vmem:[#allocation3 + $0xa8] sm:$0xff] %vm1844, %v1791
      %1867 = vst.msk [vmem:[#allocation3 + $0xb0] sm:$0xff] %vm1844, %v1793
      %1868 = vst.msk [vmem:[#allocation3 + $0xb8] sm:$0xff] %vm1844, %v1795
      %1869 = vst.msk [vmem:[#allocation3 + $0xc0] sm:$0xff] %vm1844, %v1797
      %1870 = vst.msk [vmem:[#allocation3 + $0xc8] sm:$0xff] %vm1844, %v1799
      %1871 = vst.msk [vmem:[#allocation3 + $0xd0] sm:$0xff] %vm1844, %v1801
      %1872 = vst.msk [vmem:[#allocation3 + $0xd8] sm:$0xff] %vm1844, %v1803
      %1873 = vst.msk [vmem:[#allocation3 + $0xe0] sm:$0xff] %vm1844, %v1805
      %1874 = vst.msk [vmem:[#allocation3 + $0xe8] sm:$0xff] %vm1844, %v1807
      %1875 = vst.msk [vmem:[#allocation3 + $0xf0] sm:$0xff] %vm1844, %v1809
      %1876 = vst.msk [vmem:[#allocation3 + $0xf8] sm:$0xff] %vm1844, %v1811
      %v1877 = vld [vmem:[%s1490 + $0x2] sm:$0xff]
      %v1878 = vld [vmem:[%s1490 + $0xa] sm:$0xff]
      %v1879 = vld [vmem:[%s1490 + $0x1a] sm:$0xff]
      %v1880 = vld [vmem:[%s1490 + $0x22] sm:$0xff]
      %v1881 = vld [vmem:[%s1490 + $0x32] sm:$0xff]
      %v1882 = vld [vmem:[%s1490 + $0x3a] sm:$0xff]
      %v1883 = vld [vmem:[%s1490 + $0x4a] sm:$0xff]
      %v1884 = vld [vmem:[%s1490 + $0x52] sm:$0xff]
      %v1885 = vld [vmem:[%s1490 + $0x62] sm:$0xff]
      %v1886 = vld [vmem:[%s1490 + $0x6a] sm:$0xff]
      %v1887 = vld [vmem:[%s1490 + $0x7a] sm:$0xff]
      %v1888 = vld [vmem:[%s1490 + $0x82] sm:$0xff]
      %v1889 = vld [vmem:[%s1490 + $0x92] sm:$0xff]
      %v1890 = vld [vmem:[%s1490 + $0x9a] sm:$0xff]
      %v1891 = vld [vmem:[%s1490 + $0xaa] sm:$0xff]
      %v1892 = vld [vmem:[%s1490 + $0xb2] sm:$0xff]
      %v1893 = vld [vmem:[%s1490 + $0xc2] sm:$0xff]
      %v1894 = vld [vmem:[%s1490 + $0xca] sm:$0xff]
      %v1895 = vld [vmem:[%s1490 + $0xda] sm:$0xff]
      %v1896 = vld [vmem:[%s1490 + $0xe2] sm:$0xff]
      %v1897 = vld [vmem:[%s1490 + $0xf2] sm:$0xff]
      %v1898 = vld [vmem:[%s1490 + $0xfa] sm:$0xff]
      %v1899 = vld [vmem:[%s1490 + $0x10a] sm:$0xff]
      %v1900 = vld [vmem:[%s1490 + $0x112] sm:$0xff]
      %v1901 = vld [vmem:[%s1490 + $0x122] sm:$0xff]
      %v1902 = vld [vmem:[%s1490 + $0x12a] sm:$0xff]
      %v1903 = vld [vmem:[%s1490 + $0x13a] sm:$0xff]
      %v1904 = vld [vmem:[%s1490 + $0x142] sm:$0xff]
      %v1905 = vld [vmem:[%s1490 + $0x152] sm:$0xff]
      %v1906 = vld [vmem:[%s1490 + $0x15a] sm:$0xff]
      %v1907 = vld [vmem:[%s1490 + $0x16a] sm:$0xff]
      %v1908 = vld [vmem:[%s1490 + $0x172] sm:$0xff]
      %1941 = vrot.lane.b32.xlu0 %v1877, 32
      %v1942 = vpop.permute.xlu0 %1941
      %1943 = vrot.lane.b32.xlu0 %v1878, 32
      %v1944 = vpop.permute.xlu0 %1943
      %1945 = vrot.lane.b32.xlu0 %v1879, 32
      %v1946 = vpop.permute.xlu0 %1945
      %1947 = vrot.lane.b32.xlu0 %v1880, 32
      %v1948 = vpop.permute.xlu0 %1947
      %1949 = vrot.lane.b32.xlu0 %v1881, 32
      %v1950 = vpop.permute.xlu0 %1949
      %1951 = vrot.lane.b32.xlu0 %v1882, 32
      %v1952 = vpop.permute.xlu0 %1951
      %1953 = vrot.lane.b32.xlu0 %v1883, 32
      %v1954 = vpop.permute.xlu0 %1953
      %1955 = vrot.lane.b32.xlu0 %v1884, 32
      %v1956 = vpop.permute.xlu0 %1955
      %1957 = vrot.lane.b32.xlu0 %v1885, 32
      %v1958 = vpop.permute.xlu0 %1957
      %1959 = vrot.lane.b32.xlu0 %v1886, 32
      %v1960 = vpop.permute.xlu0 %1959
      %1961 = vrot.lane.b32.xlu0 %v1887, 32
      %v1962 = vpop.permute.xlu0 %1961
      %1963 = vrot.lane.b32.xlu0 %v1888, 32
      %v1964 = vpop.permute.xlu0 %1963
      %1965 = vrot.lane.b32.xlu0 %v1889, 32
      %v1966 = vpop.permute.xlu0 %1965
      %1967 = vrot.lane.b32.xlu0 %v1890, 32
      %v1968 = vpop.permute.xlu0 %1967
      %1969 = vrot.lane.b32.xlu0 %v1891, 32
      %v1970 = vpop.permute.xlu0 %1969
      %1971 = vrot.lane.b32.xlu0 %v1892, 32
      %v1972 = vpop.permute.xlu0 %1971
      %1973 = vrot.lane.b32.xlu0 %v1893, 32
      %v1974 = vpop.permute.xlu0 %1973
      %1975 = vrot.lane.b32.xlu0 %v1894, 32
      %v1976 = vpop.permute.xlu0 %1975
      %1977 = vrot.lane.b32.xlu0 %v1895, 32
      %v1978 = vpop.permute.xlu0 %1977
      %1979 = vrot.lane.b32.xlu0 %v1896, 32
      %v1980 = vpop.permute.xlu0 %1979
      %1981 = vrot.lane.b32.xlu0 %v1897, 32
      %v1982 = vpop.permute.xlu0 %1981
      %1983 = vrot.lane.b32.xlu0 %v1898, 32
      %v1984 = vpop.permute.xlu0 %1983
      %1985 = vrot.lane.b32.xlu0 %v1899, 32
      %v1986 = vpop.permute.xlu0 %1985
      %1987 = vrot.lane.b32.xlu0 %v1900, 32
      %v1988 = vpop.permute.xlu0 %1987
      %1989 = vrot.lane.b32.xlu0 %v1901, 32
      %v1990 = vpop.permute.xlu0 %1989
      %1991 = vrot.lane.b32.xlu0 %v1902, 32
      %v1992 = vpop.permute.xlu0 %1991
      %1993 = vrot.lane.b32.xlu0 %v1903, 32
      %v1994 = vpop.permute.xlu0 %1993
      %1995 = vrot.lane.b32.xlu0 %v1904, 32
      %v1996 = vpop.permute.xlu0 %1995
      %1997 = vrot.lane.b32.xlu0 %v1905, 32
      %v1998 = vpop.permute.xlu0 %1997
      %1999 = vrot.lane.b32.xlu0 %v1906, 32
      %v2000 = vpop.permute.xlu0 %1999
      %2001 = vrot.lane.b32.xlu0 %v1907, 32
      %v2002 = vpop.permute.xlu0 %2001
      %2003 = vrot.lane.b32.xlu0 %v1908, 32
      %v2004 = vpop.permute.xlu0 %2003
      %vm2037 = vcmask 294144
      %2038 = vst.msk [vmem:[#allocation3] sm:$0xff] %vm2037, %v1942
      %2039 = vst.msk [vmem:[#allocation3 + $0x8] sm:$0xff] %vm2037, %v1944
      %2040 = vst.msk [vmem:[#allocation3 + $0x10] sm:$0xff] %vm2037, %v1946
      %2041 = vst.msk [vmem:[#allocation3 + $0x18] sm:$0xff] %vm2037, %v1948
      %2042 = vst.msk [vmem:[#allocation3 + $0x20] sm:$0xff] %vm2037, %v1950
      %2043 = vst.msk [vmem:[#allocation3 + $0x28] sm:$0xff] %vm2037, %v1952
      %2044 = vst.msk [vmem:[#allocation3 + $0x30] sm:$0xff] %vm2037, %v1954
      %2045 = vst.msk [vmem:[#allocation3 + $0x38] sm:$0xff] %vm2037, %v1956
      %2046 = vst.msk [vmem:[#allocation3 + $0x40] sm:$0xff] %vm2037, %v1958
      %2047 = vst.msk [vmem:[#allocation3 + $0x48] sm:$0xff] %vm2037, %v1960
      %2048 = vst.msk [vmem:[#allocation3 + $0x50] sm:$0xff] %vm2037, %v1962
      %2049 = vst.msk [vmem:[#allocation3 + $0x58] sm:$0xff] %vm2037, %v1964
      %2050 = vst.msk [vmem:[#allocation3 + $0x60] sm:$0xff] %vm2037, %v1966
      %2051 = vst.msk [vmem:[#allocation3 + $0x68] sm:$0xff] %vm2037, %v1968
      %2052 = vst.msk [vmem:[#allocation3 + $0x70] sm:$0xff] %vm2037, %v1970
      %2053 = vst.msk [vmem:[#allocation3 + $0x78] sm:$0xff] %vm2037, %v1972
      %2054 = vst.msk [vmem:[#allocation3 + $0x80] sm:$0xff] %vm2037, %v1974
      %2055 = vst.msk [vmem:[#allocation3 + $0x88] sm:$0xff] %vm2037, %v1976
      %2056 = vst.msk [vmem:[#allocation3 + $0x90] sm:$0xff] %vm2037, %v1978
      %2057 = vst.msk [vmem:[#allocation3 + $0x98] sm:$0xff] %vm2037, %v1980
      %2058 = vst.msk [vmem:[#allocation3 + $0xa0] sm:$0xff] %vm2037, %v1982
      %2059 = vst.msk [vmem:[#allocation3 + $0xa8] sm:$0xff] %vm2037, %v1984
      %2060 = vst.msk [vmem:[#allocation3 + $0xb0] sm:$0xff] %vm2037, %v1986
      %2061 = vst.msk [vmem:[#allocation3 + $0xb8] sm:$0xff] %vm2037, %v1988
      %2062 = vst.msk [vmem:[#allocation3 + $0xc0] sm:$0xff] %vm2037, %v1990
      %2063 = vst.msk [vmem:[#allocation3 + $0xc8] sm:$0xff] %vm2037, %v1992
      %2064 = vst.msk [vmem:[#allocation3 + $0xd0] sm:$0xff] %vm2037, %v1994
      %2065 = vst.msk [vmem:[#allocation3 + $0xd8] sm:$0xff] %vm2037, %v1996
      %2066 = vst.msk [vmem:[#allocation3 + $0xe0] sm:$0xff] %vm2037, %v1998
      %2067 = vst.msk [vmem:[#allocation3 + $0xe8] sm:$0xff] %vm2037, %v2000
      %2068 = vst.msk [vmem:[#allocation3 + $0xf0] sm:$0xff] %vm2037, %v2002
      %2069 = vst.msk [vmem:[#allocation3 + $0xf8] sm:$0xff] %vm2037, %v2004
      %v2070 = vld [vmem:[#allocation3] sm:$0xff]
      %v2071 = vld [vmem:[#allocation3 + $0x8] sm:$0xff]
      %v2072 = vld [vmem:[#allocation3 + $0x10] sm:$0xff]
      %v2073 = vld [vmem:[#allocation3 + $0x18] sm:$0xff]
      %v2074 = vld [vmem:[#allocation3 + $0x20] sm:$0xff]
      %v2075 = vld [vmem:[#allocation3 + $0x28] sm:$0xff]
      %v2076 = vld [vmem:[#allocation3 + $0x30] sm:$0xff]
      %v2077 = vld [vmem:[#allocation3 + $0x38] sm:$0xff]
      %v2078 = vld [vmem:[#allocation3 + $0x40] sm:$0xff]
      %v2079 = vld [vmem:[#allocation3 + $0x48] sm:$0xff]
      %v2080 = vld [vmem:[#allocation3 + $0x50] sm:$0xff]
      %v2081 = vld [vmem:[#allocation3 + $0x58] sm:$0xff]
      %v2082 = vld [vmem:[#allocation3 + $0x60] sm:$0xff]
      %v2083 = vld [vmem:[#allocation3 + $0x68] sm:$0xff]
      %v2084 = vld [vmem:[#allocation3 + $0x70] sm:$0xff]
      %v2085 = vld [vmem:[#allocation3 + $0x78] sm:$0xff]
      %v2086 = vld [vmem:[#allocation3 + $0x80] sm:$0xff]
      %v2087 = vld [vmem:[#allocation3 + $0x88] sm:$0xff]
      %v2088 = vld [vmem:[#allocation3 + $0x90] sm:$0xff]
      %v2089 = vld [vmem:[#allocation3 + $0x98] sm:$0xff]
      %v2090 = vld [vmem:[#allocation3 + $0xa0] sm:$0xff]
      %v2091 = vld [vmem:[#allocation3 + $0xa8] sm:$0xff]
      %v2092 = vld [vmem:[#allocation3 + $0xb0] sm:$0xff]
      %v2093 = vld [vmem:[#allocation3 + $0xb8] sm:$0xff]
      %v2094 = vld [vmem:[#allocation3 + $0xc0] sm:$0xff]
      %v2095 = vld [vmem:[#allocation3 + $0xc8] sm:$0xff]
      %v2096 = vld [vmem:[#allocation3 + $0xd0] sm:$0xff]
      %v2097 = vld [vmem:[#allocation3 + $0xd8] sm:$0xff]
      %v2098 = vld [vmem:[#allocation3 + $0xe0] sm:$0xff]
      %v2099 = vld [vmem:[#allocation3 + $0xe8] sm:$0xff]
      %v2100 = vld [vmem:[#allocation3 + $0xf0] sm:$0xff]
      %v2101 = vld [vmem:[#allocation3 + $0xf8] sm:$0xff]
      %vm2102 = vcmask 293888
      %v2104 = vsel %vm2102, %v2070, 0
      %v2107 = vsel %vm2102, %v2071, 0
      %v2110 = vsel %vm2102, %v2072, 0
      %v2113 = vsel %vm2102, %v2073, 0
      %v2116 = vsel %vm2102, %v2074, 0
      %v2119 = vsel %vm2102, %v2075, 0
      %v2122 = vsel %vm2102, %v2076, 0
      %v2125 = vsel %vm2102, %v2077, 0
      %v2128 = vsel %vm2102, %v2078, 0
      %v2131 = vsel %vm2102, %v2079, 0
      %v2134 = vsel %vm2102, %v2080, 0
      %v2137 = vsel %vm2102, %v2081, 0
      %v2140 = vsel %vm2102, %v2082, 0
      %v2143 = vsel %vm2102, %v2083, 0
      %v2146 = vsel %vm2102, %v2084, 0
      %v2149 = vsel %vm2102, %v2085, 0
      %v2152 = vsel %vm2102, %v2086, 0
      %v2155 = vsel %vm2102, %v2087, 0
      %v2158 = vsel %vm2102, %v2088, 0
      %v2161 = vsel %vm2102, %v2089, 0
      %v2164 = vsel %vm2102, %v2090, 0
      %v2167 = vsel %vm2102, %v2091, 0
      %v2170 = vsel %vm2102, %v2092, 0
      %v2173 = vsel %vm2102, %v2093, 0
      %v2176 = vsel %vm2102, %v2094, 0
      %v2179 = vsel %vm2102, %v2095, 0
      %v2182 = vsel %vm2102, %v2096, 0
      %v2185 = vsel %vm2102, %v2097, 0
      %v2188 = vsel %vm2102, %v2098, 0
      %v2191 = vsel %vm2102, %v2099, 0
      %v2194 = vsel %vm2102, %v2100, 0
      %v2197 = vsel %vm2102, %v2101, 0
      %vm2199 = vcmask 1043456
      %v2201 = vsel %vm2199, %v460, 0
      %2203 = vmatprep.subr.mxu0 0.0
      %2204 = vmatpush1.msra.mxu0 0.0
      %2205 = vmatprep.subr.mxu0 0.0
      %2206 = vmatpush1.msra.mxu0 0.0
      %2207 = vmatprep.subr.mxu0 0.0
      %2208 = vmatpush1.msra.mxu0 0.0
      %2209 = vmatprep.subr.mxu0 0.0
      %2210 = vmatpush1.msra.mxu0 0.0
      %2211 = vmatprep.subr.mxu0 0.0
      %2212 = vmatpush1.msra.mxu0 0.0
      %2213 = vmatprep.subr.mxu0 0.0
      %2214 = vmatpush1.msra.mxu0 0.0
      %2215 = vmatprep.subr.mxu0 0.0
      %2216 = vmatpush1.msra.mxu0 0.0
      %2217 = vmatprep.subr.mxu0 0.0
      %2218 = vmatpush1.msra.mxu0 0.0
      %2219 = vmatprep.subr.mxu0 0.0
      %2220 = vmatpush1.msra.mxu0 0.0
      %2221 = vmatprep.subr.mxu0 0.0
      %2222 = vmatpush1.msra.mxu0 0.0
      %2223 = vmatprep.subr.mxu0 0.0
      %2224 = vmatpush1.msra.mxu0 0.0
      %2225 = vmatprep.subr.mxu0 0.0
      %2226 = vmatpush1.msra.mxu0 %v2201
      %2227 = vmatprep.subr.mxu0 0.0
      %2228 = vmatpush1.msra.mxu0 %v459
      %2229 = vmatprep.subr.mxu0 0.0
      %2230 = vmatpush1.msra.mxu0 %v458
      %2231 = vmatprep.subr.mxu0 0.0
      %2232 = vmatpush1.msra.mxu0 %v457
      %2233 = vmatprep.subr.mxu0 0.0
      %2234 = vmatpush1.msra.mxu0 %v456
      %2235 = vmatprep.subr.mxu0 0.0
      %2236 = vmatpush2.msra.mxu0 0.0
      %2237 = vmatprep.subr.mxu0 0.0
      %2238 = vmatpush2.msra.mxu0 0.0
      %2239 = vmatprep.subr.mxu0 0.0
      %2240 = vmatpush2.msra.mxu0 0.0
      %2241 = vmatprep.subr.mxu0 0.0
      %2242 = vmatpush2.msra.mxu0 0.0
      %2243 = vmatprep.subr.mxu0 0.0
      %2244 = vmatpush2.msra.mxu0 0.0
      %2245 = vmatprep.subr.mxu0 0.0
      %2246 = vmatpush2.msra.mxu0 0.0
      %2247 = vmatprep.subr.mxu0 0.0
      %2248 = vmatpush2.msra.mxu0 0.0
      %2249 = vmatprep.subr.mxu0 0.0
      %2250 = vmatpush2.msra.mxu0 0.0
      %2251 = vmatprep.subr.mxu0 0.0
      %2252 = vmatpush2.msra.mxu0 0.0
      %2253 = vmatprep.subr.mxu0 0.0
      %2254 = vmatpush2.msra.mxu0 0.0
      %2255 = vmatprep.subr.mxu0 0.0
      %2256 = vmatpush2.msra.mxu0 0.0
      %2257 = vmatprep.subr.mxu0 0.0
      %2258 = vmatpush2.msra.mxu0 0.0
      %2259 = vmatprep.subr.mxu0 0.0
      %2260 = vmatpush2.msra.mxu0 0.0
      %2261 = vmatprep.subr.mxu0 0.0
      %2262 = vmatpush2.msra.mxu0 0.0
      %2263 = vmatprep.subr.mxu0 0.0
      %2264 = vmatpush2.msra.mxu0 0.0
      %2265 = vmatprep.subr.mxu0 0.0
      %2266 = vmatpush2.msra.mxu0 0.0
      %2267 = vmatprep.mubr.f32.mxu0 0.0
      %2268 = vmatmul.mubr.f32.gmra.mxu0 %v2104
      %v2269 = vpop.f32.mrf.mxu0
      %v2270 = vadd.f32 0.0, %v2269
      %v2271 = vpop.f32.mrf.mxu0
      %2272 = vmatprep.mubr.f32.mxu0 0.0
      %2273 = vmatmul.mubr.f32.gmra.mxu0 %v2107
      %v2274 = vpop.f32.mrf.mxu0
      %v2275 = vadd.f32 0.0, %v2274
      %v2276 = vpop.f32.mrf.mxu0
      %2277 = vmatprep.mubr.f32.mxu0 0.0
      %2278 = vmatmul.mubr.f32.gmra.mxu0 %v2110
      %v2279 = vpop.f32.mrf.mxu0
      %v2280 = vadd.f32 0.0, %v2279
      %v2281 = vpop.f32.mrf.mxu0
      %2282 = vmatprep.mubr.f32.mxu0 0.0
      %2283 = vmatmul.mubr.f32.gmra.mxu0 %v2113
      %v2284 = vpop.f32.mrf.mxu0
      %v2285 = vadd.f32 0.0, %v2284
      %v2286 = vpop.f32.mrf.mxu0
      %2287 = vmatprep.mubr.f32.mxu0 0.0
      %2288 = vmatmul.mubr.f32.gmra.mxu0 %v2116
      %v2289 = vpop.f32.mrf.mxu0
      %v2290 = vadd.f32 0.0, %v2289
      %v2291 = vpop.f32.mrf.mxu0
      %2292 = vmatprep.mubr.f32.mxu0 0.0
      %2293 = vmatmul.mubr.f32.gmra.mxu0 %v2119
      %v2294 = vpop.f32.mrf.mxu0
      %v2295 = vadd.f32 0.0, %v2294
      %v2296 = vpop.f32.mrf.mxu0
      %2297 = vmatprep.mubr.f32.mxu0 0.0
      %2298 = vmatmul.mubr.f32.gmra.mxu0 %v2122
      %v2299 = vpop.f32.mrf.mxu0
      %v2300 = vadd.f32 0.0, %v2299
      %v2301 = vpop.f32.mrf.mxu0
      %2302 = vmatprep.mubr.f32.mxu0 0.0
      %2303 = vmatmul.mubr.f32.gmra.mxu0 %v2125
      %v2304 = vpop.f32.mrf.mxu0
      %v2305 = vadd.f32 0.0, %v2304
      %v2306 = vpop.f32.mrf.mxu0
      %2307 = vmatprep.mubr.f32.mxu0 0.0
      %2308 = vmatmul.mubr.f32.gmra.mxu0 %v2128
      %v2309 = vpop.f32.mrf.mxu0
      %v2310 = vadd.f32 0.0, %v2309
      %v2311 = vpop.f32.mrf.mxu0
      %2312 = vmatprep.mubr.f32.mxu0 0.0
      %2313 = vmatmul.mubr.f32.gmra.mxu0 %v2131
      %v2314 = vpop.f32.mrf.mxu0
      %v2315 = vadd.f32 0.0, %v2314
      %v2316 = vpop.f32.mrf.mxu0
      %2317 = vmatprep.mubr.f32.mxu0 0.0
      %2318 = vmatmul.mubr.f32.gmra.mxu0 %v2134
      %v2319 = vpop.f32.mrf.mxu0
      %v2320 = vadd.f32 0.0, %v2319
      %v2321 = vpop.f32.mrf.mxu0
      %2322 = vmatprep.mubr.f32.mxu0 0.0
      %2323 = vmatmul.mubr.f32.gmra.mxu0 %v2137
      %v2324 = vpop.f32.mrf.mxu0
      %v2325 = vadd.f32 0.0, %v2324
      %v2326 = vpop.f32.mrf.mxu0
      %2327 = vmatprep.mubr.f32.mxu0 0.0
      %2328 = vmatmul.mubr.f32.gmra.mxu0 %v2140
      %v2329 = vpop.f32.mrf.mxu0
      %v2330 = vadd.f32 0.0, %v2329
      %v2331 = vpop.f32.mrf.mxu0
      %2332 = vmatprep.mubr.f32.mxu0 0.0
      %2333 = vmatmul.mubr.f32.gmra.mxu0 %v2143
      %v2334 = vpop.f32.mrf.mxu0
      %v2335 = vadd.f32 0.0, %v2334
      %v2336 = vpop.f32.mrf.mxu0
      %2337 = vmatprep.mubr.f32.mxu0 0.0
      %2338 = vmatmul.mubr.f32.gmra.mxu0 %v2146
      %v2339 = vpop.f32.mrf.mxu0
      %v2340 = vadd.f32 0.0, %v2339
      %v2341 = vpop.f32.mrf.mxu0
      %2342 = vmatprep.mubr.f32.mxu0 0.0
      %2343 = vmatmul.mubr.f32.gmra.mxu0 %v2149
      %v2344 = vpop.f32.mrf.mxu0
      %v2345 = vadd.f32 0.0, %v2344
      %v2346 = vpop.f32.mrf.mxu0
      %2347 = vmatprep.mubr.f32.mxu0 0.0
      %2348 = vmatmul.mubr.f32.gmra.mxu0 %v2152
      %v2349 = vpop.f32.mrf.mxu0
      %v2350 = vadd.f32 0.0, %v2349
      %v2351 = vpop.f32.mrf.mxu0
      %2352 = vmatprep.mubr.f32.mxu0 0.0
      %2353 = vmatmul.mubr.f32.gmra.mxu0 %v2155
      %v2354 = vpop.f32.mrf.mxu0
      %v2355 = vadd.f32 0.0, %v2354
      %v2356 = vpop.f32.mrf.mxu0
      %2357 = vmatprep.mubr.f32.mxu0 0.0
      %2358 = vmatmul.mubr.f32.gmra.mxu0 %v2158
      %v2359 = vpop.f32.mrf.mxu0
      %v2360 = vadd.f32 0.0, %v2359
      %v2361 = vpop.f32.mrf.mxu0
      %2362 = vmatprep.mubr.f32.mxu0 0.0
      %2363 = vmatmul.mubr.f32.gmra.mxu0 %v2161
      %v2364 = vpop.f32.mrf.mxu0
      %v2365 = vadd.f32 0.0, %v2364
      %v2366 = vpop.f32.mrf.mxu0
      %2367 = vmatprep.mubr.f32.mxu0 0.0
      %2368 = vmatmul.mubr.f32.gmra.mxu0 %v2164
      %v2369 = vpop.f32.mrf.mxu0
      %v2370 = vadd.f32 0.0, %v2369
      %v2371 = vpop.f32.mrf.mxu0
      %2372 = vmatprep.mubr.f32.mxu0 0.0
      %2373 = vmatmul.mubr.f32.gmra.mxu0 %v2167
      %v2374 = vpop.f32.mrf.mxu0
      %v2375 = vadd.f32 0.0, %v2374
      %v2376 = vpop.f32.mrf.mxu0
      %2377 = vmatprep.mubr.f32.mxu0 0.0
      %2378 = vmatmul.mubr.f32.gmra.mxu0 %v2170
      %v2379 = vpop.f32.mrf.mxu0
      %v2380 = vadd.f32 0.0, %v2379
      %v2381 = vpop.f32.mrf.mxu0
      %2382 = vmatprep.mubr.f32.mxu0 0.0
      %2383 = vmatmul.mubr.f32.gmra.mxu0 %v2173
      %v2384 = vpop.f32.mrf.mxu0
      %v2385 = vadd.f32 0.0, %v2384
      %v2386 = vpop.f32.mrf.mxu0
      %2387 = vmatprep.mubr.f32.mxu0 0.0
      %2388 = vmatmul.mubr.f32.gmra.mxu0 %v2176
      %v2389 = vpop.f32.mrf.mxu0
      %v2390 = vadd.f32 0.0, %v2389
      %v2391 = vpop.f32.mrf.mxu0
      %2392 = vmatprep.mubr.f32.mxu0 0.0
      %2393 = vmatmul.mubr.f32.gmra.mxu0 %v2179
      %v2394 = vpop.f32.mrf.mxu0
      %v2395 = vadd.f32 0.0, %v2394
      %v2396 = vpop.f32.mrf.mxu0
      %2397 = vmatprep.mubr.f32.mxu0 0.0
      %2398 = vmatmul.mubr.f32.gmra.mxu0 %v2182
      %v2399 = vpop.f32.mrf.mxu0
      %v2400 = vadd.f32 0.0, %v2399
      %v2401 = vpop.f32.mrf.mxu0
      %2402 = vmatprep.mubr.f32.mxu0 0.0
      %2403 = vmatmul.mubr.f32.gmra.mxu0 %v2185
      %v2404 = vpop.f32.mrf.mxu0
      %v2405 = vadd.f32 0.0, %v2404
      %v2406 = vpop.f32.mrf.mxu0
      %2407 = vmatprep.mubr.f32.mxu0 0.0
      %2408 = vmatmul.mubr.f32.gmra.mxu0 %v2188
      %v2409 = vpop.f32.mrf.mxu0
      %v2410 = vadd.f32 0.0, %v2409
      %v2411 = vpop.f32.mrf.mxu0
      %2412 = vmatprep.mubr.f32.mxu0 0.0
      %2413 = vmatmul.mubr.f32.gmra.mxu0 %v2191
      %v2414 = vpop.f32.mrf.mxu0
      %v2415 = vadd.f32 0.0, %v2414
      %v2416 = vpop.f32.mrf.mxu0
      %2417 = vmatprep.mubr.f32.mxu0 0.0
      %2418 = vmatmul.mubr.f32.gmra.mxu0 %v2194
      %v2419 = vpop.f32.mrf.mxu0
      %v2420 = vadd.f32 0.0, %v2419
      %v2421 = vpop.f32.mrf.mxu0
      %2422 = vmatprep.mubr.f32.mxu0 0.0
      %2423 = vmatmul.mubr.f32.gmra.mxu0 %v2197
      %v2424 = vpop.f32.mrf.mxu0
      %v2425 = vadd.f32 0.0, %v2424
      %v2426 = vpop.f32.mrf.mxu0
      %2427 = vdwg.mxu0
      %v2428 = vsel %vm400, %v2270, 0.0
      %v2429 = vsel %vm400, %v2275, 0.0
      %v2430 = vadd.f32 %v2428, %v2429
      %v2431 = vsel %vm400, %v2280, 0.0
      %v2432 = vadd.f32 %v2430, %v2431
      %v2433 = vsel %vm400, %v2285, 0.0
      %v2434 = vadd.f32 %v2432, %v2433
      %v2435 = vsel %vm400, %v2290, 0.0
      %v2436 = vadd.f32 %v2434, %v2435
      %v2437 = vsel %vm400, %v2295, 0.0
      %v2438 = vadd.f32 %v2436, %v2437
      %v2439 = vsel %vm400, %v2300, 0.0
      %v2440 = vadd.f32 %v2438, %v2439
      %v2441 = vsel %vm400, %v2305, 0.0
      %v2442 = vadd.f32 %v2440, %v2441
      %v2443 = vsel %vm400, %v2310, 0.0
      %v2444 = vadd.f32 %v2442, %v2443
      %v2445 = vsel %vm400, %v2315, 0.0
      %v2446 = vadd.f32 %v2444, %v2445
      %v2447 = vsel %vm400, %v2320, 0.0
      %v2448 = vadd.f32 %v2446, %v2447
      %v2449 = vsel %vm400, %v2325, 0.0
      %v2450 = vadd.f32 %v2448, %v2449
      %v2451 = vsel %vm400, %v2330, 0.0
      %v2452 = vadd.f32 %v2450, %v2451
      %v2453 = vsel %vm400, %v2335, 0.0
      %v2454 = vadd.f32 %v2452, %v2453
      %v2455 = vsel %vm400, %v2340, 0.0
      %v2456 = vadd.f32 %v2454, %v2455
      %v2457 = vsel %vm400, %v2345, 0.0
      %v2458 = vadd.f32 %v2456, %v2457
      %v2459 = vsel %vm400, %v2350, 0.0
      %v2460 = vadd.f32 %v2458, %v2459
      %v2461 = vsel %vm400, %v2355, 0.0
      %v2462 = vadd.f32 %v2460, %v2461
      %v2463 = vsel %vm400, %v2360, 0.0
      %v2464 = vadd.f32 %v2462, %v2463
      %v2465 = vsel %vm400, %v2365, 0.0
      %v2466 = vadd.f32 %v2464, %v2465
      %v2467 = vsel %vm400, %v2370, 0.0
      %v2468 = vadd.f32 %v2466, %v2467
      %v2469 = vsel %vm400, %v2375, 0.0
      %v2470 = vadd.f32 %v2468, %v2469
      %v2471 = vsel %vm400, %v2380, 0.0
      %v2472 = vadd.f32 %v2470, %v2471
      %v2473 = vsel %vm400, %v2385, 0.0
      %v2474 = vadd.f32 %v2472, %v2473
      %v2475 = vsel %vm400, %v2390, 0.0
      %v2476 = vadd.f32 %v2474, %v2475
      %v2477 = vsel %vm400, %v2395, 0.0
      %v2478 = vadd.f32 %v2476, %v2477
      %v2479 = vsel %vm400, %v2400, 0.0
      %v2480 = vadd.f32 %v2478, %v2479
      %v2481 = vsel %vm400, %v2405, 0.0
      %v2482 = vadd.f32 %v2480, %v2481
      %v2483 = vsel %vm400, %v2410, 0.0
      %v2484 = vadd.f32 %v2482, %v2483
      %v2485 = vsel %vm400, %v2415, 0.0
      %v2486 = vadd.f32 %v2484, %v2485
      %v2487 = vsel %vm400, %v2420, 0.0
      %v2488 = vadd.f32 %v2486, %v2487
      %v2489 = vsel %vm400, %v2425, 0.0
      %v2490 = vadd.f32 %v2488, %v2489
      %v2491 = vrot.slane %v2490, 4
      %v2492 = vadd.f32 %v2490, %v2491
      %v2493 = vrot.slane %v2492, 2
      %v2494 = vadd.f32 %v2492, %v2493
      %v2495 = vrot.slane %v2494, 1
      %v2496 = vadd.f32 %v2494, %v2495
      %v2497 = vadd.f32 %v2496, 0.0
      %v2498 = vmul.f32 %v2270, %v2270
      %v2499 = vmul.f32 %v2275, %v2275
      %v2500 = vmul.f32 %v2280, %v2280
      %v2501 = vmul.f32 %v2285, %v2285
      %v2502 = vmul.f32 %v2290, %v2290
      %v2503 = vmul.f32 %v2295, %v2295
      %v2504 = vmul.f32 %v2300, %v2300
      %v2505 = vmul.f32 %v2305, %v2305
      %v2506 = vmul.f32 %v2310, %v2310
      %v2507 = vmul.f32 %v2315, %v2315
      %v2508 = vmul.f32 %v2320, %v2320
      %v2509 = vmul.f32 %v2325, %v2325
      %v2510 = vmul.f32 %v2330, %v2330
      %v2511 = vmul.f32 %v2335, %v2335
      %v2512 = vmul.f32 %v2340, %v2340
      %v2513 = vmul.f32 %v2345, %v2345
      %v2514 = vmul.f32 %v2350, %v2350
      %v2515 = vmul.f32 %v2355, %v2355
      %v2516 = vmul.f32 %v2360, %v2360
      %v2517 = vmul.f32 %v2365, %v2365
      %v2518 = vmul.f32 %v2370, %v2370
      %v2519 = vmul.f32 %v2375, %v2375
      %v2520 = vmul.f32 %v2380, %v2380
      %v2521 = vmul.f32 %v2385, %v2385
      %v2522 = vmul.f32 %v2390, %v2390
      %v2523 = vmul.f32 %v2395, %v2395
      %v2524 = vmul.f32 %v2400, %v2400
      %v2525 = vmul.f32 %v2405, %v2405
      %v2526 = vmul.f32 %v2410, %v2410
      %v2527 = vmul.f32 %v2415, %v2415
      %v2528 = vmul.f32 %v2420, %v2420
      %v2529 = vmul.f32 %v2425, %v2425
      %v2530 = vsel %vm400, %v2498, 0.0
      %v2531 = vsel %vm400, %v2499, 0.0
      %v2532 = vadd.f32 %v2530, %v2531
      %v2533 = vsel %vm400, %v2500, 0.0
      %v2534 = vadd.f32 %v2532, %v2533
      %v2535 = vsel %vm400, %v2501, 0.0
      %v2536 = vadd.f32 %v2534, %v2535
      %v2537 = vsel %vm400, %v2502, 0.0
      %v2538 = vadd.f32 %v2536, %v2537
      %v2539 = vsel %vm400, %v2503, 0.0
      %v2540 = vadd.f32 %v2538, %v2539
      %v2541 = vsel %vm400, %v2504, 0.0
      %v2542 = vadd.f32 %v2540, %v2541
      %v2543 = vsel %vm400, %v2505, 0.0
      %v2544 = vadd.f32 %v2542, %v2543
      %v2545 = vsel %vm400, %v2506, 0.0
      %v2546 = vadd.f32 %v2544, %v2545
      %v2547 = vsel %vm400, %v2507, 0.0
      %v2548 = vadd.f32 %v2546, %v2547
      %v2549 = vsel %vm400, %v2508, 0.0
      %v2550 = vadd.f32 %v2548, %v2549
      %v2551 = vsel %vm400, %v2509, 0.0
      %v2552 = vadd.f32 %v2550, %v2551
      %v2553 = vsel %vm400, %v2510, 0.0
      %v2554 = vadd.f32 %v2552, %v2553
      %v2555 = vsel %vm400, %v2511, 0.0
      %v2556 = vadd.f32 %v2554, %v2555
      %v2557 = vsel %vm400, %v2512, 0.0
      %v2558 = vadd.f32 %v2556, %v2557
      %v2559 = vsel %vm400, %v2513, 0.0
      %v2560 = vadd.f32 %v2558, %v2559
      %v2561 = vsel %vm400, %v2514, 0.0
      %v2562 = vadd.f32 %v2560, %v2561
      %v2563 = vsel %vm400, %v2515, 0.0
      %v2564 = vadd.f32 %v2562, %v2563
      %v2565 = vsel %vm400, %v2516, 0.0
      %v2566 = vadd.f32 %v2564, %v2565
      %v2567 = vsel %vm400, %v2517, 0.0
      %v2568 = vadd.f32 %v2566, %v2567
      %v2569 = vsel %vm400, %v2518, 0.0
      %v2570 = vadd.f32 %v2568, %v2569
      %v2571 = vsel %vm400, %v2519, 0.0
      %v2572 = vadd.f32 %v2570, %v2571
      %v2573 = vsel %vm400, %v2520, 0.0
      %v2574 = vadd.f32 %v2572, %v2573
      %v2575 = vsel %vm400, %v2521, 0.0
      %v2576 = vadd.f32 %v2574, %v2575
      %v2577 = vsel %vm400, %v2522, 0.0
      %v2578 = vadd.f32 %v2576, %v2577
      %v2579 = vsel %vm400, %v2523, 0.0
      %v2580 = vadd.f32 %v2578, %v2579
      %v2581 = vsel %vm400, %v2524, 0.0
      %v2582 = vadd.f32 %v2580, %v2581
      %v2583 = vsel %vm400, %v2525, 0.0
      %v2584 = vadd.f32 %v2582, %v2583
      %v2585 = vsel %vm400, %v2526, 0.0
      %v2586 = vadd.f32 %v2584, %v2585
      %v2587 = vsel %vm400, %v2527, 0.0
      %v2588 = vadd.f32 %v2586, %v2587
      %v2589 = vsel %vm400, %v2528, 0.0
      %v2590 = vadd.f32 %v2588, %v2589
      %v2591 = vsel %vm400, %v2529, 0.0
      %v2592 = vadd.f32 %v2590, %v2591
      %v2593 = vrot.slane %v2592, 4
      %v2594 = vadd.f32 %v2592, %v2593
      %v2595 = vrot.slane %v2594, 2
      %v2596 = vadd.f32 %v2594, %v2595
      %v2597 = vrot.slane %v2596, 1
      %v2598 = vadd.f32 %v2596, %v2597
      %v2599 = vadd.f32 %v2598, 0.0
      %s2600 = scalar_lea.vmem [#allocation4], 24
      %2601 = vst.msk [vmem:[%s2600 + $0x1] sm:$0xff] %vm400, %v2270
      %2602 = vst.msk [vmem:[%s2600 + $0x9] sm:$0xff] %vm400, %v2275
      %2603 = vst.msk [vmem:[%s2600 + $0x19] sm:$0xff] %vm400, %v2280
      %2604 = vst.msk [vmem:[%s2600 + $0x21] sm:$0xff] %vm400, %v2285
      %2605 = vst.msk [vmem:[%s2600 + $0x31] sm:$0xff] %vm400, %v2290
      %2606 = vst.msk [vmem:[%s2600 + $0x39] sm:$0xff] %vm400, %v2295
      %2607 = vst.msk [vmem:[%s2600 + $0x49] sm:$0xff] %vm400, %v2300
      %2608 = vst.msk [vmem:[%s2600 + $0x51] sm:$0xff] %vm400, %v2305
      %2609 = vst.msk [vmem:[%s2600 + $0x61] sm:$0xff] %vm400, %v2310
      %2610 = vst.msk [vmem:[%s2600 + $0x69] sm:$0xff] %vm400, %v2315
      %2611 = vst.msk [vmem:[%s2600 + $0x79] sm:$0xff] %vm400, %v2320
      %2612 = vst.msk [vmem:[%s2600 + $0x81] sm:$0xff] %vm400, %v2325
      %2613 = vst.msk [vmem:[%s2600 + $0x91] sm:$0xff] %vm400, %v2330
      %2614 = vst.msk [vmem:[%s2600 + $0x99] sm:$0xff] %vm400, %v2335
      %2615 = vst.msk [vmem:[%s2600 + $0xa9] sm:$0xff] %vm400, %v2340
      %2616 = vst.msk [vmem:[%s2600 + $0xb1] sm:$0xff] %vm400, %v2345
      %2617 = vst.msk [vmem:[%s2600 + $0xc1] sm:$0xff] %vm400, %v2350
      %2618 = vst.msk [vmem:[%s2600 + $0xc9] sm:$0xff] %vm400, %v2355
      %2619 = vst.msk [vmem:[%s2600 + $0xd9] sm:$0xff] %vm400, %v2360
      %2620 = vst.msk [vmem:[%s2600 + $0xe1] sm:$0xff] %vm400, %v2365
      %2621 = vst.msk [vmem:[%s2600 + $0xf1] sm:$0xff] %vm400, %v2370
      %2622 = vst.msk [vmem:[%s2600 + $0xf9] sm:$0xff] %vm400, %v2375
      %2623 = vst.msk [vmem:[%s2600 + $0x109] sm:$0xff] %vm400, %v2380
      %2624 = vst.msk [vmem:[%s2600 + $0x111] sm:$0xff] %vm400, %v2385
      %2625 = vst.msk [vmem:[%s2600 + $0x121] sm:$0xff] %vm400, %v2390
      %2626 = vst.msk [vmem:[%s2600 + $0x129] sm:$0xff] %vm400, %v2395
      %2627 = vst.msk [vmem:[%s2600 + $0x139] sm:$0xff] %vm400, %v2400
      %2628 = vst.msk [vmem:[%s2600 + $0x141] sm:$0xff] %vm400, %v2405
      %2629 = vst.msk [vmem:[%s2600 + $0x151] sm:$0xff] %vm400, %v2410
      %2630 = vst.msk [vmem:[%s2600 + $0x159] sm:$0xff] %vm400, %v2415
      %2631 = vst.msk [vmem:[%s2600 + $0x169] sm:$0xff] %vm400, %v2420
      %2632 = vst.msk [vmem:[%s2600 + $0x171] sm:$0xff] %vm400, %v2425
      %v2633 = vmul.f32 %v2497, 0.00390625
      %v2634 = vmul.f32 %v2599, 0.00390625
      %v2635 = vmul.f32 %v2633, %v2633
      %v2636 = vsub.f32 %v2634, %v2635
      %v2637 = vmax.f32 %v2636, 0.0
      %v2638 = vld [vmem:[%s2] sm:$0x1]
      %v2639 = vadd.f32 %v2637, 1e-05
      %v2640 = vrsqrt.pop %v2639
      %v2641 = vmul.f32 %v2638, %v2640
      %v2642 = vld [vmem:[%s3] sm:$0x1]
      %v2643 = vmul.f32 %v2633, %v2641
      %v2644 = vsub.f32 %v2642, %v2643
      %v2645 = vld [vmem:[%s2600 + $0x1] sm:$0xff]
      %v2646 = vld [vmem:[%s2600 + $0x9] sm:$0xff]
      %v2647 = vld [vmem:[%s2600 + $0x19] sm:$0xff]
      %v2648 = vld [vmem:[%s2600 + $0x21] sm:$0xff]
      %v2649 = vld [vmem:[%s2600 + $0x31] sm:$0xff]
      %v2650 = vld [vmem:[%s2600 + $0x39] sm:$0xff]
      %v2651 = vld [vmem:[%s2600 + $0x49] sm:$0xff]
      %v2652 = vld [vmem:[%s2600 + $0x51] sm:$0xff]
      %v2653 = vld [vmem:[%s2600 + $0x61] sm:$0xff]
      %v2654 = vld [vmem:[%s2600 + $0x69] sm:$0xff]
      %v2655 = vld [vmem:[%s2600 + $0x79] sm:$0xff]
      %v2656 = vld [vmem:[%s2600 + $0x81] sm:$0xff]
      %v2657 = vld [vmem:[%s2600 + $0x91] sm:$0xff]
      %v2658 = vld [vmem:[%s2600 + $0x99] sm:$0xff]
      %v2659 = vld [vmem:[%s2600 + $0xa9] sm:$0xff]
      %v2660 = vld [vmem:[%s2600 + $0xb1] sm:$0xff]
      %v2661 = vld [vmem:[%s2600 + $0xc1] sm:$0xff]
      %v2662 = vld [vmem:[%s2600 + $0xc9] sm:$0xff]
      %v2663 = vld [vmem:[%s2600 + $0xd9] sm:$0xff]
      %v2664 = vld [vmem:[%s2600 + $0xe1] sm:$0xff]
      %v2665 = vld [vmem:[%s2600 + $0xf1] sm:$0xff]
      %v2666 = vld [vmem:[%s2600 + $0xf9] sm:$0xff]
      %v2667 = vld [vmem:[%s2600 + $0x109] sm:$0xff]
      %v2668 = vld [vmem:[%s2600 + $0x111] sm:$0xff]
      %v2669 = vld [vmem:[%s2600 + $0x121] sm:$0xff]
      %v2670 = vld [vmem:[%s2600 + $0x129] sm:$0xff]
      %v2671 = vld [vmem:[%s2600 + $0x139] sm:$0xff]
      %v2672 = vld [vmem:[%s2600 + $0x141] sm:$0xff]
      %v2673 = vld [vmem:[%s2600 + $0x151] sm:$0xff]
      %v2674 = vld [vmem:[%s2600 + $0x159] sm:$0xff]
      %v2675 = vld [vmem:[%s2600 + $0x169] sm:$0xff]
      %v2676 = vld [vmem:[%s2600 + $0x171] sm:$0xff]
      %v2678 = vlaneseq
      %v2679 = vshrl.u32 %v2678, 7
      %v2680 = vsub.s32 0, %v2679
      %v2681 = vrot.slane %v2641, %v2680
      %v2683 = vmul.f32 %v2645, %v2681
      %v2684 = vmul.f32 %v2646, %v2681
      %v2685 = vmul.f32 %v2647, %v2681
      %v2686 = vmul.f32 %v2648, %v2681
      %v2687 = vmul.f32 %v2649, %v2681
      %v2688 = vmul.f32 %v2650, %v2681
      %v2689 = vmul.f32 %v2651, %v2681
      %v2690 = vmul.f32 %v2652, %v2681
      %v2691 = vmul.f32 %v2653, %v2681
      %v2692 = vmul.f32 %v2654, %v2681
      %v2693 = vmul.f32 %v2655, %v2681
      %v2694 = vmul.f32 %v2656, %v2681
      %v2695 = vmul.f32 %v2657, %v2681
      %v2696 = vmul.f32 %v2658, %v2681
      %v2697 = vmul.f32 %v2659, %v2681
      %v2698 = vmul.f32 %v2660, %v2681
      %v2699 = vmul.f32 %v2661, %v2681
      %v2700 = vmul.f32 %v2662, %v2681
      %v2701 = vmul.f32 %v2663, %v2681
      %v2702 = vmul.f32 %v2664, %v2681
      %v2703 = vmul.f32 %v2665, %v2681
      %v2704 = vmul.f32 %v2666, %v2681
      %v2705 = vmul.f32 %v2667, %v2681
      %v2706 = vmul.f32 %v2668, %v2681
      %v2707 = vmul.f32 %v2669, %v2681
      %v2708 = vmul.f32 %v2670, %v2681
      %v2709 = vmul.f32 %v2671, %v2681
      %v2710 = vmul.f32 %v2672, %v2681
      %v2711 = vmul.f32 %v2673, %v2681
      %v2712 = vmul.f32 %v2674, %v2681
      %v2713 = vmul.f32 %v2675, %v2681
      %v2714 = vmul.f32 %v2676, %v2681
      %v2716 = vlaneseq
      %v2717 = vshrl.u32 %v2716, 7
      %v2718 = vsub.s32 0, %v2717
      %v2719 = vrot.slane %v2644, %v2718
      %v2721 = vadd.f32 %v2683, %v2719
      %v2722 = vadd.f32 %v2684, %v2719
      %v2723 = vadd.f32 %v2685, %v2719
      %v2724 = vadd.f32 %v2686, %v2719
      %v2725 = vadd.f32 %v2687, %v2719
      %v2726 = vadd.f32 %v2688, %v2719
      %v2727 = vadd.f32 %v2689, %v2719
      %v2728 = vadd.f32 %v2690, %v2719
      %v2729 = vadd.f32 %v2691, %v2719
      %v2730 = vadd.f32 %v2692, %v2719
      %v2731 = vadd.f32 %v2693, %v2719
      %v2732 = vadd.f32 %v2694, %v2719
      %v2733 = vadd.f32 %v2695, %v2719
      %v2734 = vadd.f32 %v2696, %v2719
      %v2735 = vadd.f32 %v2697, %v2719
      %v2736 = vadd.f32 %v2698, %v2719
      %v2737 = vadd.f32 %v2699, %v2719
      %v2738 = vadd.f32 %v2700, %v2719
      %v2739 = vadd.f32 %v2701, %v2719
      %v2740 = vadd.f32 %v2702, %v2719
      %v2741 = vadd.f32 %v2703, %v2719
      %v2742 = vadd.f32 %v2704, %v2719
      %v2743 = vadd.f32 %v2705, %v2719
      %v2744 = vadd.f32 %v2706, %v2719
      %v2745 = vadd.f32 %v2707, %v2719
      %v2746 = vadd.f32 %v2708, %v2719
      %v2747 = vadd.f32 %v2709, %v2719
      %v2748 = vadd.f32 %v2710, %v2719
      %v2749 = vadd.f32 %v2711, %v2719
      %v2750 = vadd.f32 %v2712, %v2719
      %v2751 = vadd.f32 %v2713, %v2719
      %v2752 = vadd.f32 %v2714, %v2719
      %vm2753 = vcmp.ge.f32.partialorder %v2721, 0.0
      %vm2754 = vcmp.ge.f32.partialorder %v2722, 0.0
      %vm2755 = vcmp.ge.f32.partialorder %v2723, 0.0
      %vm2756 = vcmp.ge.f32.partialorder %v2724, 0.0
      %vm2757 = vcmp.ge.f32.partialorder %v2725, 0.0
      %vm2758 = vcmp.ge.f32.partialorder %v2726, 0.0
      %vm2759 = vcmp.ge.f32.partialorder %v2727, 0.0
      %vm2760 = vcmp.ge.f32.partialorder %v2728, 0.0
      %vm2761 = vcmp.ge.f32.partialorder %v2729, 0.0
      %vm2762 = vcmp.ge.f32.partialorder %v2730, 0.0
      %vm2763 = vcmp.ge.f32.partialorder %v2731, 0.0
      %vm2764 = vcmp.ge.f32.partialorder %v2732, 0.0
      %vm2765 = vcmp.ge.f32.partialorder %v2733, 0.0
      %vm2766 = vcmp.ge.f32.partialorder %v2734, 0.0
      %vm2767 = vcmp.ge.f32.partialorder %v2735, 0.0
      %vm2768 = vcmp.ge.f32.partialorder %v2736, 0.0
      %vm2769 = vcmp.ge.f32.partialorder %v2737, 0.0
      %vm2770 = vcmp.ge.f32.partialorder %v2738, 0.0
      %vm2771 = vcmp.ge.f32.partialorder %v2739, 0.0
      %vm2772 = vcmp.ge.f32.partialorder %v2740, 0.0
      %vm2773 = vcmp.ge.f32.partialorder %v2741, 0.0
      %vm2774 = vcmp.ge.f32.partialorder %v2742, 0.0
      %vm2775 = vcmp.ge.f32.partialorder %v2743, 0.0
      %vm2776 = vcmp.ge.f32.partialorder %v2744, 0.0
      %vm2777 = vcmp.ge.f32.partialorder %v2745, 0.0
      %vm2778 = vcmp.ge.f32.partialorder %v2746, 0.0
      %vm2779 = vcmp.ge.f32.partialorder %v2747, 0.0
      %vm2780 = vcmp.ge.f32.partialorder %v2748, 0.0
      %vm2781 = vcmp.ge.f32.partialorder %v2749, 0.0
      %vm2782 = vcmp.ge.f32.partialorder %v2750, 0.0
      %vm2783 = vcmp.ge.f32.partialorder %v2751, 0.0
      %vm2784 = vcmp.ge.f32.partialorder %v2752, 0.0
      %v2785 = vmul.f32 %v2721, 0.01
      %v2786 = vmul.f32 %v2722, 0.01
      %v2787 = vmul.f32 %v2723, 0.01
      %v2788 = vmul.f32 %v2724, 0.01
      %v2789 = vmul.f32 %v2725, 0.01
      %v2790 = vmul.f32 %v2726, 0.01
      %v2791 = vmul.f32 %v2727, 0.01
      %v2792 = vmul.f32 %v2728, 0.01
      %v2793 = vmul.f32 %v2729, 0.01
      %v2794 = vmul.f32 %v2730, 0.01
      %v2795 = vmul.f32 %v2731, 0.01
      %v2796 = vmul.f32 %v2732, 0.01
      %v2797 = vmul.f32 %v2733, 0.01
      %v2798 = vmul.f32 %v2734, 0.01
      %v2799 = vmul.f32 %v2735, 0.01
      %v2800 = vmul.f32 %v2736, 0.01
      %v2801 = vmul.f32 %v2737, 0.01
      %v2802 = vmul.f32 %v2738, 0.01
      %v2803 = vmul.f32 %v2739, 0.01
      %v2804 = vmul.f32 %v2740, 0.01
      %v2805 = vmul.f32 %v2741, 0.01
      %v2806 = vmul.f32 %v2742, 0.01
      %v2807 = vmul.f32 %v2743, 0.01
      %v2808 = vmul.f32 %v2744, 0.01
      %v2809 = vmul.f32 %v2745, 0.01
      %v2810 = vmul.f32 %v2746, 0.01
      %v2811 = vmul.f32 %v2747, 0.01
      %v2812 = vmul.f32 %v2748, 0.01
      %v2813 = vmul.f32 %v2749, 0.01
      %v2814 = vmul.f32 %v2750, 0.01
      %v2815 = vmul.f32 %v2751, 0.01
      %v2816 = vmul.f32 %v2752, 0.01
      %v2817 = vsel %vm2753, %v2721, %v2785
      %v2818 = vsel %vm2754, %v2722, %v2786
      %v2819 = vsel %vm2755, %v2723, %v2787
      %v2820 = vsel %vm2756, %v2724, %v2788
      %v2821 = vsel %vm2757, %v2725, %v2789
      %v2822 = vsel %vm2758, %v2726, %v2790
      %v2823 = vsel %vm2759, %v2727, %v2791
      %v2824 = vsel %vm2760, %v2728, %v2792
      %v2825 = vsel %vm2761, %v2729, %v2793
      %v2826 = vsel %vm2762, %v2730, %v2794
      %v2827 = vsel %vm2763, %v2731, %v2795
      %v2828 = vsel %vm2764, %v2732, %v2796
      %v2829 = vsel %vm2765, %v2733, %v2797
      %v2830 = vsel %vm2766, %v2734, %v2798
      %v2831 = vsel %vm2767, %v2735, %v2799
      %v2832 = vsel %vm2768, %v2736, %v2800
      %v2833 = vsel %vm2769, %v2737, %v2801
      %v2834 = vsel %vm2770, %v2738, %v2802
      %v2835 = vsel %vm2771, %v2739, %v2803
      %v2836 = vsel %vm2772, %v2740, %v2804
      %v2837 = vsel %vm2773, %v2741, %v2805
      %v2838 = vsel %vm2774, %v2742, %v2806
      %v2839 = vsel %vm2775, %v2743, %v2807
      %v2840 = vsel %vm2776, %v2744, %v2808
      %v2841 = vsel %vm2777, %v2745, %v2809
      %v2842 = vsel %vm2778, %v2746, %v2810
      %v2843 = vsel %vm2779, %v2747, %v2811
      %v2844 = vsel %vm2780, %v2748, %v2812
      %v2845 = vsel %vm2781, %v2749, %v2813
      %v2846 = vsel %vm2782, %v2750, %v2814
      %v2847 = vsel %vm2783, %v2751, %v2815
      %v2848 = vsel %vm2784, %v2752, %v2816
      %2849 = vst.msk [vmem:[%s2600 + $0x1] sm:$0xff] %vm400, %v2817
      %2850 = vst.msk [vmem:[%s2600 + $0x9] sm:$0xff] %vm400, %v2818
      %2851 = vst.msk [vmem:[%s2600 + $0x19] sm:$0xff] %vm400, %v2819
      %2852 = vst.msk [vmem:[%s2600 + $0x21] sm:$0xff] %vm400, %v2820
      %2853 = vst.msk [vmem:[%s2600 + $0x31] sm:$0xff] %vm400, %v2821
      %2854 = vst.msk [vmem:[%s2600 + $0x39] sm:$0xff] %vm400, %v2822
      %2855 = vst.msk [vmem:[%s2600 + $0x49] sm:$0xff] %vm400, %v2823
      %2856 = vst.msk [vmem:[%s2600 + $0x51] sm:$0xff] %vm400, %v2824
      %2857 = vst.msk [vmem:[%s2600 + $0x61] sm:$0xff] %vm400, %v2825
      %2858 = vst.msk [vmem:[%s2600 + $0x69] sm:$0xff] %vm400, %v2826
      %2859 = vst.msk [vmem:[%s2600 + $0x79] sm:$0xff] %vm400, %v2827
      %2860 = vst.msk [vmem:[%s2600 + $0x81] sm:$0xff] %vm400, %v2828
      %2861 = vst.msk [vmem:[%s2600 + $0x91] sm:$0xff] %vm400, %v2829
      %2862 = vst.msk [vmem:[%s2600 + $0x99] sm:$0xff] %vm400, %v2830
      %2863 = vst.msk [vmem:[%s2600 + $0xa9] sm:$0xff] %vm400, %v2831
      %2864 = vst.msk [vmem:[%s2600 + $0xb1] sm:$0xff] %vm400, %v2832
      %2865 = vst.msk [vmem:[%s2600 + $0xc1] sm:$0xff] %vm400, %v2833
      %2866 = vst.msk [vmem:[%s2600 + $0xc9] sm:$0xff] %vm400, %v2834
      %2867 = vst.msk [vmem:[%s2600 + $0xd9] sm:$0xff] %vm400, %v2835
      %2868 = vst.msk [vmem:[%s2600 + $0xe1] sm:$0xff] %vm400, %v2836
      %2869 = vst.msk [vmem:[%s2600 + $0xf1] sm:$0xff] %vm400, %v2837
      %2870 = vst.msk [vmem:[%s2600 + $0xf9] sm:$0xff] %vm400, %v2838
      %2871 = vst.msk [vmem:[%s2600 + $0x109] sm:$0xff] %vm400, %v2839
      %2872 = vst.msk [vmem:[%s2600 + $0x111] sm:$0xff] %vm400, %v2840
      %2873 = vst.msk [vmem:[%s2600 + $0x121] sm:$0xff] %vm400, %v2841
      %2874 = vst.msk [vmem:[%s2600 + $0x129] sm:$0xff] %vm400, %v2842
      %2875 = vst.msk [vmem:[%s2600 + $0x139] sm:$0xff] %vm400, %v2843
      %2876 = vst.msk [vmem:[%s2600 + $0x141] sm:$0xff] %vm400, %v2844
      %2877 = vst.msk [vmem:[%s2600 + $0x151] sm:$0xff] %vm400, %v2845
      %2878 = vst.msk [vmem:[%s2600 + $0x159] sm:$0xff] %vm400, %v2846
      %2879 = vst.msk [vmem:[%s2600 + $0x169] sm:$0xff] %vm400, %v2847
      %2880 = vst.msk [vmem:[%s2600 + $0x171] sm:$0xff] %vm400, %v2848
      %v2881 = vld [vmem:[%s4] sm:$0xff]
      %v2882 = vld [vmem:[%s4 + $0x8] sm:$0xff]
      %v2883 = vld [vmem:[%s4 + $0x10] sm:$0xff]
      %v2884 = vld [vmem:[%s4 + $0x18] sm:$0xff]
      %v2885 = vld [vmem:[%s4 + $0x20] sm:$0xff]
      %v2886 = vld [vmem:[%s4 + $0x28] sm:$0xff]
      %v2887 = vld [vmem:[%s4 + $0x30] sm:$0xff]
      %v2888 = vld [vmem:[%s4 + $0x38] sm:$0xff]
      %v2889 = vld [vmem:[%s4 + $0x40] sm:$0xff]
      %v2890 = vld [vmem:[#allocation4] sm:$0xff]
      %v2891 = vld [vmem:[#allocation4 + $0x8] sm:$0xff]
      %v2892 = vld [vmem:[#allocation4 + $0x18] sm:$0xff]
      %v2893 = vld [vmem:[#allocation4 + $0x20] sm:$0xff]
      %v2894 = vld [vmem:[#allocation4 + $0x30] sm:$0xff]
      %v2895 = vld [vmem:[#allocation4 + $0x38] sm:$0xff]
      %v2896 = vld [vmem:[#allocation4 + $0x48] sm:$0xff]
      %v2897 = vld [vmem:[#allocation4 + $0x50] sm:$0xff]
      %v2898 = vld [vmem:[#allocation4 + $0x60] sm:$0xff]
      %v2899 = vld [vmem:[#allocation4 + $0x68] sm:$0xff]
      %v2900 = vld [vmem:[#allocation4 + $0x78] sm:$0xff]
      %v2901 = vld [vmem:[#allocation4 + $0x80] sm:$0xff]
      %v2902 = vld [vmem:[#allocation4 + $0x90] sm:$0xff]
      %v2903 = vld [vmem:[#allocation4 + $0x98] sm:$0xff]
      %v2904 = vld [vmem:[#allocation4 + $0xa8] sm:$0xff]
      %v2905 = vld [vmem:[#allocation4 + $0xb0] sm:$0xff]
      %v2906 = vld [vmem:[#allocation4 + $0xc0] sm:$0xff]
      %v2907 = vld [vmem:[#allocation4 + $0xc8] sm:$0xff]
      %v2908 = vld [vmem:[#allocation4 + $0xd8] sm:$0xff]
      %v2909 = vld [vmem:[#allocation4 + $0xe0] sm:$0xff]
      %v2910 = vld [vmem:[#allocation4 + $0xf0] sm:$0xff]
      %v2911 = vld [vmem:[#allocation4 + $0xf8] sm:$0xff]
      %v2912 = vld [vmem:[#allocation4 + $0x108] sm:$0xff]
      %v2913 = vld [vmem:[#allocation4 + $0x110] sm:$0xff]
      %v2914 = vld [vmem:[#allocation4 + $0x120] sm:$0xff]
      %v2915 = vld [vmem:[#allocation4 + $0x128] sm:$0xff]
      %v2916 = vld [vmem:[#allocation4 + $0x138] sm:$0xff]
      %v2917 = vld [vmem:[#allocation4 + $0x140] sm:$0xff]
      %v2918 = vld [vmem:[#allocation4 + $0x150] sm:$0xff]
      %v2919 = vld [vmem:[#allocation4 + $0x158] sm:$0xff]
      %v2920 = vld [vmem:[#allocation4 + $0x168] sm:$0xff]
      %v2921 = vld [vmem:[#allocation4 + $0x170] sm:$0xff]
      %2922 = vst.msk [vmem:[#allocation5] sm:$0xff] %vm400, %v2890
      %2923 = vst.msk [vmem:[#allocation5 + $0x8] sm:$0xff] %vm400, %v2891
      %2924 = vst.msk [vmem:[#allocation5 + $0x10] sm:$0xff] %vm400, %v2892
      %2925 = vst.msk [vmem:[#allocation5 + $0x18] sm:$0xff] %vm400, %v2893
      %2926 = vst.msk [vmem:[#allocation5 + $0x20] sm:$0xff] %vm400, %v2894
      %2927 = vst.msk [vmem:[#allocation5 + $0x28] sm:$0xff] %vm400, %v2895
      %2928 = vst.msk [vmem:[#allocation5 + $0x30] sm:$0xff] %vm400, %v2896
      %2929 = vst.msk [vmem:[#allocation5 + $0x38] sm:$0xff] %vm400, %v2897
      %2930 = vst.msk [vmem:[#allocation5 + $0x40] sm:$0xff] %vm400, %v2898
      %2931 = vst.msk [vmem:[#allocation5 + $0x48] sm:$0xff] %vm400, %v2899
      %2932 = vst.msk [vmem:[#allocation5 + $0x50] sm:$0xff] %vm400, %v2900
      %2933 = vst.msk [vmem:[#allocation5 + $0x58] sm:$0xff] %vm400, %v2901
      %2934 = vst.msk [vmem:[#allocation5 + $0x60] sm:$0xff] %vm400, %v2902
      %2935 = vst.msk [vmem:[#allocation5 + $0x68] sm:$0xff] %vm400, %v2903
      %2936 = vst.msk [vmem:[#allocation5 + $0x70] sm:$0xff] %vm400, %v2904
      %2937 = vst.msk [vmem:[#allocation5 + $0x78] sm:$0xff] %vm400, %v2905
      %2938 = vst.msk [vmem:[#allocation5 + $0x80] sm:$0xff] %vm400, %v2906
      %2939 = vst.msk [vmem:[#allocation5 + $0x88] sm:$0xff] %vm400, %v2907
      %2940 = vst.msk [vmem:[#allocation5 + $0x90] sm:$0xff] %vm400, %v2908
      %2941 = vst.msk [vmem:[#allocation5 + $0x98] sm:$0xff] %vm400, %v2909
      %2942 = vst.msk [vmem:[#allocation5 + $0xa0] sm:$0xff] %vm400, %v2910
      %2943 = vst.msk [vmem:[#allocation5 + $0xa8] sm:$0xff] %vm400, %v2911
      %2944 = vst.msk [vmem:[#allocation5 + $0xb0] sm:$0xff] %vm400, %v2912
      %2945 = vst.msk [vmem:[#allocation5 + $0xb8] sm:$0xff] %vm400, %v2913
      %2946 = vst.msk [vmem:[#allocation5 + $0xc0] sm:$0xff] %vm400, %v2914
      %2947 = vst.msk [vmem:[#allocation5 + $0xc8] sm:$0xff] %vm400, %v2915
      %2948 = vst.msk [vmem:[#allocation5 + $0xd0] sm:$0xff] %vm400, %v2916
      %2949 = vst.msk [vmem:[#allocation5 + $0xd8] sm:$0xff] %vm400, %v2917
      %2950 = vst.msk [vmem:[#allocation5 + $0xe0] sm:$0xff] %vm400, %v2918
      %2951 = vst.msk [vmem:[#allocation5 + $0xe8] sm:$0xff] %vm400, %v2919
      %2952 = vst.msk [vmem:[#allocation5 + $0xf0] sm:$0xff] %vm400, %v2920
      %2953 = vst.msk [vmem:[#allocation5 + $0xf8] sm:$0xff] %vm400, %v2921
      %v2954 = vld [vmem:[#allocation4 + $0x1] sm:$0xff]
      %v2955 = vld [vmem:[#allocation4 + $0x9] sm:$0xff]
      %v2956 = vld [vmem:[#allocation4 + $0x19] sm:$0xff]
      %v2957 = vld [vmem:[#allocation4 + $0x21] sm:$0xff]
      %v2958 = vld [vmem:[#allocation4 + $0x31] sm:$0xff]
      %v2959 = vld [vmem:[#allocation4 + $0x39] sm:$0xff]
      %v2960 = vld [vmem:[#allocation4 + $0x49] sm:$0xff]
      %v2961 = vld [vmem:[#allocation4 + $0x51] sm:$0xff]
      %v2962 = vld [vmem:[#allocation4 + $0x61] sm:$0xff]
      %v2963 = vld [vmem:[#allocation4 + $0x69] sm:$0xff]
      %v2964 = vld [vmem:[#allocation4 + $0x79] sm:$0xff]
      %v2965 = vld [vmem:[#allocation4 + $0x81] sm:$0xff]
      %v2966 = vld [vmem:[#allocation4 + $0x91] sm:$0xff]
      %v2967 = vld [vmem:[#allocation4 + $0x99] sm:$0xff]
      %v2968 = vld [vmem:[#allocation4 + $0xa9] sm:$0xff]
      %v2969 = vld [vmem:[#allocation4 + $0xb1] sm:$0xff]
      %v2970 = vld [vmem:[#allocation4 + $0xc1] sm:$0xff]
      %v2971 = vld [vmem:[#allocation4 + $0xc9] sm:$0xff]
      %v2972 = vld [vmem:[#allocation4 + $0xd9] sm:$0xff]
      %v2973 = vld [vmem:[#allocation4 + $0xe1] sm:$0xff]
      %v2974 = vld [vmem:[#allocation4 + $0xf1] sm:$0xff]
      %v2975 = vld [vmem:[#allocation4 + $0xf9] sm:$0xff]
      %v2976 = vld [vmem:[#allocation4 + $0x109] sm:$0xff]
      %v2977 = vld [vmem:[#allocation4 + $0x111] sm:$0xff]
      %v2978 = vld [vmem:[#allocation4 + $0x121] sm:$0xff]
      %v2979 = vld [vmem:[#allocation4 + $0x129] sm:$0xff]
      %v2980 = vld [vmem:[#allocation4 + $0x139] sm:$0xff]
      %v2981 = vld [vmem:[#allocation4 + $0x141] sm:$0xff]
      %v2982 = vld [vmem:[#allocation4 + $0x151] sm:$0xff]
      %v2983 = vld [vmem:[#allocation4 + $0x159] sm:$0xff]
      %v2984 = vld [vmem:[#allocation4 + $0x169] sm:$0xff]
      %v2985 = vld [vmem:[#allocation4 + $0x171] sm:$0xff]
      %3018 = vrot.lane.b32.xlu0 %v2954, 8
      %v3019 = vpop.permute.xlu0 %3018
      %3020 = vrot.lane.b32.xlu0 %v2955, 8
      %v3021 = vpop.permute.xlu0 %3020
      %3022 = vrot.lane.b32.xlu0 %v2956, 8
      %v3023 = vpop.permute.xlu0 %3022
      %3024 = vrot.lane.b32.xlu0 %v2957, 8
      %v3025 = vpop.permute.xlu0 %3024
      %3026 = vrot.lane.b32.xlu0 %v2958, 8
      %v3027 = vpop.permute.xlu0 %3026
      %3028 = vrot.lane.b32.xlu0 %v2959, 8
      %v3029 = vpop.permute.xlu0 %3028
      %3030 = vrot.lane.b32.xlu0 %v2960, 8
      %v3031 = vpop.permute.xlu0 %3030
      %3032 = vrot.lane.b32.xlu0 %v2961, 8
      %v3033 = vpop.permute.xlu0 %3032
      %3034 = vrot.lane.b32.xlu0 %v2962, 8
      %v3035 = vpop.permute.xlu0 %3034
      %3036 = vrot.lane.b32.xlu0 %v2963, 8
      %v3037 = vpop.permute.xlu0 %3036
      %3038 = vrot.lane.b32.xlu0 %v2964, 8
      %v3039 = vpop.permute.xlu0 %3038
      %3040 = vrot.lane.b32.xlu0 %v2965, 8
      %v3041 = vpop.permute.xlu0 %3040
      %3042 = vrot.lane.b32.xlu0 %v2966, 8
      %v3043 = vpop.permute.xlu0 %3042
      %3044 = vrot.lane.b32.xlu0 %v2967, 8
      %v3045 = vpop.permute.xlu0 %3044
      %3046 = vrot.lane.b32.xlu0 %v2968, 8
      %v3047 = vpop.permute.xlu0 %3046
      %3048 = vrot.lane.b32.xlu0 %v2969, 8
      %v3049 = vpop.permute.xlu0 %3048
      %3050 = vrot.lane.b32.xlu0 %v2970, 8
      %v3051 = vpop.permute.xlu0 %3050
      %3052 = vrot.lane.b32.xlu0 %v2971, 8
      %v3053 = vpop.permute.xlu0 %3052
      %3054 = vrot.lane.b32.xlu0 %v2972, 8
      %v3055 = vpop.permute.xlu0 %3054
      %3056 = vrot.lane.b32.xlu0 %v2973, 8
      %v3057 = vpop.permute.xlu0 %3056
      %3058 = vrot.lane.b32.xlu0 %v2974, 8
      %v3059 = vpop.permute.xlu0 %3058
      %3060 = vrot.lane.b32.xlu0 %v2975, 8
      %v3061 = vpop.permute.xlu0 %3060
      %3062 = vrot.lane.b32.xlu0 %v2976, 8
      %v3063 = vpop.permute.xlu0 %3062
      %3064 = vrot.lane.b32.xlu0 %v2977, 8
      %v3065 = vpop.permute.xlu0 %3064
      %3066 = vrot.lane.b32.xlu0 %v2978, 8
      %v3067 = vpop.permute.xlu0 %3066
      %3068 = vrot.lane.b32.xlu0 %v2979, 8
      %v3069 = vpop.permute.xlu0 %3068
      %3070 = vrot.lane.b32.xlu0 %v2980, 8
      %v3071 = vpop.permute.xlu0 %3070
      %3072 = vrot.lane.b32.xlu0 %v2981, 8
      %v3073 = vpop.permute.xlu0 %3072
      %3074 = vrot.lane.b32.xlu0 %v2982, 8
      %v3075 = vpop.permute.xlu0 %3074
      %3076 = vrot.lane.b32.xlu0 %v2983, 8
      %v3077 = vpop.permute.xlu0 %3076
      %3078 = vrot.lane.b32.xlu0 %v2984, 8
      %v3079 = vpop.permute.xlu0 %3078
      %3080 = vrot.lane.b32.xlu0 %v2985, 8
      %v3081 = vpop.permute.xlu0 %3080
      %vm3114 = vcmask 130112
      %3115 = vst.msk [vmem:[#allocation5] sm:$0xff] %vm3114, %v3019
      %3116 = vst.msk [vmem:[#allocation5 + $0x8] sm:$0xff] %vm3114, %v3021
      %3117 = vst.msk [vmem:[#allocation5 + $0x10] sm:$0xff] %vm3114, %v3023
      %3118 = vst.msk [vmem:[#allocation5 + $0x18] sm:$0xff] %vm3114, %v3025
      %3119 = vst.msk [vmem:[#allocation5 + $0x20] sm:$0xff] %vm3114, %v3027
      %3120 = vst.msk [vmem:[#allocation5 + $0x28] sm:$0xff] %vm3114, %v3029
      %3121 = vst.msk [vmem:[#allocation5 + $0x30] sm:$0xff] %vm3114, %v3031
      %3122 = vst.msk [vmem:[#allocation5 + $0x38] sm:$0xff] %vm3114, %v3033
      %3123 = vst.msk [vmem:[#allocation5 + $0x40] sm:$0xff] %vm3114, %v3035
      %3124 = vst.msk [vmem:[#allocation5 + $0x48] sm:$0xff] %vm3114, %v3037
      %3125 = vst.msk [vmem:[#allocation5 + $0x50] sm:$0xff] %vm3114, %v3039
      %3126 = vst.msk [vmem:[#allocation5 + $0x58] sm:$0xff] %vm3114, %v3041
      %3127 = vst.msk [vmem:[#allocation5 + $0x60] sm:$0xff] %vm3114, %v3043
      %3128 = vst.msk [vmem:[#allocation5 + $0x68] sm:$0xff] %vm3114, %v3045
      %3129 = vst.msk [vmem:[#allocation5 + $0x70] sm:$0xff] %vm3114, %v3047
      %3130 = vst.msk [vmem:[#allocation5 + $0x78] sm:$0xff] %vm3114, %v3049
      %3131 = vst.msk [vmem:[#allocation5 + $0x80] sm:$0xff] %vm3114, %v3051
      %3132 = vst.msk [vmem:[#allocation5 + $0x88] sm:$0xff] %vm3114, %v3053
      %3133 = vst.msk [vmem:[#allocation5 + $0x90] sm:$0xff] %vm3114, %v3055
      %3134 = vst.msk [vmem:[#allocation5 + $0x98] sm:$0xff] %vm3114, %v3057
      %3135 = vst.msk [vmem:[#allocation5 + $0xa0] sm:$0xff] %vm3114, %v3059
      %3136 = vst.msk [vmem:[#allocation5 + $0xa8] sm:$0xff] %vm3114, %v3061
      %3137 = vst.msk [vmem:[#allocation5 + $0xb0] sm:$0xff] %vm3114, %v3063
      %3138 = vst.msk [vmem:[#allocation5 + $0xb8] sm:$0xff] %vm3114, %v3065
      %3139 = vst.msk [vmem:[#allocation5 + $0xc0] sm:$0xff] %vm3114, %v3067
      %3140 = vst.msk [vmem:[#allocation5 + $0xc8] sm:$0xff] %vm3114, %v3069
      %3141 = vst.msk [vmem:[#allocation5 + $0xd0] sm:$0xff] %vm3114, %v3071
      %3142 = vst.msk [vmem:[#allocation5 + $0xd8] sm:$0xff] %vm3114, %v3073
      %3143 = vst.msk [vmem:[#allocation5 + $0xe0] sm:$0xff] %vm3114, %v3075
      %3144 = vst.msk [vmem:[#allocation5 + $0xe8] sm:$0xff] %vm3114, %v3077
      %3145 = vst.msk [vmem:[#allocation5 + $0xf0] sm:$0xff] %vm3114, %v3079
      %3146 = vst.msk [vmem:[#allocation5 + $0xf8] sm:$0xff] %vm3114, %v3081
      %v3147 = vld [vmem:[#allocation4 + $0x2] sm:$0xff]
      %v3148 = vld [vmem:[#allocation4 + $0xa] sm:$0xff]
      %v3149 = vld [vmem:[#allocation4 + $0x1a] sm:$0xff]
      %v3150 = vld [vmem:[#allocation4 + $0x22] sm:$0xff]
      %v3151 = vld [vmem:[#allocation4 + $0x32] sm:$0xff]
      %v3152 = vld [vmem:[#allocation4 + $0x3a] sm:$0xff]
      %v3153 = vld [vmem:[#allocation4 + $0x4a] sm:$0xff]
      %v3154 = vld [vmem:[#allocation4 + $0x52] sm:$0xff]
      %v3155 = vld [vmem:[#allocation4 + $0x62] sm:$0xff]
      %v3156 = vld [vmem:[#allocation4 + $0x6a] sm:$0xff]
      %v3157 = vld [vmem:[#allocation4 + $0x7a] sm:$0xff]
      %v3158 = vld [vmem:[#allocation4 + $0x82] sm:$0xff]
      %v3159 = vld [vmem:[#allocation4 + $0x92] sm:$0xff]
      %v3160 = vld [vmem:[#allocation4 + $0x9a] sm:$0xff]
      %v3161 = vld [vmem:[#allocation4 + $0xaa] sm:$0xff]
      %v3162 = vld [vmem:[#allocation4 + $0xb2] sm:$0xff]
      %v3163 = vld [vmem:[#allocation4 + $0xc2] sm:$0xff]
      %v3164 = vld [vmem:[#allocation4 + $0xca] sm:$0xff]
      %v3165 = vld [vmem:[#allocation4 + $0xda] sm:$0xff]
      %v3166 = vld [vmem:[#allocation4 + $0xe2] sm:$0xff]
      %v3167 = vld [vmem:[#allocation4 + $0xf2] sm:$0xff]
      %v3168 = vld [vmem:[#allocation4 + $0xfa] sm:$0xff]
      %v3169 = vld [vmem:[#allocation4 + $0x10a] sm:$0xff]
      %v3170 = vld [vmem:[#allocation4 + $0x112] sm:$0xff]
      %v3171 = vld [vmem:[#allocation4 + $0x122] sm:$0xff]
      %v3172 = vld [vmem:[#allocation4 + $0x12a] sm:$0xff]
      %v3173 = vld [vmem:[#allocation4 + $0x13a] sm:$0xff]
      %v3174 = vld [vmem:[#allocation4 + $0x142] sm:$0xff]
      %v3175 = vld [vmem:[#allocation4 + $0x152] sm:$0xff]
      %v3176 = vld [vmem:[#allocation4 + $0x15a] sm:$0xff]
      %v3177 = vld [vmem:[#allocation4 + $0x16a] sm:$0xff]
      %v3178 = vld [vmem:[#allocation4 + $0x172] sm:$0xff]
      %3211 = vrot.lane.b32.xlu0 %v3147, 16
      %v3212 = vpop.permute.xlu0 %3211
      %3213 = vrot.lane.b32.xlu0 %v3148, 16
      %v3214 = vpop.permute.xlu0 %3213
      %3215 = vrot.lane.b32.xlu0 %v3149, 16
      %v3216 = vpop.permute.xlu0 %3215
      %3217 = vrot.lane.b32.xlu0 %v3150, 16
      %v3218 = vpop.permute.xlu0 %3217
      %3219 = vrot.lane.b32.xlu0 %v3151, 16
      %v3220 = vpop.permute.xlu0 %3219
      %3221 = vrot.lane.b32.xlu0 %v3152, 16
      %v3222 = vpop.permute.xlu0 %3221
      %3223 = vrot.lane.b32.xlu0 %v3153, 16
      %v3224 = vpop.permute.xlu0 %3223
      %3225 = vrot.lane.b32.xlu0 %v3154, 16
      %v3226 = vpop.permute.xlu0 %3225
      %3227 = vrot.lane.b32.xlu0 %v3155, 16
      %v3228 = vpop.permute.xlu0 %3227
      %3229 = vrot.lane.b32.xlu0 %v3156, 16
      %v3230 = vpop.permute.xlu0 %3229
      %3231 = vrot.lane.b32.xlu0 %v3157, 16
      %v3232 = vpop.permute.xlu0 %3231
      %3233 = vrot.lane.b32.xlu0 %v3158, 16
      %v3234 = vpop.permute.xlu0 %3233
      %3235 = vrot.lane.b32.xlu0 %v3159, 16
      %v3236 = vpop.permute.xlu0 %3235
      %3237 = vrot.lane.b32.xlu0 %v3160, 16
      %v3238 = vpop.permute.xlu0 %3237
      %3239 = vrot.lane.b32.xlu0 %v3161, 16
      %v3240 = vpop.permute.xlu0 %3239
      %3241 = vrot.lane.b32.xlu0 %v3162, 16
      %v3242 = vpop.permute.xlu0 %3241
      %3243 = vrot.lane.b32.xlu0 %v3163, 16
      %v3244 = vpop.permute.xlu0 %3243
      %3245 = vrot.lane.b32.xlu0 %v3164, 16
      %v3246 = vpop.permute.xlu0 %3245
      %3247 = vrot.lane.b32.xlu0 %v3165, 16
      %v3248 = vpop.permute.xlu0 %3247
      %3249 = vrot.lane.b32.xlu0 %v3166, 16
      %v3250 = vpop.permute.xlu0 %3249
      %3251 = vrot.lane.b32.xlu0 %v3167, 16
      %v3252 = vpop.permute.xlu0 %3251
      %3253 = vrot.lane.b32.xlu0 %v3168, 16
      %v3254 = vpop.permute.xlu0 %3253
      %3255 = vrot.lane.b32.xlu0 %v3169, 16
      %v3256 = vpop.permute.xlu0 %3255
      %3257 = vrot.lane.b32.xlu0 %v3170, 16
      %v3258 = vpop.permute.xlu0 %3257
      %3259 = vrot.lane.b32.xlu0 %v3171, 16
      %v3260 = vpop.permute.xlu0 %3259
      %3261 = vrot.lane.b32.xlu0 %v3172, 16
      %v3262 = vpop.permute.xlu0 %3261
      %3263 = vrot.lane.b32.xlu0 %v3173, 16
      %v3264 = vpop.permute.xlu0 %3263
      %3265 = vrot.lane.b32.xlu0 %v3174, 16
      %v3266 = vpop.permute.xlu0 %3265
      %3267 = vrot.lane.b32.xlu0 %v3175, 16
      %v3268 = vpop.permute.xlu0 %3267
      %3269 = vrot.lane.b32.xlu0 %v3176, 16
      %v3270 = vpop.permute.xlu0 %3269
      %3271 = vrot.lane.b32.xlu0 %v3177, 16
      %v3272 = vpop.permute.xlu0 %3271
      %3273 = vrot.lane.b32.xlu0 %v3178, 16
      %v3274 = vpop.permute.xlu0 %3273
      %vm3307 = vcmask 195712
      %3308 = vst.msk [vmem:[#allocation5] sm:$0xff] %vm3307, %v3212
      %3309 = vst.msk [vmem:[#allocation5 + $0x8] sm:$0xff] %vm3307, %v3214
      %3310 = vst.msk [vmem:[#allocation5 + $0x10] sm:$0xff] %vm3307, %v3216
      %3311 = vst.msk [vmem:[#allocation5 + $0x18] sm:$0xff] %vm3307, %v3218
      %3312 = vst.msk [vmem:[#allocation5 + $0x20] sm:$0xff] %vm3307, %v3220
      %3313 = vst.msk [vmem:[#allocation5 + $0x28] sm:$0xff] %vm3307, %v3222
      %3314 = vst.msk [vmem:[#allocation5 + $0x30] sm:$0xff] %vm3307, %v3224
      %3315 = vst.msk [vmem:[#allocation5 + $0x38] sm:$0xff] %vm3307, %v3226
      %3316 = vst.msk [vmem:[#allocation5 + $0x40] sm:$0xff] %vm3307, %v3228
      %3317 = vst.msk [vmem:[#allocation5 + $0x48] sm:$0xff] %vm3307, %v3230
      %3318 = vst.msk [vmem:[#allocation5 + $0x50] sm:$0xff] %vm3307, %v3232
      %3319 = vst.msk [vmem:[#allocation5 + $0x58] sm:$0xff] %vm3307, %v3234
      %3320 = vst.msk [vmem:[#allocation5 + $0x60] sm:$0xff] %vm3307, %v3236
      %3321 = vst.msk [vmem:[#allocation5 + $0x68] sm:$0xff] %vm3307, %v3238
      %3322 = vst.msk [vmem:[#allocation5 + $0x70] sm:$0xff] %vm3307, %v3240
      %3323 = vst.msk [vmem:[#allocation5 + $0x78] sm:$0xff] %vm3307, %v3242
      %3324 = vst.msk [vmem:[#allocation5 + $0x80] sm:$0xff] %vm3307, %v3244
      %3325 = vst.msk [vmem:[#allocation5 + $0x88] sm:$0xff] %vm3307, %v3246
      %3326 = vst.msk [vmem:[#allocation5 + $0x90] sm:$0xff] %vm3307, %v3248
      %3327 = vst.msk [vmem:[#allocation5 + $0x98] sm:$0xff] %vm3307, %v3250
      %3328 = vst.msk [vmem:[#allocation5 + $0xa0] sm:$0xff] %vm3307, %v3252
      %3329 = vst.msk [vmem:[#allocation5 + $0xa8] sm:$0xff] %vm3307, %v3254
      %3330 = vst.msk [vmem:[#allocation5 + $0xb0] sm:$0xff] %vm3307, %v3256
      %3331 = vst.msk [vmem:[#allocation5 + $0xb8] sm:$0xff] %vm3307, %v3258
      %3332 = vst.msk [vmem:[#allocation5 + $0xc0] sm:$0xff] %vm3307, %v3260
      %3333 = vst.msk [vmem:[#allocation5 + $0xc8] sm:$0xff] %vm3307, %v3262
      %3334 = vst.msk [vmem:[#allocation5 + $0xd0] sm:$0xff] %vm3307, %v3264
      %3335 = vst.msk [vmem:[#allocation5 + $0xd8] sm:$0xff] %vm3307, %v3266
      %3336 = vst.msk [vmem:[#allocation5 + $0xe0] sm:$0xff] %vm3307, %v3268
      %3337 = vst.msk [vmem:[#allocation5 + $0xe8] sm:$0xff] %vm3307, %v3270
      %3338 = vst.msk [vmem:[#allocation5 + $0xf0] sm:$0xff] %vm3307, %v3272
      %3339 = vst.msk [vmem:[#allocation5 + $0xf8] sm:$0xff] %vm3307, %v3274
      %v3340 = vld [vmem:[%s2600] sm:$0xff]
      %v3341 = vld [vmem:[%s2600 + $0x8] sm:$0xff]
      %v3342 = vld [vmem:[%s2600 + $0x18] sm:$0xff]
      %v3343 = vld [vmem:[%s2600 + $0x20] sm:$0xff]
      %v3344 = vld [vmem:[%s2600 + $0x30] sm:$0xff]
      %v3345 = vld [vmem:[%s2600 + $0x38] sm:$0xff]
      %v3346 = vld [vmem:[%s2600 + $0x48] sm:$0xff]
      %v3347 = vld [vmem:[%s2600 + $0x50] sm:$0xff]
      %v3348 = vld [vmem:[%s2600 + $0x60] sm:$0xff]
      %v3349 = vld [vmem:[%s2600 + $0x68] sm:$0xff]
      %v3350 = vld [vmem:[%s2600 + $0x78] sm:$0xff]
      %v3351 = vld [vmem:[%s2600 + $0x80] sm:$0xff]
      %v3352 = vld [vmem:[%s2600 + $0x90] sm:$0xff]
      %v3353 = vld [vmem:[%s2600 + $0x98] sm:$0xff]
      %v3354 = vld [vmem:[%s2600 + $0xa8] sm:$0xff]
      %v3355 = vld [vmem:[%s2600 + $0xb0] sm:$0xff]
      %v3356 = vld [vmem:[%s2600 + $0xc0] sm:$0xff]
      %v3357 = vld [vmem:[%s2600 + $0xc8] sm:$0xff]
      %v3358 = vld [vmem:[%s2600 + $0xd8] sm:$0xff]
      %v3359 = vld [vmem:[%s2600 + $0xe0] sm:$0xff]
      %v3360 = vld [vmem:[%s2600 + $0xf0] sm:$0xff]
      %v3361 = vld [vmem:[%s2600 + $0xf8] sm:$0xff]
      %v3362 = vld [vmem:[%s2600 + $0x108] sm:$0xff]
      %v3363 = vld [vmem:[%s2600 + $0x110] sm:$0xff]
      %v3364 = vld [vmem:[%s2600 + $0x120] sm:$0xff]
      %v3365 = vld [vmem:[%s2600 + $0x128] sm:$0xff]
      %v3366 = vld [vmem:[%s2600 + $0x138] sm:$0xff]
      %v3367 = vld [vmem:[%s2600 + $0x140] sm:$0xff]
      %v3368 = vld [vmem:[%s2600 + $0x150] sm:$0xff]
      %v3369 = vld [vmem:[%s2600 + $0x158] sm:$0xff]
      %v3370 = vld [vmem:[%s2600 + $0x168] sm:$0xff]
      %v3371 = vld [vmem:[%s2600 + $0x170] sm:$0xff]
      %3404 = vrot.lane.b32.xlu0 %v3340, 24
      %v3405 = vpop.permute.xlu0 %3404
      %3406 = vrot.lane.b32.xlu0 %v3341, 24
      %v3407 = vpop.permute.xlu0 %3406
      %3408 = vrot.lane.b32.xlu0 %v3342, 24
      %v3409 = vpop.permute.xlu0 %3408
      %3410 = vrot.lane.b32.xlu0 %v3343, 24
      %v3411 = vpop.permute.xlu0 %3410
      %3412 = vrot.lane.b32.xlu0 %v3344, 24
      %v3413 = vpop.permute.xlu0 %3412
      %3414 = vrot.lane.b32.xlu0 %v3345, 24
      %v3415 = vpop.permute.xlu0 %3414
      %3416 = vrot.lane.b32.xlu0 %v3346, 24
      %v3417 = vpop.permute.xlu0 %3416
      %3418 = vrot.lane.b32.xlu0 %v3347, 24
      %v3419 = vpop.permute.xlu0 %3418
      %3420 = vrot.lane.b32.xlu0 %v3348, 24
      %v3421 = vpop.permute.xlu0 %3420
      %3422 = vrot.lane.b32.xlu0 %v3349, 24
      %v3423 = vpop.permute.xlu0 %3422
      %3424 = vrot.lane.b32.xlu0 %v3350, 24
      %v3425 = vpop.permute.xlu0 %3424
      %3426 = vrot.lane.b32.xlu0 %v3351, 24
      %v3427 = vpop.permute.xlu0 %3426
      %3428 = vrot.lane.b32.xlu0 %v3352, 24
      %v3429 = vpop.permute.xlu0 %3428
      %3430 = vrot.lane.b32.xlu0 %v3353, 24
      %v3431 = vpop.permute.xlu0 %3430
      %3432 = vrot.lane.b32.xlu0 %v3354, 24
      %v3433 = vpop.permute.xlu0 %3432
      %3434 = vrot.lane.b32.xlu0 %v3355, 24
      %v3435 = vpop.permute.xlu0 %3434
      %3436 = vrot.lane.b32.xlu0 %v3356, 24
      %v3437 = vpop.permute.xlu0 %3436
      %3438 = vrot.lane.b32.xlu0 %v3357, 24
      %v3439 = vpop.permute.xlu0 %3438
      %3440 = vrot.lane.b32.xlu0 %v3358, 24
      %v3441 = vpop.permute.xlu0 %3440
      %3442 = vrot.lane.b32.xlu0 %v3359, 24
      %v3443 = vpop.permute.xlu0 %3442
      %3444 = vrot.lane.b32.xlu0 %v3360, 24
      %v3445 = vpop.permute.xlu0 %3444
      %3446 = vrot.lane.b32.xlu0 %v3361, 24
      %v3447 = vpop.permute.xlu0 %3446
      %3448 = vrot.lane.b32.xlu0 %v3362, 24
      %v3449 = vpop.permute.xlu0 %3448
      %3450 = vrot.lane.b32.xlu0 %v3363, 24
      %v3451 = vpop.permute.xlu0 %3450
      %3452 = vrot.lane.b32.xlu0 %v3364, 24
      %v3453 = vpop.permute.xlu0 %3452
      %3454 = vrot.lane.b32.xlu0 %v3365, 24
      %v3455 = vpop.permute.xlu0 %3454
      %3456 = vrot.lane.b32.xlu0 %v3366, 24
      %v3457 = vpop.permute.xlu0 %3456
      %3458 = vrot.lane.b32.xlu0 %v3367, 24
      %v3459 = vpop.permute.xlu0 %3458
      %3460 = vrot.lane.b32.xlu0 %v3368, 24
      %v3461 = vpop.permute.xlu0 %3460
      %3462 = vrot.lane.b32.xlu0 %v3369, 24
      %v3463 = vpop.permute.xlu0 %3462
      %3464 = vrot.lane.b32.xlu0 %v3370, 24
      %v3465 = vpop.permute.xlu0 %3464
      %3466 = vrot.lane.b32.xlu0 %v3371, 24
      %v3467 = vpop.permute.xlu0 %3466
      %vm3500 = vcmask 261312
      %3501 = vst.msk [vmem:[#allocation5] sm:$0xff] %vm3500, %v3405
      %3502 = vst.msk [vmem:[#allocation5 + $0x8] sm:$0xff] %vm3500, %v3407
      %3503 = vst.msk [vmem:[#allocation5 + $0x10] sm:$0xff] %vm3500, %v3409
      %3504 = vst.msk [vmem:[#allocation5 + $0x18] sm:$0xff] %vm3500, %v3411
      %3505 = vst.msk [vmem:[#allocation5 + $0x20] sm:$0xff] %vm3500, %v3413
      %3506 = vst.msk [vmem:[#allocation5 + $0x28] sm:$0xff] %vm3500, %v3415
      %3507 = vst.msk [vmem:[#allocation5 + $0x30] sm:$0xff] %vm3500, %v3417
      %3508 = vst.msk [vmem:[#allocation5 + $0x38] sm:$0xff] %vm3500, %v3419
      %3509 = vst.msk [vmem:[#allocation5 + $0x40] sm:$0xff] %vm3500, %v3421
      %3510 = vst.msk [vmem:[#allocation5 + $0x48] sm:$0xff] %vm3500, %v3423
      %3511 = vst.msk [vmem:[#allocation5 + $0x50] sm:$0xff] %vm3500, %v3425
      %3512 = vst.msk [vmem:[#allocation5 + $0x58] sm:$0xff] %vm3500, %v3427
      %3513 = vst.msk [vmem:[#allocation5 + $0x60] sm:$0xff] %vm3500, %v3429
      %3514 = vst.msk [vmem:[#allocation5 + $0x68] sm:$0xff] %vm3500, %v3431
      %3515 = vst.msk [vmem:[#allocation5 + $0x70] sm:$0xff] %vm3500, %v3433
      %3516 = vst.msk [vmem:[#allocation5 + $0x78] sm:$0xff] %vm3500, %v3435
      %3517 = vst.msk [vmem:[#allocation5 + $0x80] sm:$0xff] %vm3500, %v3437
      %3518 = vst.msk [vmem:[#allocation5 + $0x88] sm:$0xff] %vm3500, %v3439
      %3519 = vst.msk [vmem:[#allocation5 + $0x90] sm:$0xff] %vm3500, %v3441
      %3520 = vst.msk [vmem:[#allocation5 + $0x98] sm:$0xff] %vm3500, %v3443
      %3521 = vst.msk [vmem:[#allocation5 + $0xa0] sm:$0xff] %vm3500, %v3445
      %3522 = vst.msk [vmem:[#allocation5 + $0xa8] sm:$0xff] %vm3500, %v3447
      %3523 = vst.msk [vmem:[#allocation5 + $0xb0] sm:$0xff] %vm3500, %v3449
      %3524 = vst.msk [vmem:[#allocation5 + $0xb8] sm:$0xff] %vm3500, %v3451
      %3525 = vst.msk [vmem:[#allocation5 + $0xc0] sm:$0xff] %vm3500, %v3453
      %3526 = vst.msk [vmem:[#allocation5 + $0xc8] sm:$0xff] %vm3500, %v3455
      %3527 = vst.msk [vmem:[#allocation5 + $0xd0] sm:$0xff] %vm3500, %v3457
      %3528 = vst.msk [vmem:[#allocation5 + $0xd8] sm:$0xff] %vm3500, %v3459
      %3529 = vst.msk [vmem:[#allocation5 + $0xe0] sm:$0xff] %vm3500, %v3461
      %3530 = vst.msk [vmem:[#allocation5 + $0xe8] sm:$0xff] %vm3500, %v3463
      %3531 = vst.msk [vmem:[#allocation5 + $0xf0] sm:$0xff] %vm3500, %v3465
      %3532 = vst.msk [vmem:[#allocation5 + $0xf8] sm:$0xff] %vm3500, %v3467
      %v3533 = vld [vmem:[%s2600 + $0x1] sm:$0xff]
      %v3534 = vld [vmem:[%s2600 + $0x9] sm:$0xff]
      %v3535 = vld [vmem:[%s2600 + $0x19] sm:$0xff]
      %v3536 = vld [vmem:[%s2600 + $0x21] sm:$0xff]
      %v3537 = vld [vmem:[%s2600 + $0x31] sm:$0xff]
      %v3538 = vld [vmem:[%s2600 + $0x39] sm:$0xff]
      %v3539 = vld [vmem:[%s2600 + $0x49] sm:$0xff]
      %v3540 = vld [vmem:[%s2600 + $0x51] sm:$0xff]
      %v3541 = vld [vmem:[%s2600 + $0x61] sm:$0xff]
      %v3542 = vld [vmem:[%s2600 + $0x69] sm:$0xff]
      %v3543 = vld [vmem:[%s2600 + $0x79] sm:$0xff]
      %v3544 = vld [vmem:[%s2600 + $0x81] sm:$0xff]
      %v3545 = vld [vmem:[%s2600 + $0x91] sm:$0xff]
      %v3546 = vld [vmem:[%s2600 + $0x99] sm:$0xff]
      %v3547 = vld [vmem:[%s2600 + $0xa9] sm:$0xff]
      %v3548 = vld [vmem:[%s2600 + $0xb1] sm:$0xff]
      %v3549 = vld [vmem:[%s2600 + $0xc1] sm:$0xff]
      %v3550 = vld [vmem:[%s2600 + $0xc9] sm:$0xff]
      %v3551 = vld [vmem:[%s2600 + $0xd9] sm:$0xff]
      %v3552 = vld [vmem:[%s2600 + $0xe1] sm:$0xff]
      %v3553 = vld [vmem:[%s2600 + $0xf1] sm:$0xff]
      %v3554 = vld [vmem:[%s2600 + $0xf9] sm:$0xff]
      %v3555 = vld [vmem:[%s2600 + $0x109] sm:$0xff]
      %v3556 = vld [vmem:[%s2600 + $0x111] sm:$0xff]
      %v3557 = vld [vmem:[%s2600 + $0x121] sm:$0xff]
      %v3558 = vld [vmem:[%s2600 + $0x129] sm:$0xff]
      %v3559 = vld [vmem:[%s2600 + $0x139] sm:$0xff]
      %v3560 = vld [vmem:[%s2600 + $0x141] sm:$0xff]
      %v3561 = vld [vmem:[%s2600 + $0x151] sm:$0xff]
      %v3562 = vld [vmem:[%s2600 + $0x159] sm:$0xff]
      %v3563 = vld [vmem:[%s2600 + $0x169] sm:$0xff]
      %v3564 = vld [vmem:[%s2600 + $0x171] sm:$0xff]
      %3597 = vrot.lane.b32.xlu0 %v3533, 32
      %v3598 = vpop.permute.xlu0 %3597
      %3599 = vrot.lane.b32.xlu0 %v3534, 32
      %v3600 = vpop.permute.xlu0 %3599
      %3601 = vrot.lane.b32.xlu0 %v3535, 32
      %v3602 = vpop.permute.xlu0 %3601
      %3603 = vrot.lane.b32.xlu0 %v3536, 32
      %v3604 = vpop.permute.xlu0 %3603
      %3605 = vrot.lane.b32.xlu0 %v3537, 32
      %v3606 = vpop.permute.xlu0 %3605
      %3607 = vrot.lane.b32.xlu0 %v3538, 32
      %v3608 = vpop.permute.xlu0 %3607
      %3609 = vrot.lane.b32.xlu0 %v3539, 32
      %v3610 = vpop.permute.xlu0 %3609
      %3611 = vrot.lane.b32.xlu0 %v3540, 32
      %v3612 = vpop.permute.xlu0 %3611
      %3613 = vrot.lane.b32.xlu0 %v3541, 32
      %v3614 = vpop.permute.xlu0 %3613
      %3615 = vrot.lane.b32.xlu0 %v3542, 32
      %v3616 = vpop.permute.xlu0 %3615
      %3617 = vrot.lane.b32.xlu0 %v3543, 32
      %v3618 = vpop.permute.xlu0 %3617
      %3619 = vrot.lane.b32.xlu0 %v3544, 32
      %v3620 = vpop.permute.xlu0 %3619
      %3621 = vrot.lane.b32.xlu0 %v3545, 32
      %v3622 = vpop.permute.xlu0 %3621
      %3623 = vrot.lane.b32.xlu0 %v3546, 32
      %v3624 = vpop.permute.xlu0 %3623
      %3625 = vrot.lane.b32.xlu0 %v3547, 32
      %v3626 = vpop.permute.xlu0 %3625
      %3627 = vrot.lane.b32.xlu0 %v3548, 32
      %v3628 = vpop.permute.xlu0 %3627
      %3629 = vrot.lane.b32.xlu0 %v3549, 32
      %v3630 = vpop.permute.xlu0 %3629
      %3631 = vrot.lane.b32.xlu0 %v3550, 32
      %v3632 = vpop.permute.xlu0 %3631
      %3633 = vrot.lane.b32.xlu0 %v3551, 32
      %v3634 = vpop.permute.xlu0 %3633
      %3635 = vrot.lane.b32.xlu0 %v3552, 32
      %v3636 = vpop.permute.xlu0 %3635
      %3637 = vrot.lane.b32.xlu0 %v3553, 32
      %v3638 = vpop.permute.xlu0 %3637
      %3639 = vrot.lane.b32.xlu0 %v3554, 32
      %v3640 = vpop.permute.xlu0 %3639
      %3641 = vrot.lane.b32.xlu0 %v3555, 32
      %v3642 = vpop.permute.xlu0 %3641
      %3643 = vrot.lane.b32.xlu0 %v3556, 32
      %v3644 = vpop.permute.xlu0 %3643
      %3645 = vrot.lane.b32.xlu0 %v3557, 32
      %v3646 = vpop.permute.xlu0 %3645
      %3647 = vrot.lane.b32.xlu0 %v3558, 32
      %v3648 = vpop.permute.xlu0 %3647
      %3649 = vrot.lane.b32.xlu0 %v3559, 32
      %v3650 = vpop.permute.xlu0 %3649
      %3651 = vrot.lane.b32.xlu0 %v3560, 32
      %v3652 = vpop.permute.xlu0 %3651
      %3653 = vrot.lane.b32.xlu0 %v3561, 32
      %v3654 = vpop.permute.xlu0 %3653
      %3655 = vrot.lane.b32.xlu0 %v3562, 32
      %v3656 = vpop.permute.xlu0 %3655
      %3657 = vrot.lane.b32.xlu0 %v3563, 32
      %v3658 = vpop.permute.xlu0 %3657
      %3659 = vrot.lane.b32.xlu0 %v3564, 32
      %v3660 = vpop.permute.xlu0 %3659
      %vm3693 = vcmask 326912
      %3694 = vst.msk [vmem:[#allocation5] sm:$0xff] %vm3693, %v3598
      %3695 = vst.msk [vmem:[#allocation5 + $0x8] sm:$0xff] %vm3693, %v3600
      %3696 = vst.msk [vmem:[#allocation5 + $0x10] sm:$0xff] %vm3693, %v3602
      %3697 = vst.msk [vmem:[#allocation5 + $0x18] sm:$0xff] %vm3693, %v3604
      %3698 = vst.msk [vmem:[#allocation5 + $0x20] sm:$0xff] %vm3693, %v3606
      %3699 = vst.msk [vmem:[#allocation5 + $0x28] sm:$0xff] %vm3693, %v3608
      %3700 = vst.msk [vmem:[#allocation5 + $0x30] sm:$0xff] %vm3693, %v3610
      %3701 = vst.msk [vmem:[#allocation5 + $0x38] sm:$0xff] %vm3693, %v3612
      %3702 = vst.msk [vmem:[#allocation5 + $0x40] sm:$0xff] %vm3693, %v3614
      %3703 = vst.msk [vmem:[#allocation5 + $0x48] sm:$0xff] %vm3693, %v3616
      %3704 = vst.msk [vmem:[#allocation5 + $0x50] sm:$0xff] %vm3693, %v3618
      %3705 = vst.msk [vmem:[#allocation5 + $0x58] sm:$0xff] %vm3693, %v3620
      %3706 = vst.msk [vmem:[#allocation5 + $0x60] sm:$0xff] %vm3693, %v3622
      %3707 = vst.msk [vmem:[#allocation5 + $0x68] sm:$0xff] %vm3693, %v3624
      %3708 = vst.msk [vmem:[#allocation5 + $0x70] sm:$0xff] %vm3693, %v3626
      %3709 = vst.msk [vmem:[#allocation5 + $0x78] sm:$0xff] %vm3693, %v3628
      %3710 = vst.msk [vmem:[#allocation5 + $0x80] sm:$0xff] %vm3693, %v3630
      %3711 = vst.msk [vmem:[#allocation5 + $0x88] sm:$0xff] %vm3693, %v3632
      %3712 = vst.msk [vmem:[#allocation5 + $0x90] sm:$0xff] %vm3693, %v3634
      %3713 = vst.msk [vmem:[#allocation5 + $0x98] sm:$0xff] %vm3693, %v3636
      %3714 = vst.msk [vmem:[#allocation5 + $0xa0] sm:$0xff] %vm3693, %v3638
      %3715 = vst.msk [vmem:[#allocation5 + $0xa8] sm:$0xff] %vm3693, %v3640
      %3716 = vst.msk [vmem:[#allocation5 + $0xb0] sm:$0xff] %vm3693, %v3642
      %3717 = vst.msk [vmem:[#allocation5 + $0xb8] sm:$0xff] %vm3693, %v3644
      %3718 = vst.msk [vmem:[#allocation5 + $0xc0] sm:$0xff] %vm3693, %v3646
      %3719 = vst.msk [vmem:[#allocation5 + $0xc8] sm:$0xff] %vm3693, %v3648
      %3720 = vst.msk [vmem:[#allocation5 + $0xd0] sm:$0xff] %vm3693, %v3650
      %3721 = vst.msk [vmem:[#allocation5 + $0xd8] sm:$0xff] %vm3693, %v3652
      %3722 = vst.msk [vmem:[#allocation5 + $0xe0] sm:$0xff] %vm3693, %v3654
      %3723 = vst.msk [vmem:[#allocation5 + $0xe8] sm:$0xff] %vm3693, %v3656
      %3724 = vst.msk [vmem:[#allocation5 + $0xf0] sm:$0xff] %vm3693, %v3658
      %3725 = vst.msk [vmem:[#allocation5 + $0xf8] sm:$0xff] %vm3693, %v3660
      %v3726 = vld [vmem:[%s2600 + $0x2] sm:$0xff]
      %v3727 = vld [vmem:[%s2600 + $0xa] sm:$0xff]
      %v3728 = vld [vmem:[%s2600 + $0x1a] sm:$0xff]
      %v3729 = vld [vmem:[%s2600 + $0x22] sm:$0xff]
      %v3730 = vld [vmem:[%s2600 + $0x32] sm:$0xff]
      %v3731 = vld [vmem:[%s2600 + $0x3a] sm:$0xff]
      %v3732 = vld [vmem:[%s2600 + $0x4a] sm:$0xff]
      %v3733 = vld [vmem:[%s2600 + $0x52] sm:$0xff]
      %v3734 = vld [vmem:[%s2600 + $0x62] sm:$0xff]
      %v3735 = vld [vmem:[%s2600 + $0x6a] sm:$0xff]
      %v3736 = vld [vmem:[%s2600 + $0x7a] sm:$0xff]
      %v3737 = vld [vmem:[%s2600 + $0x82] sm:$0xff]
      %v3738 = vld [vmem:[%s2600 + $0x92] sm:$0xff]
      %v3739 = vld [vmem:[%s2600 + $0x9a] sm:$0xff]
      %v3740 = vld [vmem:[%s2600 + $0xaa] sm:$0xff]
      %v3741 = vld [vmem:[%s2600 + $0xb2] sm:$0xff]
      %v3742 = vld [vmem:[%s2600 + $0xc2] sm:$0xff]
      %v3743 = vld [vmem:[%s2600 + $0xca] sm:$0xff]
      %v3744 = vld [vmem:[%s2600 + $0xda] sm:$0xff]
      %v3745 = vld [vmem:[%s2600 + $0xe2] sm:$0xff]
      %v3746 = vld [vmem:[%s2600 + $0xf2] sm:$0xff]
      %v3747 = vld [vmem:[%s2600 + $0xfa] sm:$0xff]
      %v3748 = vld [vmem:[%s2600 + $0x10a] sm:$0xff]
      %v3749 = vld [vmem:[%s2600 + $0x112] sm:$0xff]
      %v3750 = vld [vmem:[%s2600 + $0x122] sm:$0xff]
      %v3751 = vld [vmem:[%s2600 + $0x12a] sm:$0xff]
      %v3752 = vld [vmem:[%s2600 + $0x13a] sm:$0xff]
      %v3753 = vld [vmem:[%s2600 + $0x142] sm:$0xff]
      %v3754 = vld [vmem:[%s2600 + $0x152] sm:$0xff]
      %v3755 = vld [vmem:[%s2600 + $0x15a] sm:$0xff]
      %v3756 = vld [vmem:[%s2600 + $0x16a] sm:$0xff]
      %v3757 = vld [vmem:[%s2600 + $0x172] sm:$0xff]
      %3790 = vrot.lane.b32.xlu0 %v3726, 40
      %v3791 = vpop.permute.xlu0 %3790
      %3792 = vrot.lane.b32.xlu0 %v3727, 40
      %v3793 = vpop.permute.xlu0 %3792
      %3794 = vrot.lane.b32.xlu0 %v3728, 40
      %v3795 = vpop.permute.xlu0 %3794
      %3796 = vrot.lane.b32.xlu0 %v3729, 40
      %v3797 = vpop.permute.xlu0 %3796
      %3798 = vrot.lane.b32.xlu0 %v3730, 40
      %v3799 = vpop.permute.xlu0 %3798
      %3800 = vrot.lane.b32.xlu0 %v3731, 40
      %v3801 = vpop.permute.xlu0 %3800
      %3802 = vrot.lane.b32.xlu0 %v3732, 40
      %v3803 = vpop.permute.xlu0 %3802
      %3804 = vrot.lane.b32.xlu0 %v3733, 40
      %v3805 = vpop.permute.xlu0 %3804
      %3806 = vrot.lane.b32.xlu0 %v3734, 40
      %v3807 = vpop.permute.xlu0 %3806
      %3808 = vrot.lane.b32.xlu0 %v3735, 40
      %v3809 = vpop.permute.xlu0 %3808
      %3810 = vrot.lane.b32.xlu0 %v3736, 40
      %v3811 = vpop.permute.xlu0 %3810
      %3812 = vrot.lane.b32.xlu0 %v3737, 40
      %v3813 = vpop.permute.xlu0 %3812
      %3814 = vrot.lane.b32.xlu0 %v3738, 40
      %v3815 = vpop.permute.xlu0 %3814
      %3816 = vrot.lane.b32.xlu0 %v3739, 40
      %v3817 = vpop.permute.xlu0 %3816
      %3818 = vrot.lane.b32.xlu0 %v3740, 40
      %v3819 = vpop.permute.xlu0 %3818
      %3820 = vrot.lane.b32.xlu0 %v3741, 40
      %v3821 = vpop.permute.xlu0 %3820
      %3822 = vrot.lane.b32.xlu0 %v3742, 40
      %v3823 = vpop.permute.xlu0 %3822
      %3824 = vrot.lane.b32.xlu0 %v3743, 40
      %v3825 = vpop.permute.xlu0 %3824
      %3826 = vrot.lane.b32.xlu0 %v3744, 40
      %v3827 = vpop.permute.xlu0 %3826
      %3828 = vrot.lane.b32.xlu0 %v3745, 40
      %v3829 = vpop.permute.xlu0 %3828
      %3830 = vrot.lane.b32.xlu0 %v3746, 40
      %v3831 = vpop.permute.xlu0 %3830
      %3832 = vrot.lane.b32.xlu0 %v3747, 40
      %v3833 = vpop.permute.xlu0 %3832
      %3834 = vrot.lane.b32.xlu0 %v3748, 40
      %v3835 = vpop.permute.xlu0 %3834
      %3836 = vrot.lane.b32.xlu0 %v3749, 40
      %v3837 = vpop.permute.xlu0 %3836
      %3838 = vrot.lane.b32.xlu0 %v3750, 40
      %v3839 = vpop.permute.xlu0 %3838
      %3840 = vrot.lane.b32.xlu0 %v3751, 40
      %v3841 = vpop.permute.xlu0 %3840
      %3842 = vrot.lane.b32.xlu0 %v3752, 40
      %v3843 = vpop.permute.xlu0 %3842
      %3844 = vrot.lane.b32.xlu0 %v3753, 40
      %v3845 = vpop.permute.xlu0 %3844
      %3846 = vrot.lane.b32.xlu0 %v3754, 40
      %v3847 = vpop.permute.xlu0 %3846
      %3848 = vrot.lane.b32.xlu0 %v3755, 40
      %v3849 = vpop.permute.xlu0 %3848
      %3850 = vrot.lane.b32.xlu0 %v3756, 40
      %v3851 = vpop.permute.xlu0 %3850
      %3852 = vrot.lane.b32.xlu0 %v3757, 40
      %v3853 = vpop.permute.xlu0 %3852
      %vm3886 = vcmask 392512
      %3887 = vst.msk [vmem:[#allocation5] sm:$0xff] %vm3886, %v3791
      %3888 = vst.msk [vmem:[#allocation5 + $0x8] sm:$0xff] %vm3886, %v3793
      %3889 = vst.msk [vmem:[#allocation5 + $0x10] sm:$0xff] %vm3886, %v3795
      %3890 = vst.msk [vmem:[#allocation5 + $0x18] sm:$0xff] %vm3886, %v3797
      %3891 = vst.msk [vmem:[#allocation5 + $0x20] sm:$0xff] %vm3886, %v3799
      %3892 = vst.msk [vmem:[#allocation5 + $0x28] sm:$0xff] %vm3886, %v3801
      %3893 = vst.msk [vmem:[#allocation5 + $0x30] sm:$0xff] %vm3886, %v3803
      %3894 = vst.msk [vmem:[#allocation5 + $0x38] sm:$0xff] %vm3886, %v3805
      %3895 = vst.msk [vmem:[#allocation5 + $0x40] sm:$0xff] %vm3886, %v3807
      %3896 = vst.msk [vmem:[#allocation5 + $0x48] sm:$0xff] %vm3886, %v3809
      %3897 = vst.msk [vmem:[#allocation5 + $0x50] sm:$0xff] %vm3886, %v3811
      %3898 = vst.msk [vmem:[#allocation5 + $0x58] sm:$0xff] %vm3886, %v3813
      %3899 = vst.msk [vmem:[#allocation5 + $0x60] sm:$0xff] %vm3886, %v3815
      %3900 = vst.msk [vmem:[#allocation5 + $0x68] sm:$0xff] %vm3886, %v3817
      %3901 = vst.msk [vmem:[#allocation5 + $0x70] sm:$0xff] %vm3886, %v3819
      %3902 = vst.msk [vmem:[#allocation5 + $0x78] sm:$0xff] %vm3886, %v3821
      %3903 = vst.msk [vmem:[#allocation5 + $0x80] sm:$0xff] %vm3886, %v3823
      %3904 = vst.msk [vmem:[#allocation5 + $0x88] sm:$0xff] %vm3886, %v3825
      %3905 = vst.msk [vmem:[#allocation5 + $0x90] sm:$0xff] %vm3886, %v3827
      %3906 = vst.msk [vmem:[#allocation5 + $0x98] sm:$0xff] %vm3886, %v3829
      %3907 = vst.msk [vmem:[#allocation5 + $0xa0] sm:$0xff] %vm3886, %v3831
      %3908 = vst.msk [vmem:[#allocation5 + $0xa8] sm:$0xff] %vm3886, %v3833
      %3909 = vst.msk [vmem:[#allocation5 + $0xb0] sm:$0xff] %vm3886, %v3835
      %3910 = vst.msk [vmem:[#allocation5 + $0xb8] sm:$0xff] %vm3886, %v3837
      %3911 = vst.msk [vmem:[#allocation5 + $0xc0] sm:$0xff] %vm3886, %v3839
      %3912 = vst.msk [vmem:[#allocation5 + $0xc8] sm:$0xff] %vm3886, %v3841
      %3913 = vst.msk [vmem:[#allocation5 + $0xd0] sm:$0xff] %vm3886, %v3843
      %3914 = vst.msk [vmem:[#allocation5 + $0xd8] sm:$0xff] %vm3886, %v3845
      %3915 = vst.msk [vmem:[#allocation5 + $0xe0] sm:$0xff] %vm3886, %v3847
      %3916 = vst.msk [vmem:[#allocation5 + $0xe8] sm:$0xff] %vm3886, %v3849
      %3917 = vst.msk [vmem:[#allocation5 + $0xf0] sm:$0xff] %vm3886, %v3851
      %3918 = vst.msk [vmem:[#allocation5 + $0xf8] sm:$0xff] %vm3886, %v3853
      %s3919 = scalar_lea.vmem [#allocation4], 48
      %v3920 = vld [vmem:[%s3919] sm:$0xff]
      %v3921 = vld [vmem:[%s3919 + $0x8] sm:$0xff]
      %v3922 = vld [vmem:[%s3919 + $0x18] sm:$0xff]
      %v3923 = vld [vmem:[%s3919 + $0x20] sm:$0xff]
      %v3924 = vld [vmem:[%s3919 + $0x30] sm:$0xff]
      %v3925 = vld [vmem:[%s3919 + $0x38] sm:$0xff]
      %v3926 = vld [vmem:[%s3919 + $0x48] sm:$0xff]
      %v3927 = vld [vmem:[%s3919 + $0x50] sm:$0xff]
      %v3928 = vld [vmem:[%s3919 + $0x60] sm:$0xff]
      %v3929 = vld [vmem:[%s3919 + $0x68] sm:$0xff]
      %v3930 = vld [vmem:[%s3919 + $0x78] sm:$0xff]
      %v3931 = vld [vmem:[%s3919 + $0x80] sm:$0xff]
      %v3932 = vld [vmem:[%s3919 + $0x90] sm:$0xff]
      %v3933 = vld [vmem:[%s3919 + $0x98] sm:$0xff]
      %v3934 = vld [vmem:[%s3919 + $0xa8] sm:$0xff]
      %v3935 = vld [vmem:[%s3919 + $0xb0] sm:$0xff]
      %v3936 = vld [vmem:[%s3919 + $0xc0] sm:$0xff]
      %v3937 = vld [vmem:[%s3919 + $0xc8] sm:$0xff]
      %v3938 = vld [vmem:[%s3919 + $0xd8] sm:$0xff]
      %v3939 = vld [vmem:[%s3919 + $0xe0] sm:$0xff]
      %v3940 = vld [vmem:[%s3919 + $0xf0] sm:$0xff]
      %v3941 = vld [vmem:[%s3919 + $0xf8] sm:$0xff]
      %v3942 = vld [vmem:[%s3919 + $0x108] sm:$0xff]
      %v3943 = vld [vmem:[%s3919 + $0x110] sm:$0xff]
      %v3944 = vld [vmem:[%s3919 + $0x120] sm:$0xff]
      %v3945 = vld [vmem:[%s3919 + $0x128] sm:$0xff]
      %v3946 = vld [vmem:[%s3919 + $0x138] sm:$0xff]
      %v3947 = vld [vmem:[%s3919 + $0x140] sm:$0xff]
      %v3948 = vld [vmem:[%s3919 + $0x150] sm:$0xff]
      %v3949 = vld [vmem:[%s3919 + $0x158] sm:$0xff]
      %v3950 = vld [vmem:[%s3919 + $0x168] sm:$0xff]
      %v3951 = vld [vmem:[%s3919 + $0x170] sm:$0xff]
      %3984 = vrot.lane.b32.xlu0 %v3920, 48
      %v3985 = vpop.permute.xlu0 %3984
      %3986 = vrot.lane.b32.xlu0 %v3921, 48
      %v3987 = vpop.permute.xlu0 %3986
      %3988 = vrot.lane.b32.xlu0 %v3922, 48
      %v3989 = vpop.permute.xlu0 %3988
      %3990 = vrot.lane.b32.xlu0 %v3923, 48
      %v3991 = vpop.permute.xlu0 %3990
      %3992 = vrot.lane.b32.xlu0 %v3924, 48
      %v3993 = vpop.permute.xlu0 %3992
      %3994 = vrot.lane.b32.xlu0 %v3925, 48
      %v3995 = vpop.permute.xlu0 %3994
      %3996 = vrot.lane.b32.xlu0 %v3926, 48
      %v3997 = vpop.permute.xlu0 %3996
      %3998 = vrot.lane.b32.xlu0 %v3927, 48
      %v3999 = vpop.permute.xlu0 %3998
      %4000 = vrot.lane.b32.xlu0 %v3928, 48
      %v4001 = vpop.permute.xlu0 %4000
      %4002 = vrot.lane.b32.xlu0 %v3929, 48
      %v4003 = vpop.permute.xlu0 %4002
      %4004 = vrot.lane.b32.xlu0 %v3930, 48
      %v4005 = vpop.permute.xlu0 %4004
      %4006 = vrot.lane.b32.xlu0 %v3931, 48
      %v4007 = vpop.permute.xlu0 %4006
      %4008 = vrot.lane.b32.xlu0 %v3932, 48
      %v4009 = vpop.permute.xlu0 %4008
      %4010 = vrot.lane.b32.xlu0 %v3933, 48
      %v4011 = vpop.permute.xlu0 %4010
      %4012 = vrot.lane.b32.xlu0 %v3934, 48
      %v4013 = vpop.permute.xlu0 %4012
      %4014 = vrot.lane.b32.xlu0 %v3935, 48
      %v4015 = vpop.permute.xlu0 %4014
      %4016 = vrot.lane.b32.xlu0 %v3936, 48
      %v4017 = vpop.permute.xlu0 %4016
      %4018 = vrot.lane.b32.xlu0 %v3937, 48
      %v4019 = vpop.permute.xlu0 %4018
      %4020 = vrot.lane.b32.xlu0 %v3938, 48
      %v4021 = vpop.permute.xlu0 %4020
      %4022 = vrot.lane.b32.xlu0 %v3939, 48
      %v4023 = vpop.permute.xlu0 %4022
      %4024 = vrot.lane.b32.xlu0 %v3940, 48
      %v4025 = vpop.permute.xlu0 %4024
      %4026 = vrot.lane.b32.xlu0 %v3941, 48
      %v4027 = vpop.permute.xlu0 %4026
      %4028 = vrot.lane.b32.xlu0 %v3942, 48
      %v4029 = vpop.permute.xlu0 %4028
      %4030 = vrot.lane.b32.xlu0 %v3943, 48
      %v4031 = vpop.permute.xlu0 %4030
      %4032 = vrot.lane.b32.xlu0 %v3944, 48
      %v4033 = vpop.permute.xlu0 %4032
      %4034 = vrot.lane.b32.xlu0 %v3945, 48
      %v4035 = vpop.permute.xlu0 %4034
      %4036 = vrot.lane.b32.xlu0 %v3946, 48
      %v4037 = vpop.permute.xlu0 %4036
      %4038 = vrot.lane.b32.xlu0 %v3947, 48
      %v4039 = vpop.permute.xlu0 %4038
      %4040 = vrot.lane.b32.xlu0 %v3948, 48
      %v4041 = vpop.permute.xlu0 %4040
      %4042 = vrot.lane.b32.xlu0 %v3949, 48
      %v4043 = vpop.permute.xlu0 %4042
      %4044 = vrot.lane.b32.xlu0 %v3950, 48
      %v4045 = vpop.permute.xlu0 %4044
      %4046 = vrot.lane.b32.xlu0 %v3951, 48
      %v4047 = vpop.permute.xlu0 %4046
      %vm4080 = vcmask 458112
      %4081 = vst.msk [vmem:[#allocation5] sm:$0xff] %vm4080, %v3985
      %4082 = vst.msk [vmem:[#allocation5 + $0x8] sm:$0xff] %vm4080, %v3987
      %4083 = vst.msk [vmem:[#allocation5 + $0x10] sm:$0xff] %vm4080, %v3989
      %4084 = vst.msk [vmem:[#allocation5 + $0x18] sm:$0xff] %vm4080, %v3991
      %4085 = vst.msk [vmem:[#allocation5 + $0x20] sm:$0xff] %vm4080, %v3993
      %4086 = vst.msk [vmem:[#allocation5 + $0x28] sm:$0xff] %vm4080, %v3995
      %4087 = vst.msk [vmem:[#allocation5 + $0x30] sm:$0xff] %vm4080, %v3997
      %4088 = vst.msk [vmem:[#allocation5 + $0x38] sm:$0xff] %vm4080, %v3999
      %4089 = vst.msk [vmem:[#allocation5 + $0x40] sm:$0xff] %vm4080, %v4001
      %4090 = vst.msk [vmem:[#allocation5 + $0x48] sm:$0xff] %vm4080, %v4003
      %4091 = vst.msk [vmem:[#allocation5 + $0x50] sm:$0xff] %vm4080, %v4005
      %4092 = vst.msk [vmem:[#allocation5 + $0x58] sm:$0xff] %vm4080, %v4007
      %4093 = vst.msk [vmem:[#allocation5 + $0x60] sm:$0xff] %vm4080, %v4009
      %4094 = vst.msk [vmem:[#allocation5 + $0x68] sm:$0xff] %vm4080, %v4011
      %4095 = vst.msk [vmem:[#allocation5 + $0x70] sm:$0xff] %vm4080, %v4013
      %4096 = vst.msk [vmem:[#allocation5 + $0x78] sm:$0xff] %vm4080, %v4015
      %4097 = vst.msk [vmem:[#allocation5 + $0x80] sm:$0xff] %vm4080, %v4017
      %4098 = vst.msk [vmem:[#allocation5 + $0x88] sm:$0xff] %vm4080, %v4019
      %4099 = vst.msk [vmem:[#allocation5 + $0x90] sm:$0xff] %vm4080, %v4021
      %4100 = vst.msk [vmem:[#allocation5 + $0x98] sm:$0xff] %vm4080, %v4023
      %4101 = vst.msk [vmem:[#allocation5 + $0xa0] sm:$0xff] %vm4080, %v4025
      %4102 = vst.msk [vmem:[#allocation5 + $0xa8] sm:$0xff] %vm4080, %v4027
      %4103 = vst.msk [vmem:[#allocation5 + $0xb0] sm:$0xff] %vm4080, %v4029
      %4104 = vst.msk [vmem:[#allocation5 + $0xb8] sm:$0xff] %vm4080, %v4031
      %4105 = vst.msk [vmem:[#allocation5 + $0xc0] sm:$0xff] %vm4080, %v4033
      %4106 = vst.msk [vmem:[#allocation5 + $0xc8] sm:$0xff] %vm4080, %v4035
      %4107 = vst.msk [vmem:[#allocation5 + $0xd0] sm:$0xff] %vm4080, %v4037
      %4108 = vst.msk [vmem:[#allocation5 + $0xd8] sm:$0xff] %vm4080, %v4039
      %4109 = vst.msk [vmem:[#allocation5 + $0xe0] sm:$0xff] %vm4080, %v4041
      %4110 = vst.msk [vmem:[#allocation5 + $0xe8] sm:$0xff] %vm4080, %v4043
      %4111 = vst.msk [vmem:[#allocation5 + $0xf0] sm:$0xff] %vm4080, %v4045
      %4112 = vst.msk [vmem:[#allocation5 + $0xf8] sm:$0xff] %vm4080, %v4047
      %v4113 = vld [vmem:[%s3919 + $0x1] sm:$0xff]
      %v4114 = vld [vmem:[%s3919 + $0x9] sm:$0xff]
      %v4115 = vld [vmem:[%s3919 + $0x19] sm:$0xff]
      %v4116 = vld [vmem:[%s3919 + $0x21] sm:$0xff]
      %v4117 = vld [vmem:[%s3919 + $0x31] sm:$0xff]
      %v4118 = vld [vmem:[%s3919 + $0x39] sm:$0xff]
      %v4119 = vld [vmem:[%s3919 + $0x49] sm:$0xff]
      %v4120 = vld [vmem:[%s3919 + $0x51] sm:$0xff]
      %v4121 = vld [vmem:[%s3919 + $0x61] sm:$0xff]
      %v4122 = vld [vmem:[%s3919 + $0x69] sm:$0xff]
      %v4123 = vld [vmem:[%s3919 + $0x79] sm:$0xff]
      %v4124 = vld [vmem:[%s3919 + $0x81] sm:$0xff]
      %v4125 = vld [vmem:[%s3919 + $0x91] sm:$0xff]
      %v4126 = vld [vmem:[%s3919 + $0x99] sm:$0xff]
      %v4127 = vld [vmem:[%s3919 + $0xa9] sm:$0xff]
      %v4128 = vld [vmem:[%s3919 + $0xb1] sm:$0xff]
      %v4129 = vld [vmem:[%s3919 + $0xc1] sm:$0xff]
      %v4130 = vld [vmem:[%s3919 + $0xc9] sm:$0xff]
      %v4131 = vld [vmem:[%s3919 + $0xd9] sm:$0xff]
      %v4132 = vld [vmem:[%s3919 + $0xe1] sm:$0xff]
      %v4133 = vld [vmem:[%s3919 + $0xf1] sm:$0xff]
      %v4134 = vld [vmem:[%s3919 + $0xf9] sm:$0xff]
      %v4135 = vld [vmem:[%s3919 + $0x109] sm:$0xff]
      %v4136 = vld [vmem:[%s3919 + $0x111] sm:$0xff]
      %v4137 = vld [vmem:[%s3919 + $0x121] sm:$0xff]
      %v4138 = vld [vmem:[%s3919 + $0x129] sm:$0xff]
      %v4139 = vld [vmem:[%s3919 + $0x139] sm:$0xff]
      %v4140 = vld [vmem:[%s3919 + $0x141] sm:$0xff]
      %v4141 = vld [vmem:[%s3919 + $0x151] sm:$0xff]
      %v4142 = vld [vmem:[%s3919 + $0x159] sm:$0xff]
      %v4143 = vld [vmem:[%s3919 + $0x169] sm:$0xff]
      %v4144 = vld [vmem:[%s3919 + $0x171] sm:$0xff]
      %4177 = vrot.lane.b32.xlu0 %v4113, 56
      %v4178 = vpop.permute.xlu0 %4177
      %4179 = vrot.lane.b32.xlu0 %v4114, 56
      %v4180 = vpop.permute.xlu0 %4179
      %4181 = vrot.lane.b32.xlu0 %v4115, 56
      %v4182 = vpop.permute.xlu0 %4181
      %4183 = vrot.lane.b32.xlu0 %v4116, 56
      %v4184 = vpop.permute.xlu0 %4183
      %4185 = vrot.lane.b32.xlu0 %v4117, 56
      %v4186 = vpop.permute.xlu0 %4185
      %4187 = vrot.lane.b32.xlu0 %v4118, 56
      %v4188 = vpop.permute.xlu0 %4187
      %4189 = vrot.lane.b32.xlu0 %v4119, 56
      %v4190 = vpop.permute.xlu0 %4189
      %4191 = vrot.lane.b32.xlu0 %v4120, 56
      %v4192 = vpop.permute.xlu0 %4191
      %4193 = vrot.lane.b32.xlu0 %v4121, 56
      %v4194 = vpop.permute.xlu0 %4193
      %4195 = vrot.lane.b32.xlu0 %v4122, 56
      %v4196 = vpop.permute.xlu0 %4195
      %4197 = vrot.lane.b32.xlu0 %v4123, 56
      %v4198 = vpop.permute.xlu0 %4197
      %4199 = vrot.lane.b32.xlu0 %v4124, 56
      %v4200 = vpop.permute.xlu0 %4199
      %4201 = vrot.lane.b32.xlu0 %v4125, 56
      %v4202 = vpop.permute.xlu0 %4201
      %4203 = vrot.lane.b32.xlu0 %v4126, 56
      %v4204 = vpop.permute.xlu0 %4203
      %4205 = vrot.lane.b32.xlu0 %v4127, 56
      %v4206 = vpop.permute.xlu0 %4205
      %4207 = vrot.lane.b32.xlu0 %v4128, 56
      %v4208 = vpop.permute.xlu0 %4207
      %4209 = vrot.lane.b32.xlu0 %v4129, 56
      %v4210 = vpop.permute.xlu0 %4209
      %4211 = vrot.lane.b32.xlu0 %v4130, 56
      %v4212 = vpop.permute.xlu0 %4211
      %4213 = vrot.lane.b32.xlu0 %v4131, 56
      %v4214 = vpop.permute.xlu0 %4213
      %4215 = vrot.lane.b32.xlu0 %v4132, 56
      %v4216 = vpop.permute.xlu0 %4215
      %4217 = vrot.lane.b32.xlu0 %v4133, 56
      %v4218 = vpop.permute.xlu0 %4217
      %4219 = vrot.lane.b32.xlu0 %v4134, 56
      %v4220 = vpop.permute.xlu0 %4219
      %4221 = vrot.lane.b32.xlu0 %v4135, 56
      %v4222 = vpop.permute.xlu0 %4221
      %4223 = vrot.lane.b32.xlu0 %v4136, 56
      %v4224 = vpop.permute.xlu0 %4223
      %4225 = vrot.lane.b32.xlu0 %v4137, 56
      %v4226 = vpop.permute.xlu0 %4225
      %4227 = vrot.lane.b32.xlu0 %v4138, 56
      %v4228 = vpop.permute.xlu0 %4227
      %4229 = vrot.lane.b32.xlu0 %v4139, 56
      %v4230 = vpop.permute.xlu0 %4229
      %4231 = vrot.lane.b32.xlu0 %v4140, 56
      %v4232 = vpop.permute.xlu0 %4231
      %4233 = vrot.lane.b32.xlu0 %v4141, 56
      %v4234 = vpop.permute.xlu0 %4233
      %4235 = vrot.lane.b32.xlu0 %v4142, 56
      %v4236 = vpop.permute.xlu0 %4235
      %4237 = vrot.lane.b32.xlu0 %v4143, 56
      %v4238 = vpop.permute.xlu0 %4237
      %4239 = vrot.lane.b32.xlu0 %v4144, 56
      %v4240 = vpop.permute.xlu0 %4239
      %vm4273 = vcmask 523712
      %4274 = vst.msk [vmem:[#allocation5] sm:$0xff] %vm4273, %v4178
      %4275 = vst.msk [vmem:[#allocation5 + $0x8] sm:$0xff] %vm4273, %v4180
      %4276 = vst.msk [vmem:[#allocation5 + $0x10] sm:$0xff] %vm4273, %v4182
      %4277 = vst.msk [vmem:[#allocation5 + $0x18] sm:$0xff] %vm4273, %v4184
      %4278 = vst.msk [vmem:[#allocation5 + $0x20] sm:$0xff] %vm4273, %v4186
      %4279 = vst.msk [vmem:[#allocation5 + $0x28] sm:$0xff] %vm4273, %v4188
      %4280 = vst.msk [vmem:[#allocation5 + $0x30] sm:$0xff] %vm4273, %v4190
      %4281 = vst.msk [vmem:[#allocation5 + $0x38] sm:$0xff] %vm4273, %v4192
      %4282 = vst.msk [vmem:[#allocation5 + $0x40] sm:$0xff] %vm4273, %v4194
      %4283 = vst.msk [vmem:[#allocation5 + $0x48] sm:$0xff] %vm4273, %v4196
      %4284 = vst.msk [vmem:[#allocation5 + $0x50] sm:$0xff] %vm4273, %v4198
      %4285 = vst.msk [vmem:[#allocation5 + $0x58] sm:$0xff] %vm4273, %v4200
      %4286 = vst.msk [vmem:[#allocation5 + $0x60] sm:$0xff] %vm4273, %v4202
      %4287 = vst.msk [vmem:[#allocation5 + $0x68] sm:$0xff] %vm4273, %v4204
      %4288 = vst.msk [vmem:[#allocation5 + $0x70] sm:$0xff] %vm4273, %v4206
      %4289 = vst.msk [vmem:[#allocation5 + $0x78] sm:$0xff] %vm4273, %v4208
      %4290 = vst.msk [vmem:[#allocation5 + $0x80] sm:$0xff] %vm4273, %v4210
      %4291 = vst.msk [vmem:[#allocation5 + $0x88] sm:$0xff] %vm4273, %v4212
      %4292 = vst.msk [vmem:[#allocation5 + $0x90] sm:$0xff] %vm4273, %v4214
      %4293 = vst.msk [vmem:[#allocation5 + $0x98] sm:$0xff] %vm4273, %v4216
      %4294 = vst.msk [vmem:[#allocation5 + $0xa0] sm:$0xff] %vm4273, %v4218
      %4295 = vst.msk [vmem:[#allocation5 + $0xa8] sm:$0xff] %vm4273, %v4220
      %4296 = vst.msk [vmem:[#allocation5 + $0xb0] sm:$0xff] %vm4273, %v4222
      %4297 = vst.msk [vmem:[#allocation5 + $0xb8] sm:$0xff] %vm4273, %v4224
      %4298 = vst.msk [vmem:[#allocation5 + $0xc0] sm:$0xff] %vm4273, %v4226
      %4299 = vst.msk [vmem:[#allocation5 + $0xc8] sm:$0xff] %vm4273, %v4228
      %4300 = vst.msk [vmem:[#allocation5 + $0xd0] sm:$0xff] %vm4273, %v4230
      %4301 = vst.msk [vmem:[#allocation5 + $0xd8] sm:$0xff] %vm4273, %v4232
      %4302 = vst.msk [vmem:[#allocation5 + $0xe0] sm:$0xff] %vm4273, %v4234
      %4303 = vst.msk [vmem:[#allocation5 + $0xe8] sm:$0xff] %vm4273, %v4236
      %4304 = vst.msk [vmem:[#allocation5 + $0xf0] sm:$0xff] %vm4273, %v4238
      %4305 = vst.msk [vmem:[#allocation5 + $0xf8] sm:$0xff] %vm4273, %v4240
      %v4306 = vld [vmem:[%s3919 + $0x2] sm:$0xff]
      %v4307 = vld [vmem:[%s3919 + $0xa] sm:$0xff]
      %v4308 = vld [vmem:[%s3919 + $0x1a] sm:$0xff]
      %v4309 = vld [vmem:[%s3919 + $0x22] sm:$0xff]
      %v4310 = vld [vmem:[%s3919 + $0x32] sm:$0xff]
      %v4311 = vld [vmem:[%s3919 + $0x3a] sm:$0xff]
      %v4312 = vld [vmem:[%s3919 + $0x4a] sm:$0xff]
      %v4313 = vld [vmem:[%s3919 + $0x52] sm:$0xff]
      %v4314 = vld [vmem:[%s3919 + $0x62] sm:$0xff]
      %v4315 = vld [vmem:[%s3919 + $0x6a] sm:$0xff]
      %v4316 = vld [vmem:[%s3919 + $0x7a] sm:$0xff]
      %v4317 = vld [vmem:[%s3919 + $0x82] sm:$0xff]
      %v4318 = vld [vmem:[%s3919 + $0x92] sm:$0xff]
      %v4319 = vld [vmem:[%s3919 + $0x9a] sm:$0xff]
      %v4320 = vld [vmem:[%s3919 + $0xaa] sm:$0xff]
      %v4321 = vld [vmem:[%s3919 + $0xb2] sm:$0xff]
      %v4322 = vld [vmem:[%s3919 + $0xc2] sm:$0xff]
      %v4323 = vld [vmem:[%s3919 + $0xca] sm:$0xff]
      %v4324 = vld [vmem:[%s3919 + $0xda] sm:$0xff]
      %v4325 = vld [vmem:[%s3919 + $0xe2] sm:$0xff]
      %v4326 = vld [vmem:[%s3919 + $0xf2] sm:$0xff]
      %v4327 = vld [vmem:[%s3919 + $0xfa] sm:$0xff]
      %v4328 = vld [vmem:[%s3919 + $0x10a] sm:$0xff]
      %v4329 = vld [vmem:[%s3919 + $0x112] sm:$0xff]
      %v4330 = vld [vmem:[%s3919 + $0x122] sm:$0xff]
      %v4331 = vld [vmem:[%s3919 + $0x12a] sm:$0xff]
      %v4332 = vld [vmem:[%s3919 + $0x13a] sm:$0xff]
      %v4333 = vld [vmem:[%s3919 + $0x142] sm:$0xff]
      %v4334 = vld [vmem:[%s3919 + $0x152] sm:$0xff]
      %v4335 = vld [vmem:[%s3919 + $0x15a] sm:$0xff]
      %v4336 = vld [vmem:[%s3919 + $0x16a] sm:$0xff]
      %v4337 = vld [vmem:[%s3919 + $0x172] sm:$0xff]
      %4370 = vrot.lane.b32.xlu0 %v4306, 64
      %v4371 = vpop.permute.xlu0 %4370
      %4372 = vrot.lane.b32.xlu0 %v4307, 64
      %v4373 = vpop.permute.xlu0 %4372
      %4374 = vrot.lane.b32.xlu0 %v4308, 64
      %v4375 = vpop.permute.xlu0 %4374
      %4376 = vrot.lane.b32.xlu0 %v4309, 64
      %v4377 = vpop.permute.xlu0 %4376
      %4378 = vrot.lane.b32.xlu0 %v4310, 64
      %v4379 = vpop.permute.xlu0 %4378
      %4380 = vrot.lane.b32.xlu0 %v4311, 64
      %v4381 = vpop.permute.xlu0 %4380
      %4382 = vrot.lane.b32.xlu0 %v4312, 64
      %v4383 = vpop.permute.xlu0 %4382
      %4384 = vrot.lane.b32.xlu0 %v4313, 64
      %v4385 = vpop.permute.xlu0 %4384
      %4386 = vrot.lane.b32.xlu0 %v4314, 64
      %v4387 = vpop.permute.xlu0 %4386
      %4388 = vrot.lane.b32.xlu0 %v4315, 64
      %v4389 = vpop.permute.xlu0 %4388
      %4390 = vrot.lane.b32.xlu0 %v4316, 64
      %v4391 = vpop.permute.xlu0 %4390
      %4392 = vrot.lane.b32.xlu0 %v4317, 64
      %v4393 = vpop.permute.xlu0 %4392
      %4394 = vrot.lane.b32.xlu0 %v4318, 64
      %v4395 = vpop.permute.xlu0 %4394
      %4396 = vrot.lane.b32.xlu0 %v4319, 64
      %v4397 = vpop.permute.xlu0 %4396
      %4398 = vrot.lane.b32.xlu0 %v4320, 64
      %v4399 = vpop.permute.xlu0 %4398
      %4400 = vrot.lane.b32.xlu0 %v4321, 64
      %v4401 = vpop.permute.xlu0 %4400
      %4402 = vrot.lane.b32.xlu0 %v4322, 64
      %v4403 = vpop.permute.xlu0 %4402
      %4404 = vrot.lane.b32.xlu0 %v4323, 64
      %v4405 = vpop.permute.xlu0 %4404
      %4406 = vrot.lane.b32.xlu0 %v4324, 64
      %v4407 = vpop.permute.xlu0 %4406
      %4408 = vrot.lane.b32.xlu0 %v4325, 64
      %v4409 = vpop.permute.xlu0 %4408
      %4410 = vrot.lane.b32.xlu0 %v4326, 64
      %v4411 = vpop.permute.xlu0 %4410
      %4412 = vrot.lane.b32.xlu0 %v4327, 64
      %v4413 = vpop.permute.xlu0 %4412
      %4414 = vrot.lane.b32.xlu0 %v4328, 64
      %v4415 = vpop.permute.xlu0 %4414
      %4416 = vrot.lane.b32.xlu0 %v4329, 64
      %v4417 = vpop.permute.xlu0 %4416
      %4418 = vrot.lane.b32.xlu0 %v4330, 64
      %v4419 = vpop.permute.xlu0 %4418
      %4420 = vrot.lane.b32.xlu0 %v4331, 64
      %v4421 = vpop.permute.xlu0 %4420
      %4422 = vrot.lane.b32.xlu0 %v4332, 64
      %v4423 = vpop.permute.xlu0 %4422
      %4424 = vrot.lane.b32.xlu0 %v4333, 64
      %v4425 = vpop.permute.xlu0 %4424
      %4426 = vrot.lane.b32.xlu0 %v4334, 64
      %v4427 = vpop.permute.xlu0 %4426
      %4428 = vrot.lane.b32.xlu0 %v4335, 64
      %v4429 = vpop.permute.xlu0 %4428
      %4430 = vrot.lane.b32.xlu0 %v4336, 64
      %v4431 = vpop.permute.xlu0 %4430
      %4432 = vrot.lane.b32.xlu0 %v4337, 64
      %v4433 = vpop.permute.xlu0 %4432
      %vm4466 = vcmask 589312
      %4467 = vst.msk [vmem:[#allocation5] sm:$0xff] %vm4466, %v4371
      %4468 = vst.msk [vmem:[#allocation5 + $0x8] sm:$0xff] %vm4466, %v4373
      %4469 = vst.msk [vmem:[#allocation5 + $0x10] sm:$0xff] %vm4466, %v4375
      %4470 = vst.msk [vmem:[#allocation5 + $0x18] sm:$0xff] %vm4466, %v4377
      %4471 = vst.msk [vmem:[#allocation5 + $0x20] sm:$0xff] %vm4466, %v4379
      %4472 = vst.msk [vmem:[#allocation5 + $0x28] sm:$0xff] %vm4466, %v4381
      %4473 = vst.msk [vmem:[#allocation5 + $0x30] sm:$0xff] %vm4466, %v4383
      %4474 = vst.msk [vmem:[#allocation5 + $0x38] sm:$0xff] %vm4466, %v4385
      %4475 = vst.msk [vmem:[#allocation5 + $0x40] sm:$0xff] %vm4466, %v4387
      %4476 = vst.msk [vmem:[#allocation5 + $0x48] sm:$0xff] %vm4466, %v4389
      %4477 = vst.msk [vmem:[#allocation5 + $0x50] sm:$0xff] %vm4466, %v4391
      %4478 = vst.msk [vmem:[#allocation5 + $0x58] sm:$0xff] %vm4466, %v4393
      %4479 = vst.msk [vmem:[#allocation5 + $0x60] sm:$0xff] %vm4466, %v4395
      %4480 = vst.msk [vmem:[#allocation5 + $0x68] sm:$0xff] %vm4466, %v4397
      %4481 = vst.msk [vmem:[#allocation5 + $0x70] sm:$0xff] %vm4466, %v4399
      %4482 = vst.msk [vmem:[#allocation5 + $0x78] sm:$0xff] %vm4466, %v4401
      %4483 = vst.msk [vmem:[#allocation5 + $0x80] sm:$0xff] %vm4466, %v4403
      %4484 = vst.msk [vmem:[#allocation5 + $0x88] sm:$0xff] %vm4466, %v4405
      %4485 = vst.msk [vmem:[#allocation5 + $0x90] sm:$0xff] %vm4466, %v4407
      %4486 = vst.msk [vmem:[#allocation5 + $0x98] sm:$0xff] %vm4466, %v4409
      %4487 = vst.msk [vmem:[#allocation5 + $0xa0] sm:$0xff] %vm4466, %v4411
      %4488 = vst.msk [vmem:[#allocation5 + $0xa8] sm:$0xff] %vm4466, %v4413
      %4489 = vst.msk [vmem:[#allocation5 + $0xb0] sm:$0xff] %vm4466, %v4415
      %4490 = vst.msk [vmem:[#allocation5 + $0xb8] sm:$0xff] %vm4466, %v4417
      %4491 = vst.msk [vmem:[#allocation5 + $0xc0] sm:$0xff] %vm4466, %v4419
      %4492 = vst.msk [vmem:[#allocation5 + $0xc8] sm:$0xff] %vm4466, %v4421
      %4493 = vst.msk [vmem:[#allocation5 + $0xd0] sm:$0xff] %vm4466, %v4423
      %4494 = vst.msk [vmem:[#allocation5 + $0xd8] sm:$0xff] %vm4466, %v4425
      %4495 = vst.msk [vmem:[#allocation5 + $0xe0] sm:$0xff] %vm4466, %v4427
      %4496 = vst.msk [vmem:[#allocation5 + $0xe8] sm:$0xff] %vm4466, %v4429
      %4497 = vst.msk [vmem:[#allocation5 + $0xf0] sm:$0xff] %vm4466, %v4431
      %4498 = vst.msk [vmem:[#allocation5 + $0xf8] sm:$0xff] %vm4466, %v4433
      %v4499 = vld [vmem:[#allocation5] sm:$0xff]
      %v4500 = vld [vmem:[#allocation5 + $0x8] sm:$0xff]
      %v4501 = vld [vmem:[#allocation5 + $0x10] sm:$0xff]
      %v4502 = vld [vmem:[#allocation5 + $0x18] sm:$0xff]
      %v4503 = vld [vmem:[#allocation5 + $0x20] sm:$0xff]
      %v4504 = vld [vmem:[#allocation5 + $0x28] sm:$0xff]
      %v4505 = vld [vmem:[#allocation5 + $0x30] sm:$0xff]
      %v4506 = vld [vmem:[#allocation5 + $0x38] sm:$0xff]
      %v4507 = vld [vmem:[#allocation5 + $0x40] sm:$0xff]
      %v4508 = vld [vmem:[#allocation5 + $0x48] sm:$0xff]
      %v4509 = vld [vmem:[#allocation5 + $0x50] sm:$0xff]
      %v4510 = vld [vmem:[#allocation5 + $0x58] sm:$0xff]
      %v4511 = vld [vmem:[#allocation5 + $0x60] sm:$0xff]
      %v4512 = vld [vmem:[#allocation5 + $0x68] sm:$0xff]
      %v4513 = vld [vmem:[#allocation5 + $0x70] sm:$0xff]
      %v4514 = vld [vmem:[#allocation5 + $0x78] sm:$0xff]
      %v4515 = vld [vmem:[#allocation5 + $0x80] sm:$0xff]
      %v4516 = vld [vmem:[#allocation5 + $0x88] sm:$0xff]
      %v4517 = vld [vmem:[#allocation5 + $0x90] sm:$0xff]
      %v4518 = vld [vmem:[#allocation5 + $0x98] sm:$0xff]
      %v4519 = vld [vmem:[#allocation5 + $0xa0] sm:$0xff]
      %v4520 = vld [vmem:[#allocation5 + $0xa8] sm:$0xff]
      %v4521 = vld [vmem:[#allocation5 + $0xb0] sm:$0xff]
      %v4522 = vld [vmem:[#allocation5 + $0xb8] sm:$0xff]
      %v4523 = vld [vmem:[#allocation5 + $0xc0] sm:$0xff]
      %v4524 = vld [vmem:[#allocation5 + $0xc8] sm:$0xff]
      %v4525 = vld [vmem:[#allocation5 + $0xd0] sm:$0xff]
      %v4526 = vld [vmem:[#allocation5 + $0xd8] sm:$0xff]
      %v4527 = vld [vmem:[#allocation5 + $0xe0] sm:$0xff]
      %v4528 = vld [vmem:[#allocation5 + $0xe8] sm:$0xff]
      %v4529 = vld [vmem:[#allocation5 + $0xf0] sm:$0xff]
      %v4530 = vld [vmem:[#allocation5 + $0xf8] sm:$0xff]
      %vm4531 = vcmask 588800
      %v4533 = vsel %vm4531, %v4499, 0
      %v4536 = vsel %vm4531, %v4500, 0
      %v4539 = vsel %vm4531, %v4501, 0
      %v4542 = vsel %vm4531, %v4502, 0
      %v4545 = vsel %vm4531, %v4503, 0
      %v4548 = vsel %vm4531, %v4504, 0
      %v4551 = vsel %vm4531, %v4505, 0
      %v4554 = vsel %vm4531, %v4506, 0
      %v4557 = vsel %vm4531, %v4507, 0
      %v4560 = vsel %vm4531, %v4508, 0
      %v4563 = vsel %vm4531, %v4509, 0
      %v4566 = vsel %vm4531, %v4510, 0
      %v4569 = vsel %vm4531, %v4511, 0
      %v4572 = vsel %vm4531, %v4512, 0
      %v4575 = vsel %vm4531, %v4513, 0
      %v4578 = vsel %vm4531, %v4514, 0
      %v4581 = vsel %vm4531, %v4515, 0
      %v4584 = vsel %vm4531, %v4516, 0
      %v4587 = vsel %vm4531, %v4517, 0
      %v4590 = vsel %vm4531, %v4518, 0
      %v4593 = vsel %vm4531, %v4519, 0
      %v4596 = vsel %vm4531, %v4520, 0
      %v4599 = vsel %vm4531, %v4521, 0
      %v4602 = vsel %vm4531, %v4522, 0
      %v4605 = vsel %vm4531, %v4523, 0
      %v4608 = vsel %vm4531, %v4524, 0
      %v4611 = vsel %vm4531, %v4525, 0
      %v4614 = vsel %vm4531, %v4526, 0
      %v4617 = vsel %vm4531, %v4527, 0
      %v4620 = vsel %vm4531, %v4528, 0
      %v4623 = vsel %vm4531, %v4529, 0
      %v4626 = vsel %vm4531, %v4530, 0
      %4628 = vmatprep.subr.mxu0 0.0
      %4629 = vmatpush1.msra.mxu0 0.0
      %4630 = vmatprep.subr.mxu0 0.0
      %4631 = vmatpush1.msra.mxu0 0.0
      %4632 = vmatprep.subr.mxu0 0.0
      %4633 = vmatpush1.msra.mxu0 0.0
      %4634 = vmatprep.subr.mxu0 0.0
      %4635 = vmatpush1.msra.mxu0 0.0
      %4636 = vmatprep.subr.mxu0 0.0
      %4637 = vmatpush1.msra.mxu0 0.0
      %4638 = vmatprep.subr.mxu0 0.0
      %4639 = vmatpush1.msra.mxu0 0.0
      %4640 = vmatprep.subr.mxu0 0.0
      %4641 = vmatpush1.msra.mxu0 0.0
      %4642 = vmatprep.subr.mxu0 0.0
      %4643 = vmatpush1.msra.mxu0 %v2889
      %4644 = vmatprep.subr.mxu0 0.0
      %4645 = vmatpush1.msra.mxu0 %v2888
      %4646 = vmatprep.subr.mxu0 0.0
      %4647 = vmatpush1.msra.mxu0 %v2887
      %4648 = vmatprep.subr.mxu0 0.0
      %4649 = vmatpush1.msra.mxu0 %v2886
      %4650 = vmatprep.subr.mxu0 0.0
      %4651 = vmatpush1.msra.mxu0 %v2885
      %4652 = vmatprep.subr.mxu0 0.0
      %4653 = vmatpush1.msra.mxu0 %v2884
      %4654 = vmatprep.subr.mxu0 0.0
      %4655 = vmatpush1.msra.mxu0 %v2883
      %4656 = vmatprep.subr.mxu0 0.0
      %4657 = vmatpush1.msra.mxu0 %v2882
      %4658 = vmatprep.subr.mxu0 0.0
      %4659 = vmatpush1.msra.mxu0 %v2881
      %4660 = vmatprep.subr.mxu0 0.0
      %4661 = vmatpush2.msra.mxu0 0.0
      %4662 = vmatprep.subr.mxu0 0.0
      %4663 = vmatpush2.msra.mxu0 0.0
      %4664 = vmatprep.subr.mxu0 0.0
      %4665 = vmatpush2.msra.mxu0 0.0
      %4666 = vmatprep.subr.mxu0 0.0
      %4667 = vmatpush2.msra.mxu0 0.0
      %4668 = vmatprep.subr.mxu0 0.0
      %4669 = vmatpush2.msra.mxu0 0.0
      %4670 = vmatprep.subr.mxu0 0.0
      %4671 = vmatpush2.msra.mxu0 0.0
      %4672 = vmatprep.subr.mxu0 0.0
      %4673 = vmatpush2.msra.mxu0 0.0
      %4674 = vmatprep.subr.mxu0 0.0
      %4675 = vmatpush2.msra.mxu0 0.0
      %4676 = vmatprep.subr.mxu0 0.0
      %4677 = vmatpush2.msra.mxu0 0.0
      %4678 = vmatprep.subr.mxu0 0.0
      %4679 = vmatpush2.msra.mxu0 0.0
      %4680 = vmatprep.subr.mxu0 0.0
      %4681 = vmatpush2.msra.mxu0 0.0
      %4682 = vmatprep.subr.mxu0 0.0
      %4683 = vmatpush2.msra.mxu0 0.0
      %4684 = vmatprep.subr.mxu0 0.0
      %4685 = vmatpush2.msra.mxu0 0.0
      %4686 = vmatprep.subr.mxu0 0.0
      %4687 = vmatpush2.msra.mxu0 0.0
      %4688 = vmatprep.subr.mxu0 0.0
      %4689 = vmatpush2.msra.mxu0 0.0
      %4690 = vmatprep.subr.mxu0 0.0
      %4691 = vmatpush2.msra.mxu0 0.0
      %4692 = vmatprep.mubr.f32.mxu0 0.0
      %4693 = vmatmul.mubr.f32.gmra.mxu0 %v4533
      %v4694 = vpop.f32.mrf.mxu0
      %v4695 = vadd.f32 0.0, %v4694
      %v4696 = vpop.f32.mrf.mxu0
      %4697 = vmatprep.mubr.f32.mxu0 0.0
      %4698 = vmatmul.mubr.f32.gmra.mxu0 %v4536
      %v4699 = vpop.f32.mrf.mxu0
      %v4700 = vadd.f32 0.0, %v4699
      %v4701 = vpop.f32.mrf.mxu0
      %4702 = vmatprep.mubr.f32.mxu0 0.0
      %4703 = vmatmul.mubr.f32.gmra.mxu0 %v4539
      %v4704 = vpop.f32.mrf.mxu0
      %v4705 = vadd.f32 0.0, %v4704
      %v4706 = vpop.f32.mrf.mxu0
      %4707 = vmatprep.mubr.f32.mxu0 0.0
      %4708 = vmatmul.mubr.f32.gmra.mxu0 %v4542
      %v4709 = vpop.f32.mrf.mxu0
      %v4710 = vadd.f32 0.0, %v4709
      %v4711 = vpop.f32.mrf.mxu0
      %4712 = vmatprep.mubr.f32.mxu0 0.0
      %4713 = vmatmul.mubr.f32.gmra.mxu0 %v4545
      %v4714 = vpop.f32.mrf.mxu0
      %v4715 = vadd.f32 0.0, %v4714
      %v4716 = vpop.f32.mrf.mxu0
      %4717 = vmatprep.mubr.f32.mxu0 0.0
      %4718 = vmatmul.mubr.f32.gmra.mxu0 %v4548
      %v4719 = vpop.f32.mrf.mxu0
      %v4720 = vadd.f32 0.0, %v4719
      %v4721 = vpop.f32.mrf.mxu0
      %4722 = vmatprep.mubr.f32.mxu0 0.0
      %4723 = vmatmul.mubr.f32.gmra.mxu0 %v4551
      %v4724 = vpop.f32.mrf.mxu0
      %v4725 = vadd.f32 0.0, %v4724
      %v4726 = vpop.f32.mrf.mxu0
      %4727 = vmatprep.mubr.f32.mxu0 0.0
      %4728 = vmatmul.mubr.f32.gmra.mxu0 %v4554
      %v4729 = vpop.f32.mrf.mxu0
      %v4730 = vadd.f32 0.0, %v4729
      %v4731 = vpop.f32.mrf.mxu0
      %4732 = vmatprep.mubr.f32.mxu0 0.0
      %4733 = vmatmul.mubr.f32.gmra.mxu0 %v4557
      %v4734 = vpop.f32.mrf.mxu0
      %v4735 = vadd.f32 0.0, %v4734
      %v4736 = vpop.f32.mrf.mxu0
      %4737 = vmatprep.mubr.f32.mxu0 0.0
      %4738 = vmatmul.mubr.f32.gmra.mxu0 %v4560
      %v4739 = vpop.f32.mrf.mxu0
      %v4740 = vadd.f32 0.0, %v4739
      %v4741 = vpop.f32.mrf.mxu0
      %4742 = vmatprep.mubr.f32.mxu0 0.0
      %4743 = vmatmul.mubr.f32.gmra.mxu0 %v4563
      %v4744 = vpop.f32.mrf.mxu0
      %v4745 = vadd.f32 0.0, %v4744
      %v4746 = vpop.f32.mrf.mxu0
      %4747 = vmatprep.mubr.f32.mxu0 0.0
      %4748 = vmatmul.mubr.f32.gmra.mxu0 %v4566
      %v4749 = vpop.f32.mrf.mxu0
      %v4750 = vadd.f32 0.0, %v4749
      %v4751 = vpop.f32.mrf.mxu0
      %4752 = vmatprep.mubr.f32.mxu0 0.0
      %4753 = vmatmul.mubr.f32.gmra.mxu0 %v4569
      %v4754 = vpop.f32.mrf.mxu0
      %v4755 = vadd.f32 0.0, %v4754
      %v4756 = vpop.f32.mrf.mxu0
      %4757 = vmatprep.mubr.f32.mxu0 0.0
      %4758 = vmatmul.mubr.f32.gmra.mxu0 %v4572
      %v4759 = vpop.f32.mrf.mxu0
      %v4760 = vadd.f32 0.0, %v4759
      %v4761 = vpop.f32.mrf.mxu0
      %4762 = vmatprep.mubr.f32.mxu0 0.0
      %4763 = vmatmul.mubr.f32.gmra.mxu0 %v4575
      %v4764 = vpop.f32.mrf.mxu0
      %v4765 = vadd.f32 0.0, %v4764
      %v4766 = vpop.f32.mrf.mxu0
      %4767 = vmatprep.mubr.f32.mxu0 0.0
      %4768 = vmatmul.mubr.f32.gmra.mxu0 %v4578
      %v4769 = vpop.f32.mrf.mxu0
      %v4770 = vadd.f32 0.0, %v4769
      %v4771 = vpop.f32.mrf.mxu0
      %4772 = vmatprep.mubr.f32.mxu0 0.0
      %4773 = vmatmul.mubr.f32.gmra.mxu0 %v4581
      %v4774 = vpop.f32.mrf.mxu0
      %v4775 = vadd.f32 0.0, %v4774
      %v4776 = vpop.f32.mrf.mxu0
      %4777 = vmatprep.mubr.f32.mxu0 0.0
      %4778 = vmatmul.mubr.f32.gmra.mxu0 %v4584
      %v4779 = vpop.f32.mrf.mxu0
      %v4780 = vadd.f32 0.0, %v4779
      %v4781 = vpop.f32.mrf.mxu0
      %4782 = vmatprep.mubr.f32.mxu0 0.0
      %4783 = vmatmul.mubr.f32.gmra.mxu0 %v4587
      %v4784 = vpop.f32.mrf.mxu0
      %v4785 = vadd.f32 0.0, %v4784
      %v4786 = vpop.f32.mrf.mxu0
      %4787 = vmatprep.mubr.f32.mxu0 0.0
      %4788 = vmatmul.mubr.f32.gmra.mxu0 %v4590
      %v4789 = vpop.f32.mrf.mxu0
      %v4790 = vadd.f32 0.0, %v4789
      %v4791 = vpop.f32.mrf.mxu0
      %4792 = vmatprep.mubr.f32.mxu0 0.0
      %4793 = vmatmul.mubr.f32.gmra.mxu0 %v4593
      %v4794 = vpop.f32.mrf.mxu0
      %v4795 = vadd.f32 0.0, %v4794
      %v4796 = vpop.f32.mrf.mxu0
      %4797 = vmatprep.mubr.f32.mxu0 0.0
      %4798 = vmatmul.mubr.f32.gmra.mxu0 %v4596
      %v4799 = vpop.f32.mrf.mxu0
      %v4800 = vadd.f32 0.0, %v4799
      %v4801 = vpop.f32.mrf.mxu0
      %4802 = vmatprep.mubr.f32.mxu0 0.0
      %4803 = vmatmul.mubr.f32.gmra.mxu0 %v4599
      %v4804 = vpop.f32.mrf.mxu0
      %v4805 = vadd.f32 0.0, %v4804
      %v4806 = vpop.f32.mrf.mxu0
      %4807 = vmatprep.mubr.f32.mxu0 0.0
      %4808 = vmatmul.mubr.f32.gmra.mxu0 %v4602
      %v4809 = vpop.f32.mrf.mxu0
      %v4810 = vadd.f32 0.0, %v4809
      %v4811 = vpop.f32.mrf.mxu0
      %4812 = vmatprep.mubr.f32.mxu0 0.0
      %4813 = vmatmul.mubr.f32.gmra.mxu0 %v4605
      %v4814 = vpop.f32.mrf.mxu0
      %v4815 = vadd.f32 0.0, %v4814
      %v4816 = vpop.f32.mrf.mxu0
      %4817 = vmatprep.mubr.f32.mxu0 0.0
      %4818 = vmatmul.mubr.f32.gmra.mxu0 %v4608
      %v4819 = vpop.f32.mrf.mxu0
      %v4820 = vadd.f32 0.0, %v4819
      %v4821 = vpop.f32.mrf.mxu0
      %4822 = vmatprep.mubr.f32.mxu0 0.0
      %4823 = vmatmul.mubr.f32.gmra.mxu0 %v4611
      %v4824 = vpop.f32.mrf.mxu0
      %v4825 = vadd.f32 0.0, %v4824
      %v4826 = vpop.f32.mrf.mxu0
      %4827 = vmatprep.mubr.f32.mxu0 0.0
      %4828 = vmatmul.mubr.f32.gmra.mxu0 %v4614
      %v4829 = vpop.f32.mrf.mxu0
      %v4830 = vadd.f32 0.0, %v4829
      %v4831 = vpop.f32.mrf.mxu0
      %4832 = vmatprep.mubr.f32.mxu0 0.0
      %4833 = vmatmul.mubr.f32.gmra.mxu0 %v4617
      %v4834 = vpop.f32.mrf.mxu0
      %v4835 = vadd.f32 0.0, %v4834
      %v4836 = vpop.f32.mrf.mxu0
      %4837 = vmatprep.mubr.f32.mxu0 0.0
      %4838 = vmatmul.mubr.f32.gmra.mxu0 %v4620
      %v4839 = vpop.f32.mrf.mxu0
      %v4840 = vadd.f32 0.0, %v4839
      %v4841 = vpop.f32.mrf.mxu0
      %4842 = vmatprep.mubr.f32.mxu0 0.0
      %4843 = vmatmul.mubr.f32.gmra.mxu0 %v4623
      %v4844 = vpop.f32.mrf.mxu0
      %v4845 = vadd.f32 0.0, %v4844
      %v4846 = vpop.f32.mrf.mxu0
      %4847 = vmatprep.mubr.f32.mxu0 0.0
      %4848 = vmatmul.mubr.f32.gmra.mxu0 %v4626
      %v4849 = vpop.f32.mrf.mxu0
      %v4850 = vadd.f32 0.0, %v4849
      %v4851 = vpop.f32.mrf.mxu0
      %4852 = vdwg.mxu0
      %v4853 = vsel %vm400, %v4695, 0.0
      %v4854 = vsel %vm400, %v4700, 0.0
      %v4855 = vadd.f32 %v4853, %v4854
      %v4856 = vsel %vm400, %v4705, 0.0
      %v4857 = vadd.f32 %v4855, %v4856
      %v4858 = vsel %vm400, %v4710, 0.0
      %v4859 = vadd.f32 %v4857, %v4858
      %v4860 = vsel %vm400, %v4715, 0.0
      %v4861 = vadd.f32 %v4859, %v4860
      %v4862 = vsel %vm400, %v4720, 0.0
      %v4863 = vadd.f32 %v4861, %v4862
      %v4864 = vsel %vm400, %v4725, 0.0
      %v4865 = vadd.f32 %v4863, %v4864
      %v4866 = vsel %vm400, %v4730, 0.0
      %v4867 = vadd.f32 %v4865, %v4866
      %v4868 = vsel %vm400, %v4735, 0.0
      %v4869 = vadd.f32 %v4867, %v4868
      %v4870 = vsel %vm400, %v4740, 0.0
      %v4871 = vadd.f32 %v4869, %v4870
      %v4872 = vsel %vm400, %v4745, 0.0
      %v4873 = vadd.f32 %v4871, %v4872
      %v4874 = vsel %vm400, %v4750, 0.0
      %v4875 = vadd.f32 %v4873, %v4874
      %v4876 = vsel %vm400, %v4755, 0.0
      %v4877 = vadd.f32 %v4875, %v4876
      %v4878 = vsel %vm400, %v4760, 0.0
      %v4879 = vadd.f32 %v4877, %v4878
      %v4880 = vsel %vm400, %v4765, 0.0
      %v4881 = vadd.f32 %v4879, %v4880
      %v4882 = vsel %vm400, %v4770, 0.0
      %v4883 = vadd.f32 %v4881, %v4882
      %v4884 = vsel %vm400, %v4775, 0.0
      %v4885 = vadd.f32 %v4883, %v4884
      %v4886 = vsel %vm400, %v4780, 0.0
      %v4887 = vadd.f32 %v4885, %v4886
      %v4888 = vsel %vm400, %v4785, 0.0
      %v4889 = vadd.f32 %v4887, %v4888
      %v4890 = vsel %vm400, %v4790, 0.0
      %v4891 = vadd.f32 %v4889, %v4890
      %v4892 = vsel %vm400, %v4795, 0.0
      %v4893 = vadd.f32 %v4891, %v4892
      %v4894 = vsel %vm400, %v4800, 0.0
      %v4895 = vadd.f32 %v4893, %v4894
      %v4896 = vsel %vm400, %v4805, 0.0
      %v4897 = vadd.f32 %v4895, %v4896
      %v4898 = vsel %vm400, %v4810, 0.0
      %v4899 = vadd.f32 %v4897, %v4898
      %v4900 = vsel %vm400, %v4815, 0.0
      %v4901 = vadd.f32 %v4899, %v4900
      %v4902 = vsel %vm400, %v4820, 0.0
      %v4903 = vadd.f32 %v4901, %v4902
      %v4904 = vsel %vm400, %v4825, 0.0
      %v4905 = vadd.f32 %v4903, %v4904
      %v4906 = vsel %vm400, %v4830, 0.0
      %v4907 = vadd.f32 %v4905, %v4906
      %v4908 = vsel %vm400, %v4835, 0.0
      %v4909 = vadd.f32 %v4907, %v4908
      %v4910 = vsel %vm400, %v4840, 0.0
      %v4911 = vadd.f32 %v4909, %v4910
      %v4912 = vsel %vm400, %v4845, 0.0
      %v4913 = vadd.f32 %v4911, %v4912
      %v4914 = vsel %vm400, %v4850, 0.0
      %v4915 = vadd.f32 %v4913, %v4914
      %v4916 = vrot.slane %v4915, 4
      %v4917 = vadd.f32 %v4915, %v4916
      %v4918 = vrot.slane %v4917, 2
      %v4919 = vadd.f32 %v4917, %v4918
      %v4920 = vrot.slane %v4919, 1
      %v4921 = vadd.f32 %v4919, %v4920
      %v4922 = vadd.f32 %v4921, 0.0
      %v4923 = vmul.f32 %v4695, %v4695
      %v4924 = vmul.f32 %v4700, %v4700
      %v4925 = vmul.f32 %v4705, %v4705
      %v4926 = vmul.f32 %v4710, %v4710
      %v4927 = vmul.f32 %v4715, %v4715
      %v4928 = vmul.f32 %v4720, %v4720
      %v4929 = vmul.f32 %v4725, %v4725
      %v4930 = vmul.f32 %v4730, %v4730
      %v4931 = vmul.f32 %v4735, %v4735
      %v4932 = vmul.f32 %v4740, %v4740
      %v4933 = vmul.f32 %v4745, %v4745
      %v4934 = vmul.f32 %v4750, %v4750
      %v4935 = vmul.f32 %v4755, %v4755
      %v4936 = vmul.f32 %v4760, %v4760
      %v4937 = vmul.f32 %v4765, %v4765
      %v4938 = vmul.f32 %v4770, %v4770
      %v4939 = vmul.f32 %v4775, %v4775
      %v4940 = vmul.f32 %v4780, %v4780
      %v4941 = vmul.f32 %v4785, %v4785
      %v4942 = vmul.f32 %v4790, %v4790
      %v4943 = vmul.f32 %v4795, %v4795
      %v4944 = vmul.f32 %v4800, %v4800
      %v4945 = vmul.f32 %v4805, %v4805
      %v4946 = vmul.f32 %v4810, %v4810
      %v4947 = vmul.f32 %v4815, %v4815
      %v4948 = vmul.f32 %v4820, %v4820
      %v4949 = vmul.f32 %v4825, %v4825
      %v4950 = vmul.f32 %v4830, %v4830
      %v4951 = vmul.f32 %v4835, %v4835
      %v4952 = vmul.f32 %v4840, %v4840
      %v4953 = vmul.f32 %v4845, %v4845
      %v4954 = vmul.f32 %v4850, %v4850
      %v4955 = vsel %vm400, %v4923, 0.0
      %v4956 = vsel %vm400, %v4924, 0.0
      %v4957 = vadd.f32 %v4955, %v4956
      %v4958 = vsel %vm400, %v4925, 0.0
      %v4959 = vadd.f32 %v4957, %v4958
      %v4960 = vsel %vm400, %v4926, 0.0
      %v4961 = vadd.f32 %v4959, %v4960
      %v4962 = vsel %vm400, %v4927, 0.0
      %v4963 = vadd.f32 %v4961, %v4962
      %v4964 = vsel %vm400, %v4928, 0.0
      %v4965 = vadd.f32 %v4963, %v4964
      %v4966 = vsel %vm400, %v4929, 0.0
      %v4967 = vadd.f32 %v4965, %v4966
      %v4968 = vsel %vm400, %v4930, 0.0
      %v4969 = vadd.f32 %v4967, %v4968
      %v4970 = vsel %vm400, %v4931, 0.0
      %v4971 = vadd.f32 %v4969, %v4970
      %v4972 = vsel %vm400, %v4932, 0.0
      %v4973 = vadd.f32 %v4971, %v4972
      %v4974 = vsel %vm400, %v4933, 0.0
      %v4975 = vadd.f32 %v4973, %v4974
      %v4976 = vsel %vm400, %v4934, 0.0
      %v4977 = vadd.f32 %v4975, %v4976
      %v4978 = vsel %vm400, %v4935, 0.0
      %v4979 = vadd.f32 %v4977, %v4978
      %v4980 = vsel %vm400, %v4936, 0.0
      %v4981 = vadd.f32 %v4979, %v4980
      %v4982 = vsel %vm400, %v4937, 0.0
      %v4983 = vadd.f32 %v4981, %v4982
      %v4984 = vsel %vm400, %v4938, 0.0
      %v4985 = vadd.f32 %v4983, %v4984
      %v4986 = vsel %vm400, %v4939, 0.0
      %v4987 = vadd.f32 %v4985, %v4986
      %v4988 = vsel %vm400, %v4940, 0.0
      %v4989 = vadd.f32 %v4987, %v4988
      %v4990 = vsel %vm400, %v4941, 0.0
      %v4991 = vadd.f32 %v4989, %v4990
      %v4992 = vsel %vm400, %v4942, 0.0
      %v4993 = vadd.f32 %v4991, %v4992
      %v4994 = vsel %vm400, %v4943, 0.0
      %v4995 = vadd.f32 %v4993, %v4994
      %v4996 = vsel %vm400, %v4944, 0.0
      %v4997 = vadd.f32 %v4995, %v4996
      %v4998 = vsel %vm400, %v4945, 0.0
      %v4999 = vadd.f32 %v4997, %v4998
      %v5000 = vsel %vm400, %v4946, 0.0
      %v5001 = vadd.f32 %v4999, %v5000
      %v5002 = vsel %vm400, %v4947, 0.0
      %v5003 = vadd.f32 %v5001, %v5002
      %v5004 = vsel %vm400, %v4948, 0.0
      %v5005 = vadd.f32 %v5003, %v5004
      %v5006 = vsel %vm400, %v4949, 0.0
      %v5007 = vadd.f32 %v5005, %v5006
      %v5008 = vsel %vm400, %v4950, 0.0
      %v5009 = vadd.f32 %v5007, %v5008
      %v5010 = vsel %vm400, %v4951, 0.0
      %v5011 = vadd.f32 %v5009, %v5010
      %v5012 = vsel %vm400, %v4952, 0.0
      %v5013 = vadd.f32 %v5011, %v5012
      %v5014 = vsel %vm400, %v4953, 0.0
      %v5015 = vadd.f32 %v5013, %v5014
      %v5016 = vsel %vm400, %v4954, 0.0
      %v5017 = vadd.f32 %v5015, %v5016
      %v5018 = vrot.slane %v5017, 4
      %v5019 = vadd.f32 %v5017, %v5018
      %v5020 = vrot.slane %v5019, 2
      %v5021 = vadd.f32 %v5019, %v5020
      %v5022 = vrot.slane %v5021, 1
      %v5023 = vadd.f32 %v5021, %v5022
      %v5024 = vadd.f32 %v5023, 0.0
      %5025 = vst.msk [vmem:[%s278] sm:$0xff] %vm400, %v4695
      %5026 = vst.msk [vmem:[%s278 + $0x8] sm:$0xff] %vm400, %v4700
      %5027 = vst.msk [vmem:[%s278 + $0x10] sm:$0xff] %vm400, %v4705
      %5028 = vst.msk [vmem:[%s278 + $0x18] sm:$0xff] %vm400, %v4710
      %5029 = vst.msk [vmem:[%s278 + $0x20] sm:$0xff] %vm400, %v4715
      %5030 = vst.msk [vmem:[%s278 + $0x28] sm:$0xff] %vm400, %v4720
      %5031 = vst.msk [vmem:[%s278 + $0x30] sm:$0xff] %vm400, %v4725
      %5032 = vst.msk [vmem:[%s278 + $0x38] sm:$0xff] %vm400, %v4730
      %5033 = vst.msk [vmem:[%s278 + $0x40] sm:$0xff] %vm400, %v4735
      %5034 = vst.msk [vmem:[%s278 + $0x48] sm:$0xff] %vm400, %v4740
      %5035 = vst.msk [vmem:[%s278 + $0x50] sm:$0xff] %vm400, %v4745
      %5036 = vst.msk [vmem:[%s278 + $0x58] sm:$0xff] %vm400, %v4750
      %5037 = vst.msk [vmem:[%s278 + $0x60] sm:$0xff] %vm400, %v4755
      %5038 = vst.msk [vmem:[%s278 + $0x68] sm:$0xff] %vm400, %v4760
      %5039 = vst.msk [vmem:[%s278 + $0x70] sm:$0xff] %vm400, %v4765
      %5040 = vst.msk [vmem:[%s278 + $0x78] sm:$0xff] %vm400, %v4770
      %5041 = vst.msk [vmem:[%s278 + $0x80] sm:$0xff] %vm400, %v4775
      %5042 = vst.msk [vmem:[%s278 + $0x88] sm:$0xff] %vm400, %v4780
      %5043 = vst.msk [vmem:[%s278 + $0x90] sm:$0xff] %vm400, %v4785
      %5044 = vst.msk [vmem:[%s278 + $0x98] sm:$0xff] %vm400, %v4790
      %5045 = vst.msk [vmem:[%s278 + $0xa0] sm:$0xff] %vm400, %v4795
      %5046 = vst.msk [vmem:[%s278 + $0xa8] sm:$0xff] %vm400, %v4800
      %5047 = vst.msk [vmem:[%s278 + $0xb0] sm:$0xff] %vm400, %v4805
      %5048 = vst.msk [vmem:[%s278 + $0xb8] sm:$0xff] %vm400, %v4810
      %5049 = vst.msk [vmem:[%s278 + $0xc0] sm:$0xff] %vm400, %v4815
      %5050 = vst.msk [vmem:[%s278 + $0xc8] sm:$0xff] %vm400, %v4820
      %5051 = vst.msk [vmem:[%s278 + $0xd0] sm:$0xff] %vm400, %v4825
      %5052 = vst.msk [vmem:[%s278 + $0xd8] sm:$0xff] %vm400, %v4830
      %5053 = vst.msk [vmem:[%s278 + $0xe0] sm:$0xff] %vm400, %v4835
      %5054 = vst.msk [vmem:[%s278 + $0xe8] sm:$0xff] %vm400, %v4840
      %5055 = vst.msk [vmem:[%s278 + $0xf0] sm:$0xff] %vm400, %v4845
      %5056 = vst.msk [vmem:[%s278 + $0xf8] sm:$0xff] %vm400, %v4850
      %v5057 = vmul.f32 %v4922, 0.00390625
      %v5058 = vmul.f32 %v5024, 0.00390625
      %v5059 = vmul.f32 %v5057, %v5057
      %v5060 = vsub.f32 %v5058, %v5059
      %v5061 = vmax.f32 %v5060, 0.0
      %v5062 = vld [vmem:[%s5] sm:$0x1]
      %v5063 = vadd.f32 %v5061, 1e-05
      %v5064 = vrsqrt.pop %v5063
      %v5065 = vmul.f32 %v5062, %v5064
      %v5066 = vld [vmem:[%s6] sm:$0x1]
      %v5067 = vmul.f32 %v5057, %v5065
      %v5068 = vsub.f32 %v5066, %v5067
      %v5069 = vld [vmem:[%s278] sm:$0xff]
      %v5070 = vld [vmem:[%s278 + $0x8] sm:$0xff]
      %v5071 = vld [vmem:[%s278 + $0x10] sm:$0xff]
      %v5072 = vld [vmem:[%s278 + $0x18] sm:$0xff]
      %v5073 = vld [vmem:[%s278 + $0x20] sm:$0xff]
      %v5074 = vld [vmem:[%s278 + $0x28] sm:$0xff]
      %v5075 = vld [vmem:[%s278 + $0x30] sm:$0xff]
      %v5076 = vld [vmem:[%s278 + $0x38] sm:$0xff]
      %v5077 = vld [vmem:[%s278 + $0x40] sm:$0xff]
      %v5078 = vld [vmem:[%s278 + $0x48] sm:$0xff]
      %v5079 = vld [vmem:[%s278 + $0x50] sm:$0xff]
      %v5080 = vld [vmem:[%s278 + $0x58] sm:$0xff]
      %v5081 = vld [vmem:[%s278 + $0x60] sm:$0xff]
      %v5082 = vld [vmem:[%s278 + $0x68] sm:$0xff]
      %v5083 = vld [vmem:[%s278 + $0x70] sm:$0xff]
      %v5084 = vld [vmem:[%s278 + $0x78] sm:$0xff]
      %v5085 = vld [vmem:[%s278 + $0x80] sm:$0xff]
      %v5086 = vld [vmem:[%s278 + $0x88] sm:$0xff]
      %v5087 = vld [vmem:[%s278 + $0x90] sm:$0xff]
      %v5088 = vld [vmem:[%s278 + $0x98] sm:$0xff]
      %v5089 = vld [vmem:[%s278 + $0xa0] sm:$0xff]
      %v5090 = vld [vmem:[%s278 + $0xa8] sm:$0xff]
      %v5091 = vld [vmem:[%s278 + $0xb0] sm:$0xff]
      %v5092 = vld [vmem:[%s278 + $0xb8] sm:$0xff]
      %v5093 = vld [vmem:[%s278 + $0xc0] sm:$0xff]
      %v5094 = vld [vmem:[%s278 + $0xc8] sm:$0xff]
      %v5095 = vld [vmem:[%s278 + $0xd0] sm:$0xff]
      %v5096 = vld [vmem:[%s278 + $0xd8] sm:$0xff]
      %v5097 = vld [vmem:[%s278 + $0xe0] sm:$0xff]
      %v5098 = vld [vmem:[%s278 + $0xe8] sm:$0xff]
      %v5099 = vld [vmem:[%s278 + $0xf0] sm:$0xff]
      %v5100 = vld [vmem:[%s278 + $0xf8] sm:$0xff]
      %v5102 = vlaneseq
      %v5103 = vshrl.u32 %v5102, 7
      %v5104 = vsub.s32 0, %v5103
      %v5105 = vrot.slane %v5065, %v5104
      %v5107 = vmul.f32 %v5069, %v5105
      %v5108 = vmul.f32 %v5070, %v5105
      %v5109 = vmul.f32 %v5071, %v5105
      %v5110 = vmul.f32 %v5072, %v5105
      %v5111 = vmul.f32 %v5073, %v5105
      %v5112 = vmul.f32 %v5074, %v5105
      %v5113 = vmul.f32 %v5075, %v5105
      %v5114 = vmul.f32 %v5076, %v5105
      %v5115 = vmul.f32 %v5077, %v5105
      %v5116 = vmul.f32 %v5078, %v5105
      %v5117 = vmul.f32 %v5079, %v5105
      %v5118 = vmul.f32 %v5080, %v5105
      %v5119 = vmul.f32 %v5081, %v5105
      %v5120 = vmul.f32 %v5082, %v5105
      %v5121 = vmul.f32 %v5083, %v5105
      %v5122 = vmul.f32 %v5084, %v5105
      %v5123 = vmul.f32 %v5085, %v5105
      %v5124 = vmul.f32 %v5086, %v5105
      %v5125 = vmul.f32 %v5087, %v5105
      %v5126 = vmul.f32 %v5088, %v5105
      %v5127 = vmul.f32 %v5089, %v5105
      %v5128 = vmul.f32 %v5090, %v5105
      %v5129 = vmul.f32 %v5091, %v5105
      %v5130 = vmul.f32 %v5092, %v5105
      %v5131 = vmul.f32 %v5093, %v5105
      %v5132 = vmul.f32 %v5094, %v5105
      %v5133 = vmul.f32 %v5095, %v5105
      %v5134 = vmul.f32 %v5096, %v5105
      %v5135 = vmul.f32 %v5097, %v5105
      %v5136 = vmul.f32 %v5098, %v5105
      %v5137 = vmul.f32 %v5099, %v5105
      %v5138 = vmul.f32 %v5100, %v5105
      %v5140 = vlaneseq
      %v5141 = vshrl.u32 %v5140, 7
      %v5142 = vsub.s32 0, %v5141
      %v5143 = vrot.slane %v5068, %v5142
      %v5145 = vadd.f32 %v5107, %v5143
      %v5146 = vadd.f32 %v5108, %v5143
      %v5147 = vadd.f32 %v5109, %v5143
      %v5148 = vadd.f32 %v5110, %v5143
      %v5149 = vadd.f32 %v5111, %v5143
      %v5150 = vadd.f32 %v5112, %v5143
      %v5151 = vadd.f32 %v5113, %v5143
      %v5152 = vadd.f32 %v5114, %v5143
      %v5153 = vadd.f32 %v5115, %v5143
      %v5154 = vadd.f32 %v5116, %v5143
      %v5155 = vadd.f32 %v5117, %v5143
      %v5156 = vadd.f32 %v5118, %v5143
      %v5157 = vadd.f32 %v5119, %v5143
      %v5158 = vadd.f32 %v5120, %v5143
      %v5159 = vadd.f32 %v5121, %v5143
      %v5160 = vadd.f32 %v5122, %v5143
      %v5161 = vadd.f32 %v5123, %v5143
      %v5162 = vadd.f32 %v5124, %v5143
      %v5163 = vadd.f32 %v5125, %v5143
      %v5164 = vadd.f32 %v5126, %v5143
      %v5165 = vadd.f32 %v5127, %v5143
      %v5166 = vadd.f32 %v5128, %v5143
      %v5167 = vadd.f32 %v5129, %v5143
      %v5168 = vadd.f32 %v5130, %v5143
      %v5169 = vadd.f32 %v5131, %v5143
      %v5170 = vadd.f32 %v5132, %v5143
      %v5171 = vadd.f32 %v5133, %v5143
      %v5172 = vadd.f32 %v5134, %v5143
      %v5173 = vadd.f32 %v5135, %v5143
      %v5174 = vadd.f32 %v5136, %v5143
      %v5175 = vadd.f32 %v5137, %v5143
      %v5176 = vadd.f32 %v5138, %v5143
      %vm5177 = vcmp.ge.f32.partialorder %v5145, 0.0
      %vm5178 = vcmp.ge.f32.partialorder %v5146, 0.0
      %vm5179 = vcmp.ge.f32.partialorder %v5147, 0.0
      %vm5180 = vcmp.ge.f32.partialorder %v5148, 0.0
      %vm5181 = vcmp.ge.f32.partialorder %v5149, 0.0
      %vm5182 = vcmp.ge.f32.partialorder %v5150, 0.0
      %vm5183 = vcmp.ge.f32.partialorder %v5151, 0.0
      %vm5184 = vcmp.ge.f32.partialorder %v5152, 0.0
      %vm5185 = vcmp.ge.f32.partialorder %v5153, 0.0
      %vm5186 = vcmp.ge.f32.partialorder %v5154, 0.0
      %vm5187 = vcmp.ge.f32.partialorder %v5155, 0.0
      %vm5188 = vcmp.ge.f32.partialorder %v5156, 0.0
      %vm5189 = vcmp.ge.f32.partialorder %v5157, 0.0
      %vm5190 = vcmp.ge.f32.partialorder %v5158, 0.0
      %vm5191 = vcmp.ge.f32.partialorder %v5159, 0.0
      %vm5192 = vcmp.ge.f32.partialorder %v5160, 0.0
      %vm5193 = vcmp.ge.f32.partialorder %v5161, 0.0
      %vm5194 = vcmp.ge.f32.partialorder %v5162, 0.0
      %vm5195 = vcmp.ge.f32.partialorder %v5163, 0.0
      %vm5196 = vcmp.ge.f32.partialorder %v5164, 0.0
      %vm5197 = vcmp.ge.f32.partialorder %v5165, 0.0
      %vm5198 = vcmp.ge.f32.partialorder %v5166, 0.0
      %vm5199 = vcmp.ge.f32.partialorder %v5167, 0.0
      %vm5200 = vcmp.ge.f32.partialorder %v5168, 0.0
      %vm5201 = vcmp.ge.f32.partialorder %v5169, 0.0
      %vm5202 = vcmp.ge.f32.partialorder %v5170, 0.0
      %vm5203 = vcmp.ge.f32.partialorder %v5171, 0.0
      %vm5204 = vcmp.ge.f32.partialorder %v5172, 0.0
      %vm5205 = vcmp.ge.f32.partialorder %v5173, 0.0
      %vm5206 = vcmp.ge.f32.partialorder %v5174, 0.0
      %vm5207 = vcmp.ge.f32.partialorder %v5175, 0.0
      %vm5208 = vcmp.ge.f32.partialorder %v5176, 0.0
      %v5209 = vmul.f32 %v5145, 0.01
      %v5210 = vmul.f32 %v5146, 0.01
      %v5211 = vmul.f32 %v5147, 0.01
      %v5212 = vmul.f32 %v5148, 0.01
      %v5213 = vmul.f32 %v5149, 0.01
      %v5214 = vmul.f32 %v5150, 0.01
      %v5215 = vmul.f32 %v5151, 0.01
      %v5216 = vmul.f32 %v5152, 0.01
      %v5217 = vmul.f32 %v5153, 0.01
      %v5218 = vmul.f32 %v5154, 0.01
      %v5219 = vmul.f32 %v5155, 0.01
      %v5220 = vmul.f32 %v5156, 0.01
      %v5221 = vmul.f32 %v5157, 0.01
      %v5222 = vmul.f32 %v5158, 0.01
      %v5223 = vmul.f32 %v5159, 0.01
      %v5224 = vmul.f32 %v5160, 0.01
      %v5225 = vmul.f32 %v5161, 0.01
      %v5226 = vmul.f32 %v5162, 0.01
      %v5227 = vmul.f32 %v5163, 0.01
      %v5228 = vmul.f32 %v5164, 0.01
      %v5229 = vmul.f32 %v5165, 0.01
      %v5230 = vmul.f32 %v5166, 0.01
      %v5231 = vmul.f32 %v5167, 0.01
      %v5232 = vmul.f32 %v5168, 0.01
      %v5233 = vmul.f32 %v5169, 0.01
      %v5234 = vmul.f32 %v5170, 0.01
      %v5235 = vmul.f32 %v5171, 0.01
      %v5236 = vmul.f32 %v5172, 0.01
      %v5237 = vmul.f32 %v5173, 0.01
      %v5238 = vmul.f32 %v5174, 0.01
      %v5239 = vmul.f32 %v5175, 0.01
      %v5240 = vmul.f32 %v5176, 0.01
      %v5241 = vsel %vm5177, %v5145, %v5209
      %v5242 = vsel %vm5178, %v5146, %v5210
      %v5243 = vsel %vm5179, %v5147, %v5211
      %v5244 = vsel %vm5180, %v5148, %v5212
      %v5245 = vsel %vm5181, %v5149, %v5213
      %v5246 = vsel %vm5182, %v5150, %v5214
      %v5247 = vsel %vm5183, %v5151, %v5215
      %v5248 = vsel %vm5184, %v5152, %v5216
      %v5249 = vsel %vm5185, %v5153, %v5217
      %v5250 = vsel %vm5186, %v5154, %v5218
      %v5251 = vsel %vm5187, %v5155, %v5219
      %v5252 = vsel %vm5188, %v5156, %v5220
      %v5253 = vsel %vm5189, %v5157, %v5221
      %v5254 = vsel %vm5190, %v5158, %v5222
      %v5255 = vsel %vm5191, %v5159, %v5223
      %v5256 = vsel %vm5192, %v5160, %v5224
      %v5257 = vsel %vm5193, %v5161, %v5225
      %v5258 = vsel %vm5194, %v5162, %v5226
      %v5259 = vsel %vm5195, %v5163, %v5227
      %v5260 = vsel %vm5196, %v5164, %v5228
      %v5261 = vsel %vm5197, %v5165, %v5229
      %v5262 = vsel %vm5198, %v5166, %v5230
      %v5263 = vsel %vm5199, %v5167, %v5231
      %v5264 = vsel %vm5200, %v5168, %v5232
      %v5265 = vsel %vm5201, %v5169, %v5233
      %v5266 = vsel %vm5202, %v5170, %v5234
      %v5267 = vsel %vm5203, %v5171, %v5235
      %v5268 = vsel %vm5204, %v5172, %v5236
      %v5269 = vsel %vm5205, %v5173, %v5237
      %v5270 = vsel %vm5206, %v5174, %v5238
      %v5271 = vsel %vm5207, %v5175, %v5239
      %v5272 = vsel %vm5208, %v5176, %v5240
      %5273 = vst.msk [vmem:[%s278] sm:$0xff] %vm400, %v5241
      %5274 = vst.msk [vmem:[%s278 + $0x8] sm:$0xff] %vm400, %v5242
      %5275 = vst.msk [vmem:[%s278 + $0x10] sm:$0xff] %vm400, %v5243
      %5276 = vst.msk [vmem:[%s278 + $0x18] sm:$0xff] %vm400, %v5244
      %5277 = vst.msk [vmem:[%s278 + $0x20] sm:$0xff] %vm400, %v5245
      %5278 = vst.msk [vmem:[%s278 + $0x28] sm:$0xff] %vm400, %v5246
      %5279 = vst.msk [vmem:[%s278 + $0x30] sm:$0xff] %vm400, %v5247
      %5280 = vst.msk [vmem:[%s278 + $0x38] sm:$0xff] %vm400, %v5248
      %5281 = vst.msk [vmem:[%s278 + $0x40] sm:$0xff] %vm400, %v5249
      %5282 = vst.msk [vmem:[%s278 + $0x48] sm:$0xff] %vm400, %v5250
      %5283 = vst.msk [vmem:[%s278 + $0x50] sm:$0xff] %vm400, %v5251
      %5284 = vst.msk [vmem:[%s278 + $0x58] sm:$0xff] %vm400, %v5252
      %5285 = vst.msk [vmem:[%s278 + $0x60] sm:$0xff] %vm400, %v5253
      %5286 = vst.msk [vmem:[%s278 + $0x68] sm:$0xff] %vm400, %v5254
      %5287 = vst.msk [vmem:[%s278 + $0x70] sm:$0xff] %vm400, %v5255
      %5288 = vst.msk [vmem:[%s278 + $0x78] sm:$0xff] %vm400, %v5256
      %5289 = vst.msk [vmem:[%s278 + $0x80] sm:$0xff] %vm400, %v5257
      %5290 = vst.msk [vmem:[%s278 + $0x88] sm:$0xff] %vm400, %v5258
      %5291 = vst.msk [vmem:[%s278 + $0x90] sm:$0xff] %vm400, %v5259
      %5292 = vst.msk [vmem:[%s278 + $0x98] sm:$0xff] %vm400, %v5260
      %5293 = vst.msk [vmem:[%s278 + $0xa0] sm:$0xff] %vm400, %v5261
      %5294 = vst.msk [vmem:[%s278 + $0xa8] sm:$0xff] %vm400, %v5262
      %5295 = vst.msk [vmem:[%s278 + $0xb0] sm:$0xff] %vm400, %v5263
      %5296 = vst.msk [vmem:[%s278 + $0xb8] sm:$0xff] %vm400, %v5264
      %5297 = vst.msk [vmem:[%s278 + $0xc0] sm:$0xff] %vm400, %v5265
      %5298 = vst.msk [vmem:[%s278 + $0xc8] sm:$0xff] %vm400, %v5266
      %5299 = vst.msk [vmem:[%s278 + $0xd0] sm:$0xff] %vm400, %v5267
      %5300 = vst.msk [vmem:[%s278 + $0xd8] sm:$0xff] %vm400, %v5268
      %5301 = vst.msk [vmem:[%s278 + $0xe0] sm:$0xff] %vm400, %v5269
      %5302 = vst.msk [vmem:[%s278 + $0xe8] sm:$0xff] %vm400, %v5270
      %5303 = vst.msk [vmem:[%s278 + $0xf0] sm:$0xff] %vm400, %v5271
      %5304 = vst.msk [vmem:[%s278 + $0xf8] sm:$0xff] %vm400, %v5272
      %p5305 = scmp.lt.s32.totalorder %s18, 1
      %s5306 = scalar_select %p5305, %s18, 1
      %s5307 = smul.addr %s5306, 32
      %s5308 = smul.addr %s5307, 8
      %s5309 = scalar_lea.vmem %s7, %s5308
      // Predicated region
      $region49: #{tpu_custom_call.1} parent=47 // pred_check
        %p5310 = pneg %p188
      $region50: #{tpu_custom_call.1} parent=47 // pred_check_branch
        %5312 = sbr.rel (%p5310) target = $region52
      $region51: #{tpu_custom_call.1} parent=47 // pred_region
        _
      $region52: #{tpu_custom_call.1} parent=47 // pred_fallthru
        _
    $region48: #{tpu_custom_call.1} parent=5 // pred_fallthru
      _
    %p5313 = scmp.le.s32.totalorder 2, %s13
    // Predicated region
    $region53: #{tpu_custom_call.1} parent=5 // pred_check
      %p5314 = pneg %p5313
    $region54: #{tpu_custom_call.1} parent=5 // pred_check_branch
      %5316 = sbr.rel (%p5314) target = $region56
    $region55: #{tpu_custom_call.1} parent=5 // pred_region
      %s5317 = ssub.s32 %s13, 2
      // Predicated region
      $region57: #{tpu_custom_call.1} parent=55 // pred_check
        %p5318 = pneg %p194
      $region58: #{tpu_custom_call.1} parent=55 // pred_check_branch
        %5320 = sbr.rel (%p5318) target = $region60
      $region59: #{tpu_custom_call.1} parent=55 // pred_region
        %p5321 = scmp.lt.s32.totalorder %s19, 1
        %s5322 = scalar_select %p5321, %s19, 1
        %s5323 = smul.addr %s5322, 32
        %s5324 = smul.addr %s5323, 8
        %s5325 = scalar_lea.vmem %s7, %s5324
      $region60: #{tpu_custom_call.1} parent=55 // pred_fallthru
        _
    $region56: #{tpu_custom_call.1} parent=5 // pred_fallthru
      _
  $region6: #{tpu_custom_call.1} parent=0 // loop_footer
    %s17 = sadd.s32 1, %s13
  $region7: #{tpu_custom_call.1} parent=0 // loop_footer_branch
    %12 = sbr.rel target = $region3
  $region8: #{tpu_custom_call.1} parent=0 // loop_exit
    _

</llo_original>
